<compile_context>
chip_gen: v7x
topology: tpu7x:2x2x1
jax: 0.10.0
libtpu: 0.0.40
codegen_flags: <defaults>
</compile_context>

<pallas_src>
import math

import jax
import jax.numpy as jnp
from jax import lax
from jax.experimental import pallas as pl
from jax.experimental.pallas import tpu as pltpu

# ----------------------------- model config (small) -------------------------
BATCH = 2
SEQ = 8
D_MODEL = 32
N_HEAD = 4
HEAD_DIM = D_MODEL // N_HEAD
N_LAYER = 2
D_FF = 4 * D_MODEL
VOCAB = 64
MAX_POS = 64
LN_EPS = 1e-5
M = BATCH * SEQ                      # flattened token count


# ----------------------------- shared math helpers ---------------------------
def _gelu_new(x):
    # GPT-2 "gelu_new" (tanh approximation), matching HF exactly.
    c = math.sqrt(2.0 / math.pi)
    return 0.5 * x * (1.0 + jnp.tanh(c * (x + 0.044715 * x * x * x)))


def _layernorm(x, g, b):
    mu = jnp.mean(x, axis=-1, keepdims=True)
    var = jnp.mean((x - mu) ** 2, axis=-1, keepdims=True)
    return (x - mu) * lax.rsqrt(var + LN_EPS) * g + b


# ----------------------------- fused transformer kernel ----------------------
def _gpt2_fused_kernel(ids_ref, emb_ref, norms_ref, w_in_ref, w_proj_ref,
                       bias_ref, out_ref):
    f32, bf16 = jnp.float32, jnp.bfloat16

    # ---- embeddings: one-hot MXU gather + static position rows --------------
    ids = ids_ref[...]                                            # (M, 1) int32
    vocab_iota = lax.broadcasted_iota(jnp.int32, (M, VOCAB), 1)
    onehot = (vocab_iota == ids).astype(f32)                      # (M, VOCAB)
    tok_emb = jnp.dot(onehot, emb_ref[0:VOCAB, :],
                      preferred_element_type=f32)                 # (M, D)
    pos = emb_ref[VOCAB:VOCAB + SEQ, :]                           # (SEQ, D)
    h = tok_emb + jnp.concatenate([pos] * BATCH, axis=0)          # (M, D) f32

    # ---- causal mask: built ONCE, reused by every layer ----------------------
    row = lax.broadcasted_iota(jnp.int32, (SEQ, SEQ), 0)
    col = lax.broadcasted_iota(jnp.int32, (SEQ, SEQ), 1)
    neg_mask = jnp.where(col <= row, 0.0, -1e30).astype(f32)[None, :, :]
    scale = 1.0 / math.sqrt(HEAD_DIM)

    for l in range(N_LAYER):                                      # static unroll
        # ---- unpack packed per-layer parameters (static slices) -------------
        ln1_g = norms_ref[4 * l + 0]
        ln1_b = norms_ref[4 * l + 1]
        ln2_g = norms_ref[4 * l + 2]
        ln2_b = norms_ref[4 * l + 3]
        w_l = w_in_ref[l]                                          # (D, 3D+D+FF) bf16
        w_qkv = w_l[:, 0:3 * D_MODEL]
        w_o = w_l[:, 3 * D_MODEL:4 * D_MODEL]
        w_fc = w_l[:, 4 * D_MODEL:4 * D_MODEL + D_FF]
        w_pr = w_proj_ref[l]                                       # (FF, D) bf16
        b_l = bias_ref[l]                                          # (4, FF) f32
        b_qkv = b_l[0, 0:3 * D_MODEL]
        b_o = b_l[1, 0:D_MODEL]
        b_fc = b_l[2, :]
        b_pr = b_l[3, 0:D_MODEL]

        # ---- attention block -------------------------------------------------
        x = _layernorm(h, ln1_g, ln1_b)
        qkv = jnp.dot(x.astype(bf16), w_qkv,
                      preferred_element_type=f32) + b_qkv          # (M, 3D) f32

        def to_heads(base):
            # (M, H*Dh) columns -> merged-batch (H*B, S, Dh); leading-dim
            # splits only, no lane-dim reshapes.
            parts = [qkv[:, base + hd * HEAD_DIM: base + (hd + 1) * HEAD_DIM]
                     for hd in range(N_HEAD)]
            return jnp.concatenate(parts, axis=0).reshape(
                N_HEAD * BATCH, SEQ, HEAD_DIM)

        q = to_heads(0)
        k = to_heads(D_MODEL)
        v = to_heads(2 * D_MODEL)

        # one batched score matmul per layer (contracts last dims, no .T)
        s = jnp.einsum('bqd,bkd->bqk', q.astype(bf16), k.astype(bf16),
                       preferred_element_type=f32) * scale + neg_mask
        m_max = jnp.max(s, axis=-1, keepdims=True)
        p = jnp.exp(s - m_max)
        inv_l = pl.reciprocal(jnp.sum(p, axis=-1, keepdims=True), approx=True)
        ctx = jnp.einsum('bqk,bkd->bqd', p.astype(bf16), v.astype(bf16),
                         preferred_element_type=f32) * inv_l        # (H*B, S, Dh)

        # merge heads back to (M, D) (column order = head-major, matches w_o)
        ctx = ctx.reshape(N_HEAD, M, HEAD_DIM)
        ctx = jnp.concatenate([ctx[hd] for hd in range(N_HEAD)], axis=-1)

        h = h + (jnp.dot(ctx.astype(bf16), w_o,
                         preferred_element_type=f32) + b_o)

        # ---- MLP block ---------------------------------------------------------
        x2 = _layernorm(h, ln2_g, ln2_b)
        f = _gelu_new(jnp.dot(x2.astype(bf16), w_fc,
                              preferred_element_type=f32) + b_fc)    # (M, FF)
        h = h + (jnp.dot(f.astype(bf16), w_pr,
                         preferred_element_type=f32) + b_pr)

    # ---- final LayerNorm + token-0 features (single contiguous store) --------
    hf = _layernorm(h, norms_ref[4 * N_LAYER], norms_ref[4 * N_LAYER + 1])
    out_ref[...] = hf.reshape(BATCH, SEQ, D_MODEL)[:, 0, :].astype(out_ref.dtype)


# ----------------------------- parameters ------------------------------------
def init_params(key):
    def nrm(k, shape, std=0.02):
        return std * jax.random.normal(k, shape, dtype=jnp.float32)

    ks = jax.random.split(key, 10)
    L, D, DF = N_LAYER, D_MODEL, D_FF
    return {
        "wte": nrm(ks[0], (VOCAB, D)),
        "wpe": nrm(ks[1], (MAX_POS, D), std=0.01),
        "ln1_g": jnp.ones((L, D), jnp.float32),
        "ln1_b": jnp.zeros((L, D), jnp.float32),
        "w_qkv": nrm(ks[2], (L, D, 3 * D)),
        "b_qkv": nrm(ks[3], (L, 3 * D), std=0.005),
        "w_o": nrm(ks[4], (L, D, D)),
        "b_o": nrm(ks[5], (L, D), std=0.005),
        "ln2_g": jnp.ones((L, D), jnp.float32),
        "ln2_b": jnp.zeros((L, D), jnp.float32),
        "w_fc": nrm(ks[6], (L, D, DF)),
        "b_fc": nrm(ks[7], (L, DF), std=0.005),
        "w_proj": nrm(ks[8], (L, DF, D)),
        "b_proj": nrm(ks[9], (L, D), std=0.005),
        "ln_f_g": jnp.ones((D,), jnp.float32),
        "ln_f_b": jnp.zeros((D,), jnp.float32),
    }


def pack_params(p):
    """Pack the 16 natural tensors into 5 kernel inputs (fewer DMAs)."""
    emb = jnp.concatenate([p["wte"], p["wpe"]], axis=0)             # (VOCAB+MAX_POS, D) f32
    rows = []
    for l in range(N_LAYER):
        rows += [p["ln1_g"][l], p["ln1_b"][l], p["ln2_g"][l], p["ln2_b"][l]]
    rows += [p["ln_f_g"], p["ln_f_b"]]
    norms = jnp.stack(rows, axis=0)                                  # (4L+2, D) f32
    w_in = jnp.concatenate([p["w_qkv"], p["w_o"], p["w_fc"]],
                           axis=-1).astype(jnp.bfloat16)             # (L, D, 4D+FF) bf16
    w_proj = p["w_proj"].astype(jnp.bfloat16)                        # (L, FF, D) bf16
    biases = jnp.zeros((N_LAYER, 4, D_FF), jnp.float32)              # padded rows
    biases = biases.at[:, 0, :3 * D_MODEL].set(p["b_qkv"])
    biases = biases.at[:, 1, :D_MODEL].set(p["b_o"])
    biases = biases.at[:, 2, :].set(p["b_fc"])
    biases = biases.at[:, 3, :D_MODEL].set(p["b_proj"])
    return emb, norms, w_in, w_proj, biases


# ----------------------------- forward pass -----------------------------------
@jax.jit
def text_encoder_forward(input_ids, emb, norms, w_in, w_proj, biases):
    """GPT-2 base model; returns last_hidden_state[:, 0, :]  (B, D)."""
    ids_col = input_ids.reshape(M, 1).astype(jnp.int32)     # metadata reshape only
    return pl.pallas_call(
        _gpt2_fused_kernel,
        out_shape=jax.ShapeDtypeStruct((BATCH, D_MODEL), jnp.float32),
        compiler_params=pltpu.CompilerParams(vmem_limit_bytes=8 * 1024 * 1024),
    )(ids_col, emb, norms, w_in, w_proj, biases)


# ----------------------------- pure-JAX reference ------------------------------
def reference_forward(input_ids, p):
    B, S = input_ids.shape
    h = p["wte"][input_ids] + p["wpe"][:S][None, :, :]

    mask = jnp.tril(jnp.ones((S, S), bool))
    for l in range(N_LAYER):
        x = _layernorm(h, p["ln1_g"][l], p["ln1_b"][l])
        qkv = x @ p["w_qkv"][l] + p["b_qkv"][l]
        q, k, v = jnp.split(qkv, 3, axis=-1)

        def heads(t):
            return t.reshape(B, S, N_HEAD, HEAD_DIM).transpose(0, 2, 1, 3)

        q, k, v = heads(q), heads(k), heads(v)
        s = jnp.einsum("bhqd,bhkd->bhqk", q, k) / math.sqrt(HEAD_DIM)
        s = jnp.where(mask, s, -1e30)
        attn = jax.nn.softmax(s, axis=-1)
        ctx = jnp.einsum("bhqk,bhkd->bhqd", attn, v)
        ctx = ctx.transpose(0, 2, 1, 3).reshape(B, S, D_MODEL)
        h = h + ctx @ p["w_o"][l] + p["b_o"][l]

        x2 = _layernorm(h, p["ln2_g"][l], p["ln2_b"][l])
        f = _gelu_new(x2 @ p["w_fc"][l] + p["b_fc"][l])
        h = h + f @ p["w_proj"][l] + p["b_proj"][l]

    h = _layernorm(h, p["ln_f_g"], p["ln_f_b"])
    return h[:, 0, :]


# ----------------------------- main -------------------------------------------
if __name__ == "__main__":
    key = jax.random.PRNGKey(0)
    k_ids, k_params = jax.random.split(key)

    # TODO(synk): GPT2Tokenizer (string -> token ids) has no Pallas equivalent;
    # the kernel consumes integer token ids directly.
    input_ids = jax.random.randint(k_ids, (BATCH, SEQ), 0, VOCAB, dtype=jnp.int32)
    params = init_params(k_params)
    packed = pack_params(params)

    features = text_encoder_forward(input_ids, *packed)
    jax.block_until_ready(features)

    assert features.shape == (BATCH, D_MODEL)
    assert bool(jnp.all(jnp.isfinite(features)))

    # loose-tolerance check vs. f32 reference (bf16 matmul inputs + approx recip)
    ref = reference_forward(input_ids, params)
    max_err = float(jnp.max(jnp.abs(features - ref)))
    assert max_err < 0.1, f"kernel/reference mismatch: max abs err {max_err}"

    print("KERNEL_OK")
</pallas_src>

<mosaic_0001>
module attributes {stable_mosaic.version = 11 : i64} {
  func.func @_gpt2_fused_kernel(%arg0: memref<16x1xi32, #tpu.memory_space<vmem>>, %arg1: memref<128x32xf32, #tpu.memory_space<vmem>>, %arg2: memref<10x32xf32, #tpu.memory_space<vmem>>, %arg3: memref<2x32x256xbf16, #tpu.memory_space<vmem>>, %arg4: memref<2x128x32xbf16, #tpu.memory_space<vmem>>, %arg5: memref<2x4x128xf32, #tpu.memory_space<vmem>>, %arg6: memref<2x32xf32, #tpu.memory_space<vmem>>) attributes {dimension_semantics = [], scalar_prefetch = 0 : i64, scratch_operands = 0 : i64, tpu.core_type = #tpu.core_type<tc>} {
    %c0 = arith.constant 0 : index
    %c0_0 = arith.constant 0 : index
    %0 = vector.load %arg0[%c0, %c0_0] : memref<16x1xi32, #tpu.memory_space<vmem>>, vector<16x1xi32>
    %1 = tpu.iota {dimensions = array<i32: 1>} : vector<16x64xi32>
    %2 = vector.broadcast %0 : vector<16x1xi32> to vector<16x64xi32>
    %3 = arith.cmpi eq, %1, %2 : vector<16x64xi32>
    %4 = arith.extui %3 : vector<16x64xi1> to vector<16x64xi32>
    %5 = arith.sitofp %4 : vector<16x64xi32> to vector<16x64xf32>
    %c0_1 = arith.constant 0 : index
    %c0_2 = arith.constant 0 : index
    %6 = vector.load %arg1[%c0_1, %c0_2] : memref<128x32xf32, #tpu.memory_space<vmem>>, vector<64x32xf32>
    %cst = arith.constant dense<0.000000e+00> : vector<16x32xf32>
    %7 = tpu.matmul %5, %6, %cst {dimension_numbers = #tpu.dot_dimension_numbers<[1], [0], [0], [1], [0, 0, 1, 1], [], []>} : vector<16x64xf32>, vector<64x32xf32>, vector<16x32xf32> -> vector<16x32xf32>
    %c64 = arith.constant 64 : index
    %c0_3 = arith.constant 0 : index
    %8 = vector.load %arg1[%c64, %c0_3] : memref<128x32xf32, #tpu.memory_space<vmem>>, vector<8x32xf32>
    %9 = tpu.concatenate %8, %8 in 0 : vector<8x32xf32>, vector<8x32xf32> -> vector<16x32xf32>
    %10 = arith.addf %7, %9 : vector<16x32xf32>
    %11 = tpu.iota {dimensions = array<i32: 0>} : vector<8x8xi32>
    %12 = tpu.iota {dimensions = array<i32: 1>} : vector<8x8xi32>
    %13 = arith.cmpi sle, %12, %11 : vector<8x8xi32>
    %cst_4 = arith.constant 0.000000e+00 : f32
    %cst_5 = arith.constant -1.000000e+30 : f32
    %14 = vector.broadcast %cst_4 : f32 to vector<8x8xf32>
    %15 = vector.broadcast %cst_5 : f32 to vector<8x8xf32>
    %16 = arith.select %13, %14, %15 : vector<8x8xi1>, vector<8x8xf32>
    %17 = vector.shape_cast %16 : vector<8x8xf32> to vector<1x8x8xf32>
    %c0_6 = arith.constant 0 : index
    %c0_7 = arith.constant 0 : index
    %18 = vector.load %arg2[%c0_6, %c0_7] : memref<10x32xf32, #tpu.memory_space<vmem>>, vector<1x32xf32>
    %19 = vector.shape_cast %18 : vector<1x32xf32> to vector<32xf32>
    %c1 = arith.constant 1 : index
    %c0_8 = arith.constant 0 : index
    %20 = vector.load %arg2[%c1, %c0_8] : memref<10x32xf32, #tpu.memory_space<vmem>>, vector<1x32xf32>
    %21 = vector.shape_cast %20 : vector<1x32xf32> to vector<32xf32>
    %c2 = arith.constant 2 : index
    %c0_9 = arith.constant 0 : index
    %22 = vector.load %arg2[%c2, %c0_9] : memref<10x32xf32, #tpu.memory_space<vmem>>, vector<1x32xf32>
    %23 = vector.shape_cast %22 : vector<1x32xf32> to vector<32xf32>
    %c3 = arith.constant 3 : index
    %c0_10 = arith.constant 0 : index
    %24 = vector.load %arg2[%c3, %c0_10] : memref<10x32xf32, #tpu.memory_space<vmem>>, vector<1x32xf32>
    %25 = vector.shape_cast %24 : vector<1x32xf32> to vector<32xf32>
    %c0_11 = arith.constant 0 : index
    %c0_12 = arith.constant 0 : index
    %c0_13 = arith.constant 0 : index
    %26 = vector.load %arg3[%c0_11, %c0_12, %c0_13] : memref<2x32x256xbf16, #tpu.memory_space<vmem>>, vector<1x32x256xbf16>
    %27 = vector.shape_cast %26 : vector<1x32x256xbf16> to vector<32x256xbf16>
    %28 = vector.extract_strided_slice %27 {offsets = [0, 0], sizes = [32, 96], strides = [1, 1]} : vector<32x256xbf16> to vector<32x96xbf16>
    %29 = vector.extract_strided_slice %27 {offsets = [0, 96], sizes = [32, 32], strides = [1, 1]} : vector<32x256xbf16> to vector<32x32xbf16>
    %30 = vector.extract_strided_slice %27 {offsets = [0, 128], sizes = [32, 128], strides = [1, 1]} : vector<32x256xbf16> to vector<32x128xbf16>
    %c0_14 = arith.constant 0 : index
    %c0_15 = arith.constant 0 : index
    %c0_16 = arith.constant 0 : index
    %31 = vector.load %arg4[%c0_14, %c0_15, %c0_16] : memref<2x128x32xbf16, #tpu.memory_space<vmem>>, vector<1x128x32xbf16>
    %32 = vector.shape_cast %31 : vector<1x128x32xbf16> to vector<128x32xbf16>
    %c0_17 = arith.constant 0 : index
    %c0_18 = arith.constant 0 : index
    %c0_19 = arith.constant 0 : index
    %33 = vector.load %arg5[%c0_17, %c0_18, %c0_19] : memref<2x4x128xf32, #tpu.memory_space<vmem>>, vector<1x4x128xf32>
    %34 = vector.shape_cast %33 : vector<1x4x128xf32> to vector<4x128xf32>
    %35 = vector.extract_strided_slice %34 {offsets = [0, 0], sizes = [1, 96], strides = [1, 1]} : vector<4x128xf32> to vector<1x96xf32>
    %36 = vector.shape_cast %35 : vector<1x96xf32> to vector<96xf32>
    %37 = vector.extract_strided_slice %34 {offsets = [1, 0], sizes = [1, 32], strides = [1, 1]} : vector<4x128xf32> to vector<1x32xf32>
    %38 = vector.shape_cast %37 : vector<1x32xf32> to vector<32xf32>
    %39 = vector.extract_strided_slice %34 {offsets = [2, 0], sizes = [1, 128], strides = [1, 1]} : vector<4x128xf32> to vector<1x128xf32>
    %40 = vector.shape_cast %39 : vector<1x128xf32> to vector<128xf32>
    %41 = vector.extract_strided_slice %34 {offsets = [3, 0], sizes = [1, 32], strides = [1, 1]} : vector<4x128xf32> to vector<1x32xf32>
    %42 = vector.shape_cast %41 : vector<1x32xf32> to vector<32xf32>
    %cst_20 = arith.constant dense<0.000000e+00> : vector<16xf32>
    %43 = vector.multi_reduction <add>, %10, %cst_20 [1] : vector<16x32xf32> to vector<16xf32>
    %44 = vector.shape_cast %43 : vector<16xf32> to vector<16x1xf32>
    %cst_21 = arith.constant 3.200000e+01 : f32
    %45 = vector.broadcast %cst_21 : f32 to vector<16x1xf32>
    %46 = arith.divf %44, %45 : vector<16x1xf32>
    %47 = vector.broadcast %46 : vector<16x1xf32> to vector<16x32xf32>
    %48 = arith.subf %10, %47 : vector<16x32xf32>
    %49 = arith.mulf %48, %48 : vector<16x32xf32>
    %cst_22 = arith.constant dense<0.000000e+00> : vector<16xf32>
    %50 = vector.multi_reduction <add>, %49, %cst_22 [1] : vector<16x32xf32> to vector<16xf32>
    %51 = vector.shape_cast %50 : vector<16xf32> to vector<16x1xf32>
    %cst_23 = arith.constant 3.200000e+01 : f32
    %52 = vector.broadcast %cst_23 : f32 to vector<16x1xf32>
    %53 = arith.divf %51, %52 : vector<16x1xf32>
    %54 = vector.broadcast %46 : vector<16x1xf32> to vector<16x32xf32>
    %55 = arith.subf %10, %54 : vector<16x32xf32>
    %cst_24 = arith.constant 9.99999974E-6 : f32
    %56 = vector.broadcast %cst_24 : f32 to vector<16x1xf32>
    %57 = arith.addf %53, %56 : vector<16x1xf32>
    %58 = math.rsqrt %57 : vector<16x1xf32>
    %59 = vector.broadcast %58 : vector<16x1xf32> to vector<16x32xf32>
    %60 = arith.mulf %55, %59 : vector<16x32xf32>
    %61 = vector.shape_cast %19 : vector<32xf32> to vector<1x32xf32>
    %62 = vector.broadcast %61 : vector<1x32xf32> to vector<16x32xf32>
    %63 = arith.mulf %60, %62 : vector<16x32xf32>
    %64 = vector.shape_cast %21 : vector<32xf32> to vector<1x32xf32>
    %65 = vector.broadcast %64 : vector<1x32xf32> to vector<16x32xf32>
    %66 = arith.addf %63, %65 : vector<16x32xf32>
    %67 = arith.truncf %66 : vector<16x32xf32> to vector<16x32xbf16>
    %cst_25 = arith.constant dense<0.000000e+00> : vector<16x96xf32>
    %68 = tpu.matmul %67, %28, %cst_25 {dimension_numbers = #tpu.dot_dimension_numbers<[1], [0], [0], [1], [0, 0, 1, 1], [], []>} : vector<16x32xbf16>, vector<32x96xbf16>, vector<16x96xf32> -> vector<16x96xf32>
    %69 = vector.shape_cast %36 : vector<96xf32> to vector<1x96xf32>
    %70 = vector.broadcast %69 : vector<1x96xf32> to vector<16x96xf32>
    %71 = arith.addf %68, %70 : vector<16x96xf32>
    %72 = vector.extract_strided_slice %71 {offsets = [0, 0], sizes = [16, 8], strides = [1, 1]} : vector<16x96xf32> to vector<16x8xf32>
    %73 = vector.extract_strided_slice %71 {offsets = [0, 8], sizes = [16, 8], strides = [1, 1]} : vector<16x96xf32> to vector<16x8xf32>
    %74 = vector.extract_strided_slice %71 {offsets = [0, 16], sizes = [16, 8], strides = [1, 1]} : vector<16x96xf32> to vector<16x8xf32>
    %75 = vector.extract_strided_slice %71 {offsets = [0, 24], sizes = [16, 8], strides = [1, 1]} : vector<16x96xf32> to vector<16x8xf32>
    %76 = tpu.concatenate %72, %73, %74, %75 in 0 : vector<16x8xf32>, vector<16x8xf32>, vector<16x8xf32>, vector<16x8xf32> -> vector<64x8xf32>
    %77 = vector.shape_cast %76 : vector<64x8xf32> to vector<8x8x8xf32>
    %78 = vector.extract_strided_slice %71 {offsets = [0, 32], sizes = [16, 8], strides = [1, 1]} : vector<16x96xf32> to vector<16x8xf32>
    %79 = vector.extract_strided_slice %71 {offsets = [0, 40], sizes = [16, 8], strides = [1, 1]} : vector<16x96xf32> to vector<16x8xf32>
    %80 = vector.extract_strided_slice %71 {offsets = [0, 48], sizes = [16, 8], strides = [1, 1]} : vector<16x96xf32> to vector<16x8xf32>
    %81 = vector.extract_strided_slice %71 {offsets = [0, 56], sizes = [16, 8], strides = [1, 1]} : vector<16x96xf32> to vector<16x8xf32>
    %82 = tpu.concatenate %78, %79, %80, %81 in 0 : vector<16x8xf32>, vector<16x8xf32>, vector<16x8xf32>, vector<16x8xf32> -> vector<64x8xf32>
    %83 = vector.shape_cast %82 : vector<64x8xf32> to vector<8x8x8xf32>
    %84 = vector.extract_strided_slice %71 {offsets = [0, 64], sizes = [16, 8], strides = [1, 1]} : vector<16x96xf32> to vector<16x8xf32>
    %85 = vector.extract_strided_slice %71 {offsets = [0, 72], sizes = [16, 8], strides = [1, 1]} : vector<16x96xf32> to vector<16x8xf32>
    %86 = vector.extract_strided_slice %71 {offsets = [0, 80], sizes = [16, 8], strides = [1, 1]} : vector<16x96xf32> to vector<16x8xf32>
    %87 = vector.extract_strided_slice %71 {offsets = [0, 88], sizes = [16, 8], strides = [1, 1]} : vector<16x96xf32> to vector<16x8xf32>
    %88 = tpu.concatenate %84, %85, %86, %87 in 0 : vector<16x8xf32>, vector<16x8xf32>, vector<16x8xf32>, vector<16x8xf32> -> vector<64x8xf32>
    %89 = vector.shape_cast %88 : vector<64x8xf32> to vector<8x8x8xf32>
    %90 = arith.truncf %77 : vector<8x8x8xf32> to vector<8x8x8xbf16>
    %91 = arith.truncf %83 : vector<8x8x8xf32> to vector<8x8x8xbf16>
    "tpu.trace_start"() <{level = 10 : i32, message = "bqd,bkd->bqk"}> : () -> ()
    %cst_26 = arith.constant dense<0.000000e+00> : vector<8x8x8xf32>
    %92 = tpu.matmul %90, %91, %cst_26 {dimension_numbers = #tpu.dot_dimension_numbers<[2], [2], [1], [1], [0, 0, 0, 1, 1, 1], [0], [0]>} : vector<8x8x8xbf16>, vector<8x8x8xbf16>, vector<8x8x8xf32> -> vector<8x8x8xf32>
    "tpu.trace_stop"() : () -> ()
    %cst_27 = arith.constant 0.353553385 : f32
    %93 = vector.broadcast %cst_27 : f32 to vector<8x8x8xf32>
    %94 = arith.mulf %92, %93 : vector<8x8x8xf32>
    %95 = vector.broadcast %17 : vector<1x8x8xf32> to vector<8x8x8xf32>
    %96 = arith.addf %94, %95 : vector<8x8x8xf32>
    %cst_28 = arith.constant dense<0xFF800000> : vector<8x8xf32>
    %97 = vector.multi_reduction <maximumf>, %96, %cst_28 [2] : vector<8x8x8xf32> to vector<8x8xf32>
    %98 = vector.shape_cast %97 : vector<8x8xf32> to vector<8x8x1xf32>
    %99 = vector.broadcast %98 : vector<8x8x1xf32> to vector<8x8x8xf32>
    %100 = arith.subf %96, %99 : vector<8x8x8xf32>
    %101 = math.exp %100 : vector<8x8x8xf32>
    %cst_29 = arith.constant dense<0.000000e+00> : vector<8x8xf32>
    %102 = vector.multi_reduction <add>, %101, %cst_29 [2] : vector<8x8x8xf32> to vector<8x8xf32>
    %103 = vector.shape_cast %102 : vector<8x8xf32> to vector<8x8x1xf32>
    %104 = tpu.reciprocal %103 {approx = true} : vector<8x8x1xf32> -> vector<8x8x1xf32>
    %105 = arith.truncf %101 : vector<8x8x8xf32> to vector<8x8x8xbf16>
    %106 = arith.truncf %89 : vector<8x8x8xf32> to vector<8x8x8xbf16>
    "tpu.trace_start"() <{level = 10 : i32, message = "bqk,bkd->bqd"}> : () -> ()
    %cst_30 = arith.constant dense<0.000000e+00> : vector<8x8x8xf32>
    %107 = tpu.matmul %105, %106, %cst_30 {dimension_numbers = #tpu.dot_dimension_numbers<[2], [1], [1], [2], [0, 0, 0, 1, 1, 2], [0], [0]>} : vector<8x8x8xbf16>, vector<8x8x8xbf16>, vector<8x8x8xf32> -> vector<8x8x8xf32>
    "tpu.trace_stop"() : () -> ()
    %108 = vector.broadcast %104 : vector<8x8x1xf32> to vector<8x8x8xf32>
    %109 = arith.mulf %107, %108 : vector<8x8x8xf32>
    %110 = vector.shape_cast %109 : vector<8x8x8xf32> to vector<4x16x8xf32>
    %111 = vector.extract_strided_slice %110 {offsets = [0, 0, 0], sizes = [1, 16, 8], strides = [1, 1, 1]} : vector<4x16x8xf32> to vector<1x16x8xf32>
    %112 = vector.shape_cast %111 : vector<1x16x8xf32> to vector<16x8xf32>
    %113 = vector.extract_strided_slice %110 {offsets = [1, 0, 0], sizes = [1, 16, 8], strides = [1, 1, 1]} : vector<4x16x8xf32> to vector<1x16x8xf32>
    %114 = vector.shape_cast %113 : vector<1x16x8xf32> to vector<16x8xf32>
    %115 = vector.extract_strided_slice %110 {offsets = [2, 0, 0], sizes = [1, 16, 8], strides = [1, 1, 1]} : vector<4x16x8xf32> to vector<1x16x8xf32>
    %116 = vector.shape_cast %115 : vector<1x16x8xf32> to vector<16x8xf32>
    %117 = vector.extract_strided_slice %110 {offsets = [3, 0, 0], sizes = [1, 16, 8], strides = [1, 1, 1]} : vector<4x16x8xf32> to vector<1x16x8xf32>
    %118 = vector.shape_cast %117 : vector<1x16x8xf32> to vector<16x8xf32>
    %119 = tpu.concatenate %112, %114, %116, %118 in 1 : vector<16x8xf32>, vector<16x8xf32>, vector<16x8xf32>, vector<16x8xf32> -> vector<16x32xf32>
    %120 = arith.truncf %119 : vector<16x32xf32> to vector<16x32xbf16>
    %cst_31 = arith.constant dense<0.000000e+00> : vector<16x32xf32>
    %121 = tpu.matmul %120, %29, %cst_31 {dimension_numbers = #tpu.dot_dimension_numbers<[1], [0], [0], [1], [0, 0, 1, 1], [], []>} : vector<16x32xbf16>, vector<32x32xbf16>, vector<16x32xf32> -> vector<16x32xf32>
    %122 = vector.shape_cast %38 : vector<32xf32> to vector<1x32xf32>
    %123 = vector.broadcast %122 : vector<1x32xf32> to vector<16x32xf32>
    %124 = arith.addf %121, %123 : vector<16x32xf32>
    %125 = arith.addf %10, %124 : vector<16x32xf32>
    %cst_32 = arith.constant dense<0.000000e+00> : vector<16xf32>
    %126 = vector.multi_reduction <add>, %125, %cst_32 [1] : vector<16x32xf32> to vector<16xf32>
    %127 = vector.shape_cast %126 : vector<16xf32> to vector<16x1xf32>
    %cst_33 = arith.constant 3.200000e+01 : f32
    %128 = vector.broadcast %cst_33 : f32 to vector<16x1xf32>
    %129 = arith.divf %127, %128 : vector<16x1xf32>
    %130 = vector.broadcast %129 : vector<16x1xf32> to vector<16x32xf32>
    %131 = arith.subf %125, %130 : vector<16x32xf32>
    %132 = arith.mulf %131, %131 : vector<16x32xf32>
    %cst_34 = arith.constant dense<0.000000e+00> : vector<16xf32>
    %133 = vector.multi_reduction <add>, %132, %cst_34 [1] : vector<16x32xf32> to vector<16xf32>
    %134 = vector.shape_cast %133 : vector<16xf32> to vector<16x1xf32>
    %cst_35 = arith.constant 3.200000e+01 : f32
    %135 = vector.broadcast %cst_35 : f32 to vector<16x1xf32>
    %136 = arith.divf %134, %135 : vector<16x1xf32>
    %137 = vector.broadcast %129 : vector<16x1xf32> to vector<16x32xf32>
    %138 = arith.subf %125, %137 : vector<16x32xf32>
    %cst_36 = arith.constant 9.99999974E-6 : f32
    %139 = vector.broadcast %cst_36 : f32 to vector<16x1xf32>
    %140 = arith.addf %136, %139 : vector<16x1xf32>
    %141 = math.rsqrt %140 : vector<16x1xf32>
    %142 = vector.broadcast %141 : vector<16x1xf32> to vector<16x32xf32>
    %143 = arith.mulf %138, %142 : vector<16x32xf32>
    %144 = vector.shape_cast %23 : vector<32xf32> to vector<1x32xf32>
    %145 = vector.broadcast %144 : vector<1x32xf32> to vector<16x32xf32>
    %146 = arith.mulf %143, %145 : vector<16x32xf32>
    %147 = vector.shape_cast %25 : vector<32xf32> to vector<1x32xf32>
    %148 = vector.broadcast %147 : vector<1x32xf32> to vector<16x32xf32>
    %149 = arith.addf %146, %148 : vector<16x32xf32>
    %150 = arith.truncf %149 : vector<16x32xf32> to vector<16x32xbf16>
    %cst_37 = arith.constant dense<0.000000e+00> : vector<16x128xf32>
    %151 = tpu.matmul %150, %30, %cst_37 {dimension_numbers = #tpu.dot_dimension_numbers<[1], [0], [0], [1], [0, 0, 1, 1], [], []>} : vector<16x32xbf16>, vector<32x128xbf16>, vector<16x128xf32> -> vector<16x128xf32>
    %152 = vector.shape_cast %40 : vector<128xf32> to vector<1x128xf32>
    %153 = vector.broadcast %152 : vector<1x128xf32> to vector<16x128xf32>
    %154 = arith.addf %151, %153 : vector<16x128xf32>
    %cst_38 = arith.constant 5.000000e-01 : f32
    %155 = vector.broadcast %cst_38 : f32 to vector<16x128xf32>
    %156 = arith.mulf %155, %154 : vector<16x128xf32>
    %cst_39 = arith.constant 4.471500e-02 : f32
    %157 = vector.broadcast %cst_39 : f32 to vector<16x128xf32>
    %158 = arith.mulf %157, %154 : vector<16x128xf32>
    %159 = arith.mulf %158, %154 : vector<16x128xf32>
    %160 = arith.mulf %159, %154 : vector<16x128xf32>
    %161 = arith.addf %154, %160 : vector<16x128xf32>
    %cst_40 = arith.constant 0.797884583 : f32
    %162 = vector.broadcast %cst_40 : f32 to vector<16x128xf32>
    %163 = arith.mulf %162, %161 : vector<16x128xf32>
    %164 = math.tanh %163 : vector<16x128xf32>
    %cst_41 = arith.constant 1.000000e+00 : f32
    %165 = vector.broadcast %cst_41 : f32 to vector<16x128xf32>
    %166 = arith.addf %165, %164 : vector<16x128xf32>
    %167 = arith.mulf %156, %166 : vector<16x128xf32>
    %168 = arith.truncf %167 : vector<16x128xf32> to vector<16x128xbf16>
    %cst_42 = arith.constant dense<0.000000e+00> : vector<16x32xf32>
    %169 = tpu.matmul %168, %32, %cst_42 {dimension_numbers = #tpu.dot_dimension_numbers<[1], [0], [0], [1], [0, 0, 1, 1], [], []>} : vector<16x128xbf16>, vector<128x32xbf16>, vector<16x32xf32> -> vector<16x32xf32>
    %170 = vector.shape_cast %42 : vector<32xf32> to vector<1x32xf32>
    %171 = vector.broadcast %170 : vector<1x32xf32> to vector<16x32xf32>
    %172 = arith.addf %169, %171 : vector<16x32xf32>
    %173 = arith.addf %125, %172 : vector<16x32xf32>
    %c4 = arith.constant 4 : index
    %c0_43 = arith.constant 0 : index
    %174 = vector.load %arg2[%c4, %c0_43] : memref<10x32xf32, #tpu.memory_space<vmem>>, vector<1x32xf32>
    %175 = vector.shape_cast %174 : vector<1x32xf32> to vector<32xf32>
    %c5 = arith.constant 5 : index
    %c0_44 = arith.constant 0 : index
    %176 = vector.load %arg2[%c5, %c0_44] : memref<10x32xf32, #tpu.memory_space<vmem>>, vector<1x32xf32>
    %177 = vector.shape_cast %176 : vector<1x32xf32> to vector<32xf32>
    %c6 = arith.constant 6 : index
    %c0_45 = arith.constant 0 : index
    %178 = vector.load %arg2[%c6, %c0_45] : memref<10x32xf32, #tpu.memory_space<vmem>>, vector<1x32xf32>
    %179 = vector.shape_cast %178 : vector<1x32xf32> to vector<32xf32>
    %c7 = arith.constant 7 : index
    %c0_46 = arith.constant 0 : index
    %180 = vector.load %arg2[%c7, %c0_46] : memref<10x32xf32, #tpu.memory_space<vmem>>, vector<1x32xf32>
    %181 = vector.shape_cast %180 : vector<1x32xf32> to vector<32xf32>
    %c1_47 = arith.constant 1 : index
    %c0_48 = arith.constant 0 : index
    %c0_49 = arith.constant 0 : index
    %182 = vector.load %arg3[%c1_47, %c0_48, %c0_49] : memref<2x32x256xbf16, #tpu.memory_space<vmem>>, vector<1x32x256xbf16>
    %183 = vector.shape_cast %182 : vector<1x32x256xbf16> to vector<32x256xbf16>
    %184 = vector.extract_strided_slice %183 {offsets = [0, 0], sizes = [32, 96], strides = [1, 1]} : vector<32x256xbf16> to vector<32x96xbf16>
    %185 = vector.extract_strided_slice %183 {offsets = [0, 96], sizes = [32, 32], strides = [1, 1]} : vector<32x256xbf16> to vector<32x32xbf16>
    %186 = vector.extract_strided_slice %183 {offsets = [0, 128], sizes = [32, 128], strides = [1, 1]} : vector<32x256xbf16> to vector<32x128xbf16>
    %c1_50 = arith.constant 1 : index
    %c0_51 = arith.constant 0 : index
    %c0_52 = arith.constant 0 : index
    %187 = vector.load %arg4[%c1_50, %c0_51, %c0_52] : memref<2x128x32xbf16, #tpu.memory_space<vmem>>, vector<1x128x32xbf16>
    %188 = vector.shape_cast %187 : vector<1x128x32xbf16> to vector<128x32xbf16>
    %c1_53 = arith.constant 1 : index
    %c0_54 = arith.constant 0 : index
    %c0_55 = arith.constant 0 : index
    %189 = vector.load %arg5[%c1_53, %c0_54, %c0_55] : memref<2x4x128xf32, #tpu.memory_space<vmem>>, vector<1x4x128xf32>
    %190 = vector.shape_cast %189 : vector<1x4x128xf32> to vector<4x128xf32>
    %191 = vector.extract_strided_slice %190 {offsets = [0, 0], sizes = [1, 96], strides = [1, 1]} : vector<4x128xf32> to vector<1x96xf32>
    %192 = vector.shape_cast %191 : vector<1x96xf32> to vector<96xf32>
    %193 = vector.extract_strided_slice %190 {offsets = [1, 0], sizes = [1, 32], strides = [1, 1]} : vector<4x128xf32> to vector<1x32xf32>
    %194 = vector.shape_cast %193 : vector<1x32xf32> to vector<32xf32>
    %195 = vector.extract_strided_slice %190 {offsets = [2, 0], sizes = [1, 128], strides = [1, 1]} : vector<4x128xf32> to vector<1x128xf32>
    %196 = vector.shape_cast %195 : vector<1x128xf32> to vector<128xf32>
    %197 = vector.extract_strided_slice %190 {offsets = [3, 0], sizes = [1, 32], strides = [1, 1]} : vector<4x128xf32> to vector<1x32xf32>
    %198 = vector.shape_cast %197 : vector<1x32xf32> to vector<32xf32>
    %cst_56 = arith.constant dense<0.000000e+00> : vector<16xf32>
    %199 = vector.multi_reduction <add>, %173, %cst_56 [1] : vector<16x32xf32> to vector<16xf32>
    %200 = vector.shape_cast %199 : vector<16xf32> to vector<16x1xf32>
    %cst_57 = arith.constant 3.200000e+01 : f32
    %201 = vector.broadcast %cst_57 : f32 to vector<16x1xf32>
    %202 = arith.divf %200, %201 : vector<16x1xf32>
    %203 = vector.broadcast %202 : vector<16x1xf32> to vector<16x32xf32>
    %204 = arith.subf %173, %203 : vector<16x32xf32>
    %205 = arith.mulf %204, %204 : vector<16x32xf32>
    %cst_58 = arith.constant dense<0.000000e+00> : vector<16xf32>
    %206 = vector.multi_reduction <add>, %205, %cst_58 [1] : vector<16x32xf32> to vector<16xf32>
    %207 = vector.shape_cast %206 : vector<16xf32> to vector<16x1xf32>
    %cst_59 = arith.constant 3.200000e+01 : f32
    %208 = vector.broadcast %cst_59 : f32 to vector<16x1xf32>
    %209 = arith.divf %207, %208 : vector<16x1xf32>
    %210 = vector.broadcast %202 : vector<16x1xf32> to vector<16x32xf32>
    %211 = arith.subf %173, %210 : vector<16x32xf32>
    %cst_60 = arith.constant 9.99999974E-6 : f32
    %212 = vector.broadcast %cst_60 : f32 to vector<16x1xf32>
    %213 = arith.addf %209, %212 : vector<16x1xf32>
    %214 = math.rsqrt %213 : vector<16x1xf32>
    %215 = vector.broadcast %214 : vector<16x1xf32> to vector<16x32xf32>
    %216 = arith.mulf %211, %215 : vector<16x32xf32>
    %217 = vector.shape_cast %175 : vector<32xf32> to vector<1x32xf32>
    %218 = vector.broadcast %217 : vector<1x32xf32> to vector<16x32xf32>
    %219 = arith.mulf %216, %218 : vector<16x32xf32>
    %220 = vector.shape_cast %177 : vector<32xf32> to vector<1x32xf32>
    %221 = vector.broadcast %220 : vector<1x32xf32> to vector<16x32xf32>
    %222 = arith.addf %219, %221 : vector<16x32xf32>
    %223 = arith.truncf %222 : vector<16x32xf32> to vector<16x32xbf16>
    %cst_61 = arith.constant dense<0.000000e+00> : vector<16x96xf32>
    %224 = tpu.matmul %223, %184, %cst_61 {dimension_numbers = #tpu.dot_dimension_numbers<[1], [0], [0], [1], [0, 0, 1, 1], [], []>} : vector<16x32xbf16>, vector<32x96xbf16>, vector<16x96xf32> -> vector<16x96xf32>
    %225 = vector.shape_cast %192 : vector<96xf32> to vector<1x96xf32>
    %226 = vector.broadcast %225 : vector<1x96xf32> to vector<16x96xf32>
    %227 = arith.addf %224, %226 : vector<16x96xf32>
    %228 = vector.extract_strided_slice %227 {offsets = [0, 0], sizes = [16, 8], strides = [1, 1]} : vector<16x96xf32> to vector<16x8xf32>
    %229 = vector.extract_strided_slice %227 {offsets = [0, 8], sizes = [16, 8], strides = [1, 1]} : vector<16x96xf32> to vector<16x8xf32>
    %230 = vector.extract_strided_slice %227 {offsets = [0, 16], sizes = [16, 8], strides = [1, 1]} : vector<16x96xf32> to vector<16x8xf32>
    %231 = vector.extract_strided_slice %227 {offsets = [0, 24], sizes = [16, 8], strides = [1, 1]} : vector<16x96xf32> to vector<16x8xf32>
    %232 = tpu.concatenate %228, %229, %230, %231 in 0 : vector<16x8xf32>, vector<16x8xf32>, vector<16x8xf32>, vector<16x8xf32> -> vector<64x8xf32>
    %233 = vector.shape_cast %232 : vector<64x8xf32> to vector<8x8x8xf32>
    %234 = vector.extract_strided_slice %227 {offsets = [0, 32], sizes = [16, 8], strides = [1, 1]} : vector<16x96xf32> to vector<16x8xf32>
    %235 = vector.extract_strided_slice %227 {offsets = [0, 40], sizes = [16, 8], strides = [1, 1]} : vector<16x96xf32> to vector<16x8xf32>
    %236 = vector.extract_strided_slice %227 {offsets = [0, 48], sizes = [16, 8], strides = [1, 1]} : vector<16x96xf32> to vector<16x8xf32>
    %237 = vector.extract_strided_slice %227 {offsets = [0, 56], sizes = [16, 8], strides = [1, 1]} : vector<16x96xf32> to vector<16x8xf32>
    %238 = tpu.concatenate %234, %235, %236, %237 in 0 : vector<16x8xf32>, vector<16x8xf32>, vector<16x8xf32>, vector<16x8xf32> -> vector<64x8xf32>
    %239 = vector.shape_cast %238 : vector<64x8xf32> to vector<8x8x8xf32>
    %240 = vector.extract_strided_slice %227 {offsets = [0, 64], sizes = [16, 8], strides = [1, 1]} : vector<16x96xf32> to vector<16x8xf32>
    %241 = vector.extract_strided_slice %227 {offsets = [0, 72], sizes = [16, 8], strides = [1, 1]} : vector<16x96xf32> to vector<16x8xf32>
    %242 = vector.extract_strided_slice %227 {offsets = [0, 80], sizes = [16, 8], strides = [1, 1]} : vector<16x96xf32> to vector<16x8xf32>
    %243 = vector.extract_strided_slice %227 {offsets = [0, 88], sizes = [16, 8], strides = [1, 1]} : vector<16x96xf32> to vector<16x8xf32>
    %244 = tpu.concatenate %240, %241, %242, %243 in 0 : vector<16x8xf32>, vector<16x8xf32>, vector<16x8xf32>, vector<16x8xf32> -> vector<64x8xf32>
    %245 = vector.shape_cast %244 : vector<64x8xf32> to vector<8x8x8xf32>
    %246 = arith.truncf %233 : vector<8x8x8xf32> to vector<8x8x8xbf16>
    %247 = arith.truncf %239 : vector<8x8x8xf32> to vector<8x8x8xbf16>
    "tpu.trace_start"() <{level = 10 : i32, message = "bqd,bkd->bqk"}> : () -> ()
    %cst_62 = arith.constant dense<0.000000e+00> : vector<8x8x8xf32>
    %248 = tpu.matmul %246, %247, %cst_62 {dimension_numbers = #tpu.dot_dimension_numbers<[2], [2], [1], [1], [0, 0, 0, 1, 1, 1], [0], [0]>} : vector<8x8x8xbf16>, vector<8x8x8xbf16>, vector<8x8x8xf32> -> vector<8x8x8xf32>
    "tpu.trace_stop"() : () -> ()
    %cst_63 = arith.constant 0.353553385 : f32
    %249 = vector.broadcast %cst_63 : f32 to vector<8x8x8xf32>
    %250 = arith.mulf %248, %249 : vector<8x8x8xf32>
    %251 = vector.broadcast %17 : vector<1x8x8xf32> to vector<8x8x8xf32>
    %252 = arith.addf %250, %251 : vector<8x8x8xf32>
    %cst_64 = arith.constant dense<0xFF800000> : vector<8x8xf32>
    %253 = vector.multi_reduction <maximumf>, %252, %cst_64 [2] : vector<8x8x8xf32> to vector<8x8xf32>
    %254 = vector.shape_cast %253 : vector<8x8xf32> to vector<8x8x1xf32>
    %255 = vector.broadcast %254 : vector<8x8x1xf32> to vector<8x8x8xf32>
    %256 = arith.subf %252, %255 : vector<8x8x8xf32>
    %257 = math.exp %256 : vector<8x8x8xf32>
    %cst_65 = arith.constant dense<0.000000e+00> : vector<8x8xf32>
    %258 = vector.multi_reduction <add>, %257, %cst_65 [2] : vector<8x8x8xf32> to vector<8x8xf32>
    %259 = vector.shape_cast %258 : vector<8x8xf32> to vector<8x8x1xf32>
    %260 = tpu.reciprocal %259 {approx = true} : vector<8x8x1xf32> -> vector<8x8x1xf32>
    %261 = arith.truncf %257 : vector<8x8x8xf32> to vector<8x8x8xbf16>
    %262 = arith.truncf %245 : vector<8x8x8xf32> to vector<8x8x8xbf16>
    "tpu.trace_start"() <{level = 10 : i32, message = "bqk,bkd->bqd"}> : () -> ()
    %cst_66 = arith.constant dense<0.000000e+00> : vector<8x8x8xf32>
    %263 = tpu.matmul %261, %262, %cst_66 {dimension_numbers = #tpu.dot_dimension_numbers<[2], [1], [1], [2], [0, 0, 0, 1, 1, 2], [0], [0]>} : vector<8x8x8xbf16>, vector<8x8x8xbf16>, vector<8x8x8xf32> -> vector<8x8x8xf32>
    "tpu.trace_stop"() : () -> ()
    %264 = vector.broadcast %260 : vector<8x8x1xf32> to vector<8x8x8xf32>
    %265 = arith.mulf %263, %264 : vector<8x8x8xf32>
    %266 = vector.shape_cast %265 : vector<8x8x8xf32> to vector<4x16x8xf32>
    %267 = vector.extract_strided_slice %266 {offsets = [0, 0, 0], sizes = [1, 16, 8], strides = [1, 1, 1]} : vector<4x16x8xf32> to vector<1x16x8xf32>
    %268 = vector.shape_cast %267 : vector<1x16x8xf32> to vector<16x8xf32>
    %269 = vector.extract_strided_slice %266 {offsets = [1, 0, 0], sizes = [1, 16, 8], strides = [1, 1, 1]} : vector<4x16x8xf32> to vector<1x16x8xf32>
    %270 = vector.shape_cast %269 : vector<1x16x8xf32> to vector<16x8xf32>
    %271 = vector.extract_strided_slice %266 {offsets = [2, 0, 0], sizes = [1, 16, 8], strides = [1, 1, 1]} : vector<4x16x8xf32> to vector<1x16x8xf32>
    %272 = vector.shape_cast %271 : vector<1x16x8xf32> to vector<16x8xf32>
    %273 = vector.extract_strided_slice %266 {offsets = [3, 0, 0], sizes = [1, 16, 8], strides = [1, 1, 1]} : vector<4x16x8xf32> to vector<1x16x8xf32>
    %274 = vector.shape_cast %273 : vector<1x16x8xf32> to vector<16x8xf32>
    %275 = tpu.concatenate %268, %270, %272, %274 in 1 : vector<16x8xf32>, vector<16x8xf32>, vector<16x8xf32>, vector<16x8xf32> -> vector<16x32xf32>
    %276 = arith.truncf %275 : vector<16x32xf32> to vector<16x32xbf16>
    %cst_67 = arith.constant dense<0.000000e+00> : vector<16x32xf32>
    %277 = tpu.matmul %276, %185, %cst_67 {dimension_numbers = #tpu.dot_dimension_numbers<[1], [0], [0], [1], [0, 0, 1, 1], [], []>} : vector<16x32xbf16>, vector<32x32xbf16>, vector<16x32xf32> -> vector<16x32xf32>
    %278 = vector.shape_cast %194 : vector<32xf32> to vector<1x32xf32>
    %279 = vector.broadcast %278 : vector<1x32xf32> to vector<16x32xf32>
    %280 = arith.addf %277, %279 : vector<16x32xf32>
    %281 = arith.addf %173, %280 : vector<16x32xf32>
    %cst_68 = arith.constant dense<0.000000e+00> : vector<16xf32>
    %282 = vector.multi_reduction <add>, %281, %cst_68 [1] : vector<16x32xf32> to vector<16xf32>
    %283 = vector.shape_cast %282 : vector<16xf32> to vector<16x1xf32>
    %cst_69 = arith.constant 3.200000e+01 : f32
    %284 = vector.broadcast %cst_69 : f32 to vector<16x1xf32>
    %285 = arith.divf %283, %284 : vector<16x1xf32>
    %286 = vector.broadcast %285 : vector<16x1xf32> to vector<16x32xf32>
    %287 = arith.subf %281, %286 : vector<16x32xf32>
    %288 = arith.mulf %287, %287 : vector<16x32xf32>
    %cst_70 = arith.constant dense<0.000000e+00> : vector<16xf32>
    %289 = vector.multi_reduction <add>, %288, %cst_70 [1] : vector<16x32xf32> to vector<16xf32>
    %290 = vector.shape_cast %289 : vector<16xf32> to vector<16x1xf32>
    %cst_71 = arith.constant 3.200000e+01 : f32
    %291 = vector.broadcast %cst_71 : f32 to vector<16x1xf32>
    %292 = arith.divf %290, %291 : vector<16x1xf32>
    %293 = vector.broadcast %285 : vector<16x1xf32> to vector<16x32xf32>
    %294 = arith.subf %281, %293 : vector<16x32xf32>
    %cst_72 = arith.constant 9.99999974E-6 : f32
    %295 = vector.broadcast %cst_72 : f32 to vector<16x1xf32>
    %296 = arith.addf %292, %295 : vector<16x1xf32>
    %297 = math.rsqrt %296 : vector<16x1xf32>
    %298 = vector.broadcast %297 : vector<16x1xf32> to vector<16x32xf32>
    %299 = arith.mulf %294, %298 : vector<16x32xf32>
    %300 = vector.shape_cast %179 : vector<32xf32> to vector<1x32xf32>
    %301 = vector.broadcast %300 : vector<1x32xf32> to vector<16x32xf32>
    %302 = arith.mulf %299, %301 : vector<16x32xf32>
    %303 = vector.shape_cast %181 : vector<32xf32> to vector<1x32xf32>
    %304 = vector.broadcast %303 : vector<1x32xf32> to vector<16x32xf32>
    %305 = arith.addf %302, %304 : vector<16x32xf32>
    %306 = arith.truncf %305 : vector<16x32xf32> to vector<16x32xbf16>
    %cst_73 = arith.constant dense<0.000000e+00> : vector<16x128xf32>
    %307 = tpu.matmul %306, %186, %cst_73 {dimension_numbers = #tpu.dot_dimension_numbers<[1], [0], [0], [1], [0, 0, 1, 1], [], []>} : vector<16x32xbf16>, vector<32x128xbf16>, vector<16x128xf32> -> vector<16x128xf32>
    %308 = vector.shape_cast %196 : vector<128xf32> to vector<1x128xf32>
    %309 = vector.broadcast %308 : vector<1x128xf32> to vector<16x128xf32>
    %310 = arith.addf %307, %309 : vector<16x128xf32>
    %cst_74 = arith.constant 5.000000e-01 : f32
    %311 = vector.broadcast %cst_74 : f32 to vector<16x128xf32>
    %312 = arith.mulf %311, %310 : vector<16x128xf32>
    %cst_75 = arith.constant 4.471500e-02 : f32
    %313 = vector.broadcast %cst_75 : f32 to vector<16x128xf32>
    %314 = arith.mulf %313, %310 : vector<16x128xf32>
    %315 = arith.mulf %314, %310 : vector<16x128xf32>
    %316 = arith.mulf %315, %310 : vector<16x128xf32>
    %317 = arith.addf %310, %316 : vector<16x128xf32>
    %cst_76 = arith.constant 0.797884583 : f32
    %318 = vector.broadcast %cst_76 : f32 to vector<16x128xf32>
    %319 = arith.mulf %318, %317 : vector<16x128xf32>
    %320 = math.tanh %319 : vector<16x128xf32>
    %cst_77 = arith.constant 1.000000e+00 : f32
    %321 = vector.broadcast %cst_77 : f32 to vector<16x128xf32>
    %322 = arith.addf %321, %320 : vector<16x128xf32>
    %323 = arith.mulf %312, %322 : vector<16x128xf32>
    %324 = arith.truncf %323 : vector<16x128xf32> to vector<16x128xbf16>
    %cst_78 = arith.constant dense<0.000000e+00> : vector<16x32xf32>
    %325 = tpu.matmul %324, %188, %cst_78 {dimension_numbers = #tpu.dot_dimension_numbers<[1], [0], [0], [1], [0, 0, 1, 1], [], []>} : vector<16x128xbf16>, vector<128x32xbf16>, vector<16x32xf32> -> vector<16x32xf32>
    %326 = vector.shape_cast %198 : vector<32xf32> to vector<1x32xf32>
    %327 = vector.broadcast %326 : vector<1x32xf32> to vector<16x32xf32>
    %328 = arith.addf %325, %327 : vector<16x32xf32>
    %329 = arith.addf %281, %328 : vector<16x32xf32>
    %c8 = arith.constant 8 : index
    %c0_79 = arith.constant 0 : index
    %330 = vector.load %arg2[%c8, %c0_79] : memref<10x32xf32, #tpu.memory_space<vmem>>, vector<1x32xf32>
    %331 = vector.shape_cast %330 : vector<1x32xf32> to vector<32xf32>
    %c9 = arith.constant 9 : index
    %c0_80 = arith.constant 0 : index
    %332 = vector.load %arg2[%c9, %c0_80] : memref<10x32xf32, #tpu.memory_space<vmem>>, vector<1x32xf32>
    %333 = vector.shape_cast %332 : vector<1x32xf32> to vector<32xf32>
    %cst_81 = arith.constant dense<0.000000e+00> : vector<16xf32>
    %334 = vector.multi_reduction <add>, %329, %cst_81 [1] : vector<16x32xf32> to vector<16xf32>
    %335 = vector.shape_cast %334 : vector<16xf32> to vector<16x1xf32>
    %cst_82 = arith.constant 3.200000e+01 : f32
    %336 = vector.broadcast %cst_82 : f32 to vector<16x1xf32>
    %337 = arith.divf %335, %336 : vector<16x1xf32>
    %338 = vector.broadcast %337 : vector<16x1xf32> to vector<16x32xf32>
    %339 = arith.subf %329, %338 : vector<16x32xf32>
    %340 = arith.mulf %339, %339 : vector<16x32xf32>
    %cst_83 = arith.constant dense<0.000000e+00> : vector<16xf32>
    %341 = vector.multi_reduction <add>, %340, %cst_83 [1] : vector<16x32xf32> to vector<16xf32>
    %342 = vector.shape_cast %341 : vector<16xf32> to vector<16x1xf32>
    %cst_84 = arith.constant 3.200000e+01 : f32
    %343 = vector.broadcast %cst_84 : f32 to vector<16x1xf32>
    %344 = arith.divf %342, %343 : vector<16x1xf32>
    %345 = vector.broadcast %337 : vector<16x1xf32> to vector<16x32xf32>
    %346 = arith.subf %329, %345 : vector<16x32xf32>
    %cst_85 = arith.constant 9.99999974E-6 : f32
    %347 = vector.broadcast %cst_85 : f32 to vector<16x1xf32>
    %348 = arith.addf %344, %347 : vector<16x1xf32>
    %349 = math.rsqrt %348 : vector<16x1xf32>
    %350 = vector.broadcast %349 : vector<16x1xf32> to vector<16x32xf32>
    %351 = arith.mulf %346, %350 : vector<16x32xf32>
    %352 = vector.shape_cast %331 : vector<32xf32> to vector<1x32xf32>
    %353 = vector.broadcast %352 : vector<1x32xf32> to vector<16x32xf32>
    %354 = arith.mulf %351, %353 : vector<16x32xf32>
    %355 = vector.shape_cast %333 : vector<32xf32> to vector<1x32xf32>
    %356 = vector.broadcast %355 : vector<1x32xf32> to vector<16x32xf32>
    %357 = arith.addf %354, %356 : vector<16x32xf32>
    %358 = vector.shape_cast %357 : vector<16x32xf32> to vector<2x8x32xf32>
    %359 = vector.extract_strided_slice %358 {offsets = [0, 0, 0], sizes = [2, 1, 32], strides = [1, 1, 1]} : vector<2x8x32xf32> to vector<2x1x32xf32>
    %360 = vector.shape_cast %359 : vector<2x1x32xf32> to vector<2x32xf32>
    %c0_86 = arith.constant 0 : index
    %c0_87 = arith.constant 0 : index
    %361 = vector.load %arg6[%c0_86, %c0_87] : memref<2x32xf32, #tpu.memory_space<vmem>>, vector<2x32xf32>
    tpu.vector_store %arg6[%c0_86, %c0_87], %360 {strides = array<i32>} : memref<2x32xf32, #tpu.memory_space<vmem>>, vector<2x32xf32>,
    return
  }
}

</mosaic_0001>

<llo_original>
// kernel: text_encoder_forward.1
$region0: #{text_encoder_forward.1}
  #allocation0 [shape = 'u32[]', space=smem, size = 0x4, offset = 0x4, fixed_abs, tag = 'smem constant byte address 0x4 - core index']
  #allocation1 [shape = 'u32[144,128]{1,0:T(1,128)}', space=vmem, size = 0x12000, scoped, tag = 'internal scratch']
  %s0 = inlined_call_operand.vmem [shape: s32[16,1], index: 0, kind: input, shape index: {}]
  %s1 = inlined_call_operand.vmem [shape: f32[128,32], index: 1, kind: input, shape index: {}]
  %s2 = inlined_call_operand.vmem [shape: f32[10,32], index: 2, kind: input, shape index: {}]
  %s3 = inlined_call_operand.vmem [shape: bf16[2,32,256], index: 3, kind: input, shape index: {}]
  %s4 = inlined_call_operand.vmem [shape: bf16[2,128,32], index: 4, kind: input, shape index: {}]
  %s5 = inlined_call_operand.vmem [shape: f32[2,4,128], index: 5, kind: input, shape index: {}]
  %s6 = inlined_call_operand.hbm [shape: f32[2,32], index: 6, kind: output, shape index: {}]
  %s7 = sld [smem:[#allocation0]]
  $region34: #{text_encoder_forward.1} parent=0
    _
  %s9 = ssub.s32 1, %s7
  %s10 = scalar_select 0, %s9, %s7
  $region1: #{text_encoder_forward.1} parent=0
    #allocation2 [shape = 'u8[1024]{0}', space=vmem, size = 0x400, scoped, tag = 'output window, operand 0, single buffered']
    #allocation3 [shape = 's32[1]{0}', space=sflag, size = 0x4, scoped, tag = 'scoped memory for text_encoder_forward.1']
    %11 = vsyncpa [#allocation3], 0
    // Predicated region
    $region2: #{text_encoder_forward.1} parent=1 // pred_check
      _
    $region3: #{text_encoder_forward.1} parent=1 // pred_check_branch
      %13 = sbr.rel (0) target = $region5
    $region4: #{text_encoder_forward.1} parent=1 // pred_region
      _
    $region5: #{text_encoder_forward.1} parent=1 // pred_fallthru
      _
    // Predicated region
    $region6: #{text_encoder_forward.1} parent=1 // pred_check
      _
    $region7: #{text_encoder_forward.1} parent=1 // pred_check_branch
      %15 = sbr.rel (0) target = $region9
    $region8: #{text_encoder_forward.1} parent=1 // pred_region
      _
    $region9: #{text_encoder_forward.1} parent=1 // pred_fallthru
      _
    // Predicated region
    $region10: #{text_encoder_forward.1} parent=1 // pred_check
      _
    $region11: #{text_encoder_forward.1} parent=1 // pred_check_branch
      %17 = sbr.rel (0) target = $region13
    $region12: #{text_encoder_forward.1} parent=1 // pred_region
      _
    $region13: #{text_encoder_forward.1} parent=1 // pred_fallthru
      _
    // Predicated region
    $region14: #{text_encoder_forward.1} parent=1 // pred_check
      _
    $region15: #{text_encoder_forward.1} parent=1 // pred_check_branch
      %19 = sbr.rel (0) target = $region17
    $region16: #{text_encoder_forward.1} parent=1 // pred_region
      _
    $region17: #{text_encoder_forward.1} parent=1 // pred_fallthru
      _
    // Predicated region
    $region18: #{text_encoder_forward.1} parent=1 // pred_check
      _
    $region19: #{text_encoder_forward.1} parent=1 // pred_check_branch
      %21 = sbr.rel (0) target = $region21
    $region20: #{text_encoder_forward.1} parent=1 // pred_region
      _
    $region21: #{text_encoder_forward.1} parent=1 // pred_fallthru
      _
    // Predicated region
    $region22: #{text_encoder_forward.1} parent=1 // pred_check
      _
    $region23: #{text_encoder_forward.1} parent=1 // pred_check_branch
      %23 = sbr.rel (0) target = $region25
    $region24: #{text_encoder_forward.1} parent=1 // pred_region
      _
    $region25: #{text_encoder_forward.1} parent=1 // pred_fallthru
      _
    %v25 = vld [vmem:[%s0] sm:$0xff]
    %v26 = vld [vmem:[%s0 + $0x8] sm:$0xff]
    %v27 = vlaneseq
    %v28 = vand.u32 %v27, 127
    %29 = vset.pattern.permute.xlu0 0
    %30 = vperm.xlu0 %29, %v25
    %v31 = vpop.permute.xlu0 %30
    %32 = vset.pattern.permute.xlu0 0
    %33 = vperm.xlu0 %32, %v26
    %v34 = vpop.permute.xlu0 %33
    %vm35 = vcmp.eq.s32.totalorder %v28, %v31
    %vm36 = vcmp.eq.s32.totalorder %v28, %v34
    %v37 = vsel %vm35, 1, 0
    %v38 = vsel %vm36, 1, 0
    %v39 = vcvt.s32.f32 %v37
    %v40 = vcvt.s32.f32 %v38
    %v41 = vld [vmem:[%s1] sm:$0xff]
    %v42 = vld [vmem:[%s1 + $0x8] sm:$0xff]
    %v43 = vld [vmem:[%s1 + $0x10] sm:$0xff]
    %v44 = vld [vmem:[%s1 + $0x18] sm:$0xff]
    %v45 = vld [vmem:[%s1 + $0x20] sm:$0xff]
    %v46 = vld [vmem:[%s1 + $0x28] sm:$0xff]
    %v47 = vld [vmem:[%s1 + $0x30] sm:$0xff]
    %v48 = vld [vmem:[%s1 + $0x38] sm:$0xff]
    %v49 = vld [vmem:[%s1 + $0x40] sm:$0xff]
    %vm50 = vcmask 523264
    %v52 = vsel %vm50, %v39, 0
    %v55 = vsel %vm50, %v40, 0
    %57 = vmatprep.subr.mxu0 0.0
    %58 = vmatpush1.msra.mxu0 %v41
    %59 = vmatprep.subr.mxu0 0.0
    %60 = vmatpush1.msra.mxu0 %v42
    %61 = vmatprep.subr.mxu0 0.0
    %62 = vmatpush1.msra.mxu0 %v43
    %63 = vmatprep.subr.mxu0 0.0
    %64 = vmatpush1.msra.mxu0 %v44
    %65 = vmatprep.subr.mxu0 0.0
    %66 = vmatpush1.msra.mxu0 %v45
    %67 = vmatprep.subr.mxu0 0.0
    %68 = vmatpush1.msra.mxu0 %v46
    %69 = vmatprep.subr.mxu0 0.0
    %70 = vmatpush1.msra.mxu0 %v47
    %71 = vmatprep.subr.mxu0 0.0
    %72 = vmatpush1.msra.mxu0 %v48
    %73 = vmatprep.subr.mxu0 0.0
    %74 = vmatpush1.msra.mxu0 0.0
    %75 = vmatprep.subr.mxu0 0.0
    %76 = vmatpush1.msra.mxu0 0.0
    %77 = vmatprep.subr.mxu0 0.0
    %78 = vmatpush1.msra.mxu0 0.0
    %79 = vmatprep.subr.mxu0 0.0
    %80 = vmatpush1.msra.mxu0 0.0
    %81 = vmatprep.subr.mxu0 0.0
    %82 = vmatpush1.msra.mxu0 0.0
    %83 = vmatprep.subr.mxu0 0.0
    %84 = vmatpush1.msra.mxu0 0.0
    %85 = vmatprep.subr.mxu0 0.0
    %86 = vmatpush1.msra.mxu0 0.0
    %87 = vmatprep.subr.mxu0 0.0
    %88 = vmatpush1.msra.mxu0 0.0
    %89 = vmatprep.subr.mxu0 0.0
    %90 = vmatpush1.msra.mxu0 0.0
    %91 = vmatprep.subr.mxu0 0.0
    %92 = vmatpush1.msra.mxu0 0.0
    %93 = vmatprep.subr.mxu0 0.0
    %94 = vmatpush1.msra.mxu0 0.0
    %95 = vmatprep.subr.mxu0 0.0
    %96 = vmatpush1.msra.mxu0 0.0
    %97 = vmatprep.subr.mxu0 0.0
    %98 = vmatpush1.msra.mxu0 0.0
    %99 = vmatprep.subr.mxu0 0.0
    %100 = vmatpush1.msra.mxu0 0.0
    %101 = vmatprep.subr.mxu0 0.0
    %102 = vmatpush1.msra.mxu0 0.0
    %103 = vmatprep.subr.mxu0 0.0
    %104 = vmatpush1.msra.mxu0 0.0
    %105 = vmatprep.subr.mxu0 0.0
    %106 = vmatpush1.msra.mxu0 0.0
    %107 = vmatprep.subr.mxu0 0.0
    %108 = vmatpush1.msra.mxu0 0.0
    %109 = vmatprep.subr.mxu0 0.0
    %110 = vmatpush1.msra.mxu0 0.0
    %111 = vmatprep.subr.mxu0 0.0
    %112 = vmatpush1.msra.mxu0 0.0
    %113 = vmatprep.subr.mxu0 0.0
    %114 = vmatpush1.msra.mxu0 0.0
    %115 = vmatprep.subr.mxu0 0.0
    %116 = vmatpush1.msra.mxu0 0.0
    %117 = vmatprep.subr.mxu0 0.0
    %118 = vmatpush1.msra.mxu0 0.0
    %119 = vmatprep.subr.mxu0 0.0
    %120 = vmatpush1.msra.mxu0 0.0
    %121 = vmatprep.mubr.f32.mxu0 0.0
    %122 = vmatmul.mubr.f32.gmra.mrb[0].mxu0 %v52
    %v123 = vpop.f32.mrb[0].mxu0
    %v124 = vadd.f32 %v49, %v123
    %v125 = vpop.f32.mrb[0].mxu0
    %126 = vmatprep.mubr.f32.mxu0 0.0
    %127 = vmatmul.mubr.f32.gmra.mrb[0].mxu0 %v55
    %v128 = vpop.f32.mrb[0].mxu0
    %v129 = vadd.f32 %v49, %v128
    %v130 = vpop.f32.mrb[0].mxu0
    %131 = vdwg.mxu0
    %v132 = vlaneseq
    %v133 = vshrl.u32 %v132, 7
    %vm134 = vcmp.le.s32.totalorder %v28, %v133
    %v135 = vsel %vm134, 0.0, -1e+30
    %v136 = vld [vmem:[%s2] sm:$0x1]
    %v137 = vld [vmem:[%s2 + $0x1] sm:$0x1]
    %v138 = vld [vmem:[%s2 + $0x2] sm:$0x1]
    %v139 = vld [vmem:[%s2 + $0x3] sm:$0x1]
    %v140 = vld [vmem:[%s3] sm:$0xff]
    %v141 = vld [vmem:[%s3 + $0x8] sm:$0xff]
    %v142 = vld [vmem:[%s3 + $0x10] sm:$0xff]
    %v143 = vld [vmem:[%s3 + $0x18] sm:$0xff]
    %v144 = vld [vmem:[%s4] sm:$0xf]
    %v145 = vld [vmem:[%s4 + $0x4] sm:$0xf]
    %v146 = vld [vmem:[%s4 + $0x8] sm:$0xf]
    %v147 = vld [vmem:[%s4 + $0xc] sm:$0xf]
    %v148 = vld [vmem:[%s4 + $0x10] sm:$0xf]
    %v149 = vld [vmem:[%s4 + $0x14] sm:$0xf]
    %v150 = vld [vmem:[%s4 + $0x18] sm:$0xf]
    %v151 = vld [vmem:[%s4 + $0x1c] sm:$0xf]
    %v152 = vld [vmem:[%s4 + $0x20] sm:$0xf]
    %v153 = vld [vmem:[%s4 + $0x24] sm:$0xf]
    %v154 = vld [vmem:[%s4 + $0x28] sm:$0xf]
    %v155 = vld [vmem:[%s4 + $0x2c] sm:$0xf]
    %v156 = vld [vmem:[%s4 + $0x30] sm:$0xf]
    %v157 = vld [vmem:[%s4 + $0x34] sm:$0xf]
    %v158 = vld [vmem:[%s4 + $0x38] sm:$0xf]
    %v159 = vld [vmem:[%s4 + $0x3c] sm:$0xf]
    %v160 = vld [vmem:[%s5] sm:$0xf]
    %vm161 = vcmask 261120
    %v162 = vsel %vm161, %v124, 0.0
    %163 = vadd.xlane.f32.xlu0 %v162
    %v164 = vpop.xlane.xlu0 %163
    %v165 = vsel %vm161, %v129, 0.0
    %166 = vadd.xlane.f32.xlu0 %v165
    %v167 = vpop.xlane.xlu0 %166
    %v168 = vrcp.pop 32.0
    %v169 = vmul.f32 %v164, %v168
    %v170 = vmul.f32 %v167, %v168
    %v171 = vsub.f32 %v124, %v169
    %v172 = vsub.f32 %v129, %v170
    %v173 = vmul.f32 %v171, %v171
    %v174 = vmul.f32 %v172, %v172
    %v175 = vsel %vm161, %v173, 0.0
    %176 = vadd.xlane.f32.xlu0 %v175
    %v177 = vpop.xlane.xlu0 %176
    %v178 = vsel %vm161, %v174, 0.0
    %179 = vadd.xlane.f32.xlu0 %v178
    %v180 = vpop.xlane.xlu0 %179
    %v181 = vmul.f32 %v177, %v168
    %v182 = vmul.f32 %v180, %v168
    %v183 = vadd.f32 %v181, 1e-05
    %v184 = vadd.f32 %v182, 1e-05
    %v185 = vrsqrt.pop %v183
    %v186 = vrsqrt.pop %v184
    %v187 = vmul.f32 %v171, %v185
    %v188 = vmul.f32 %v172, %v186
    %v189 = vlaneseq
    %v190 = vshrl.u32 %v189, 7
    %v191 = vsub.s32 0, %v190
    %v192 = vrot.slane %v136, %v191
    %v193 = vmul.f32 %v187, %v192
    %v194 = vmul.f32 %v188, %v192
    %v195 = vlaneseq
    %v196 = vshrl.u32 %v195, 7
    %v197 = vsub.s32 0, %v196
    %v198 = vrot.slane %v137, %v197
    %v199 = vadd.f32 %v193, %v198
    %v200 = vadd.f32 %v194, %v198
    %v201 = vpack.c.bf16 %v200, %v199
    %v202 = vlaneseq
    %v203 = vshrl.u32 %v202, 7
    %v204 = vsub.s32 0, %v203
    %v205 = vrot.slane %v160, %v204
    %v210 = vunpack.c.l.b16 %v140
    %v211 = vunpack.c.l.b16 %v141
    %v212 = vunpack.c.l.b16 %v142
    %v213 = vunpack.c.l.b16 %v143
    %v214 = vpack.c.b16 %v211, %v210
    %v215 = vpack.c.b16 %v213, %v212
    %v219 = vsel %vm161, %v201, 0
    %221 = vmatprep.subr.bf16.mxu0 0
    %222 = vmatpush1.bf16.msra.mxu0 %v214
    %223 = vmatprep.subr.bf16.mxu0 0
    %224 = vmatpush1.bf16.msra.mxu0 %v215
    %225 = vmatprep.subr.bf16.mxu0 0
    %226 = vmatpush1.bf16.msra.mxu0 0
    %227 = vmatprep.subr.bf16.mxu0 0
    %228 = vmatpush1.bf16.msra.mxu0 0
    %229 = vmatprep.subr.bf16.mxu0 0
    %230 = vmatpush1.bf16.msra.mxu0 0
    %231 = vmatprep.subr.bf16.mxu0 0
    %232 = vmatpush1.bf16.msra.mxu0 0
    %233 = vmatprep.subr.bf16.mxu0 0
    %234 = vmatpush1.bf16.msra.mxu0 0
    %235 = vmatprep.subr.bf16.mxu0 0
    %236 = vmatpush1.bf16.msra.mxu0 0
    %237 = vmatprep.subr.bf16.mxu0 0
    %238 = vmatpush1.bf16.msra.mxu0 0
    %239 = vmatprep.subr.bf16.mxu0 0
    %240 = vmatpush1.bf16.msra.mxu0 0
    %241 = vmatprep.subr.bf16.mxu0 0
    %242 = vmatpush1.bf16.msra.mxu0 0
    %243 = vmatprep.subr.bf16.mxu0 0
    %244 = vmatpush1.bf16.msra.mxu0 0
    %245 = vmatprep.subr.bf16.mxu0 0
    %246 = vmatpush1.bf16.msra.mxu0 0
    %247 = vmatprep.subr.bf16.mxu0 0
    %248 = vmatpush1.bf16.msra.mxu0 0
    %249 = vmatprep.subr.bf16.mxu0 0
    %250 = vmatpush1.bf16.msra.mxu0 0
    %251 = vmatprep.subr.bf16.mxu0 0
    %252 = vmatpush1.bf16.msra.mxu0 0
    %253 = vmatprep.mubr.bf16.mxu0 0
    %254 = vmatmul.mubr.bf16.gmra.mrb[0].mxu0 %v219
    %v255 = vpop.f32.mrb[0].mxu0
    %v256 = vadd.f32 %v205, %v255
    %v257 = vpop.f32.mrb[0].mxu0
    %v258 = vpop.f32.mrb[0].mxu0
    %v259 = vadd.f32 %v205, %v258
    %v260 = vpop.f32.mrb[0].mxu0
    %261 = vdwg.mxu0
    %264 = vrot.lane.b32.xlu0 %v256, 120
    %v265 = vpop.permute.xlu0 %264
    %266 = vrot.lane.b32.xlu0 %v259, 120
    %v267 = vpop.permute.xlu0 %266
    %270 = vrot.lane.b32.xlu0 %v256, 112
    %v271 = vpop.permute.xlu0 %270
    %272 = vrot.lane.b32.xlu0 %v259, 112
    %v273 = vpop.permute.xlu0 %272
    %276 = vrot.lane.b32.xlu0 %v256, 104
    %v277 = vpop.permute.xlu0 %276
    %278 = vrot.lane.b32.xlu0 %v259, 104
    %v279 = vpop.permute.xlu0 %278
    %v282 = vpack.c.bf16 %v256, %v256
    %v283 = vpack.c.bf16 %v259, %v259
    %v284 = vpack.c.bf16 %v265, %v265
    %v285 = vpack.c.bf16 %v267, %v267
    %v286 = vpack.c.bf16 %v271, %v271
    %v287 = vpack.c.bf16 %v273, %v273
    %v288 = vpack.c.bf16 %v277, %v277
    %v289 = vpack.c.bf16 %v279, %v279
    %291 = vrot.lane.b32.xlu0 %v282, 96
    %v292 = vpop.permute.xlu0 %291
    %vm293 = vcmask 64512
    %v295 = vsel %vm293, %v282, 0
    %v298 = vsel %vm293, %v292, 0
    %300 = vmatprep.subr.bf16.mxu0 0
    %301 = vmatpush1.bf16.xpose.msra.mxu0 %v298
    %302 = vmatprep.subr.bf16.mxu0 0
    %303 = vmatpush1.bf16.xpose.msra.mxu0 0
    %304 = vmatprep.subr.bf16.mxu0 0
    %305 = vmatpush1.bf16.xpose.msra.mxu0 0
    %306 = vmatprep.subr.bf16.mxu0 0
    %307 = vmatpush1.bf16.xpose.msra.mxu0 0
    %308 = vmatprep.subr.bf16.mxu0 0
    %309 = vmatpush1.bf16.xpose.msra.mxu0 0
    %310 = vmatprep.subr.bf16.mxu0 0
    %311 = vmatpush1.bf16.xpose.msra.mxu0 0
    %312 = vmatprep.subr.bf16.mxu0 0
    %313 = vmatpush1.bf16.xpose.msra.mxu0 0
    %314 = vmatprep.subr.bf16.mxu0 0
    %315 = vmatpush1.bf16.xpose.msra.mxu0 0
    %316 = vmatprep.subr.bf16.mxu0 0
    %317 = vmatpush1.bf16.xpose.msra.mxu0 0
    %318 = vmatprep.subr.bf16.mxu0 0
    %319 = vmatpush1.bf16.xpose.msra.mxu0 0
    %320 = vmatprep.subr.bf16.mxu0 0
    %321 = vmatpush1.bf16.xpose.msra.mxu0 0
    %322 = vmatprep.subr.bf16.mxu0 0
    %323 = vmatpush1.bf16.xpose.msra.mxu0 0
    %324 = vmatprep.subr.bf16.mxu0 0
    %325 = vmatpush1.bf16.xpose.msra.mxu0 0
    %326 = vmatprep.subr.bf16.mxu0 0
    %327 = vmatpush1.bf16.xpose.msra.mxu0 0
    %328 = vmatprep.subr.bf16.mxu0 0
    %329 = vmatpush1.bf16.xpose.msra.mxu0 0
    %330 = vmatprep.subr.bf16.mxu0 0
    %331 = vmatpush1.bf16.xpose.msra.mxu0 0
    %332 = vmatprep.mubr.bf16.mxu0 0
    %333 = vmatmul.mubr.bf16.gmra.mrb[0].mxu0 %v295
    %v334 = vpop.f32.mrb[0].mxu0
    %v335 = vadd.f32 0.0, %v334
    %v336 = vpop.f32.mrb[0].mxu0
    %v337 = vpop.f32.mrb[0].mxu0
    %v338 = vpop.f32.mrb[0].mxu0
    %339 = vdwg.mxu0
    %341 = vrot.lane.b32.xlu0 %v283, 96
    %v342 = vpop.permute.xlu0 %341
    %v344 = vsel %vm293, %v283, 0
    %v347 = vsel %vm293, %v342, 0
    %349 = vmatprep.subr.bf16.mxu0 0
    %350 = vmatpush1.bf16.xpose.msra.mxu0 %v347
    %351 = vmatprep.subr.bf16.mxu0 0
    %352 = vmatpush1.bf16.xpose.msra.mxu0 0
    %353 = vmatprep.subr.bf16.mxu0 0
    %354 = vmatpush1.bf16.xpose.msra.mxu0 0
    %355 = vmatprep.subr.bf16.mxu0 0
    %356 = vmatpush1.bf16.xpose.msra.mxu0 0
    %357 = vmatprep.subr.bf16.mxu0 0
    %358 = vmatpush1.bf16.xpose.msra.mxu0 0
    %359 = vmatprep.subr.bf16.mxu0 0
    %360 = vmatpush1.bf16.xpose.msra.mxu0 0
    %361 = vmatprep.subr.bf16.mxu0 0
    %362 = vmatpush1.bf16.xpose.msra.mxu0 0
    %363 = vmatprep.subr.bf16.mxu0 0
    %364 = vmatpush1.bf16.xpose.msra.mxu0 0
    %365 = vmatprep.subr.bf16.mxu0 0
    %366 = vmatpush1.bf16.xpose.msra.mxu0 0
    %367 = vmatprep.subr.bf16.mxu0 0
    %368 = vmatpush1.bf16.xpose.msra.mxu0 0
    %369 = vmatprep.subr.bf16.mxu0 0
    %370 = vmatpush1.bf16.xpose.msra.mxu0 0
    %371 = vmatprep.subr.bf16.mxu0 0
    %372 = vmatpush1.bf16.xpose.msra.mxu0 0
    %373 = vmatprep.subr.bf16.mxu0 0
    %374 = vmatpush1.bf16.xpose.msra.mxu0 0
    %375 = vmatprep.subr.bf16.mxu0 0
    %376 = vmatpush1.bf16.xpose.msra.mxu0 0
    %377 = vmatprep.subr.bf16.mxu0 0
    %378 = vmatpush1.bf16.xpose.msra.mxu0 0
    %379 = vmatprep.subr.bf16.mxu0 0
    %380 = vmatpush1.bf16.xpose.msra.mxu0 0
    %381 = vmatprep.mubr.bf16.mxu0 0
    %382 = vmatmul.mubr.bf16.gmra.mrb[0].mxu0 %v344
    %v383 = vpop.f32.mrb[0].mxu0
    %v384 = vadd.f32 0.0, %v383
    %v385 = vpop.f32.mrb[0].mxu0
    %v386 = vpop.f32.mrb[0].mxu0
    %v387 = vpop.f32.mrb[0].mxu0
    %388 = vdwg.mxu0
    %390 = vrot.lane.b32.xlu0 %v284, 96
    %v391 = vpop.permute.xlu0 %390
    %v393 = vsel %vm293, %v284, 0
    %v396 = vsel %vm293, %v391, 0
    %398 = vmatprep.subr.bf16.mxu0 0
    %399 = vmatpush1.bf16.xpose.msra.mxu0 %v396
    %400 = vmatprep.subr.bf16.mxu0 0
    %401 = vmatpush1.bf16.xpose.msra.mxu0 0
    %402 = vmatprep.subr.bf16.mxu0 0
    %403 = vmatpush1.bf16.xpose.msra.mxu0 0
    %404 = vmatprep.subr.bf16.mxu0 0
    %405 = vmatpush1.bf16.xpose.msra.mxu0 0
    %406 = vmatprep.subr.bf16.mxu0 0
    %407 = vmatpush1.bf16.xpose.msra.mxu0 0
    %408 = vmatprep.subr.bf16.mxu0 0
    %409 = vmatpush1.bf16.xpose.msra.mxu0 0
    %410 = vmatprep.subr.bf16.mxu0 0
    %411 = vmatpush1.bf16.xpose.msra.mxu0 0
    %412 = vmatprep.subr.bf16.mxu0 0
    %413 = vmatpush1.bf16.xpose.msra.mxu0 0
    %414 = vmatprep.subr.bf16.mxu0 0
    %415 = vmatpush1.bf16.xpose.msra.mxu0 0
    %416 = vmatprep.subr.bf16.mxu0 0
    %417 = vmatpush1.bf16.xpose.msra.mxu0 0
    %418 = vmatprep.subr.bf16.mxu0 0
    %419 = vmatpush1.bf16.xpose.msra.mxu0 0
    %420 = vmatprep.subr.bf16.mxu0 0
    %421 = vmatpush1.bf16.xpose.msra.mxu0 0
    %422 = vmatprep.subr.bf16.mxu0 0
    %423 = vmatpush1.bf16.xpose.msra.mxu0 0
    %424 = vmatprep.subr.bf16.mxu0 0
    %425 = vmatpush1.bf16.xpose.msra.mxu0 0
    %426 = vmatprep.subr.bf16.mxu0 0
    %427 = vmatpush1.bf16.xpose.msra.mxu0 0
    %428 = vmatprep.subr.bf16.mxu0 0
    %429 = vmatpush1.bf16.xpose.msra.mxu0 0
    %430 = vmatprep.mubr.bf16.mxu0 0
    %431 = vmatmul.mubr.bf16.gmra.mrb[0].mxu0 %v393
    %v432 = vpop.f32.mrb[0].mxu0
    %v433 = vadd.f32 0.0, %v432
    %v434 = vpop.f32.mrb[0].mxu0
    %v435 = vpop.f32.mrb[0].mxu0
    %v436 = vpop.f32.mrb[0].mxu0
    %437 = vdwg.mxu0
    %439 = vrot.lane.b32.xlu0 %v285, 96
    %v440 = vpop.permute.xlu0 %439
    %v442 = vsel %vm293, %v285, 0
    %v445 = vsel %vm293, %v440, 0
    %447 = vmatprep.subr.bf16.mxu0 0
    %448 = vmatpush1.bf16.xpose.msra.mxu0 %v445
    %449 = vmatprep.subr.bf16.mxu0 0
    %450 = vmatpush1.bf16.xpose.msra.mxu0 0
    %451 = vmatprep.subr.bf16.mxu0 0
    %452 = vmatpush1.bf16.xpose.msra.mxu0 0
    %453 = vmatprep.subr.bf16.mxu0 0
    %454 = vmatpush1.bf16.xpose.msra.mxu0 0
    %455 = vmatprep.subr.bf16.mxu0 0
    %456 = vmatpush1.bf16.xpose.msra.mxu0 0
    %457 = vmatprep.subr.bf16.mxu0 0
    %458 = vmatpush1.bf16.xpose.msra.mxu0 0
    %459 = vmatprep.subr.bf16.mxu0 0
    %460 = vmatpush1.bf16.xpose.msra.mxu0 0
    %461 = vmatprep.subr.bf16.mxu0 0
    %462 = vmatpush1.bf16.xpose.msra.mxu0 0
    %463 = vmatprep.subr.bf16.mxu0 0
    %464 = vmatpush1.bf16.xpose.msra.mxu0 0
    %465 = vmatprep.subr.bf16.mxu0 0
    %466 = vmatpush1.bf16.xpose.msra.mxu0 0
    %467 = vmatprep.subr.bf16.mxu0 0
    %468 = vmatpush1.bf16.xpose.msra.mxu0 0
    %469 = vmatprep.subr.bf16.mxu0 0
    %470 = vmatpush1.bf16.xpose.msra.mxu0 0
    %471 = vmatprep.subr.bf16.mxu0 0
    %472 = vmatpush1.bf16.xpose.msra.mxu0 0
    %473 = vmatprep.subr.bf16.mxu0 0
    %474 = vmatpush1.bf16.xpose.msra.mxu0 0
    %475 = vmatprep.subr.bf16.mxu0 0
    %476 = vmatpush1.bf16.xpose.msra.mxu0 0
    %477 = vmatprep.subr.bf16.mxu0 0
    %478 = vmatpush1.bf16.xpose.msra.mxu0 0
    %479 = vmatprep.mubr.bf16.mxu0 0
    %480 = vmatmul.mubr.bf16.gmra.mrb[0].mxu0 %v442
    %v481 = vpop.f32.mrb[0].mxu0
    %v482 = vadd.f32 0.0, %v481
    %v483 = vpop.f32.mrb[0].mxu0
    %v484 = vpop.f32.mrb[0].mxu0
    %v485 = vpop.f32.mrb[0].mxu0
    %486 = vdwg.mxu0
    %488 = vrot.lane.b32.xlu0 %v286, 96
    %v489 = vpop.permute.xlu0 %488
    %v491 = vsel %vm293, %v286, 0
    %v494 = vsel %vm293, %v489, 0
    %496 = vmatprep.subr.bf16.mxu0 0
    %497 = vmatpush1.bf16.xpose.msra.mxu0 %v494
    %498 = vmatprep.subr.bf16.mxu0 0
    %499 = vmatpush1.bf16.xpose.msra.mxu0 0
    %500 = vmatprep.subr.bf16.mxu0 0
    %501 = vmatpush1.bf16.xpose.msra.mxu0 0
    %502 = vmatprep.subr.bf16.mxu0 0
    %503 = vmatpush1.bf16.xpose.msra.mxu0 0
    %504 = vmatprep.subr.bf16.mxu0 0
    %505 = vmatpush1.bf16.xpose.msra.mxu0 0
    %506 = vmatprep.subr.bf16.mxu0 0
    %507 = vmatpush1.bf16.xpose.msra.mxu0 0
    %508 = vmatprep.subr.bf16.mxu0 0
    %509 = vmatpush1.bf16.xpose.msra.mxu0 0
    %510 = vmatprep.subr.bf16.mxu0 0
    %511 = vmatpush1.bf16.xpose.msra.mxu0 0
    %512 = vmatprep.subr.bf16.mxu0 0
    %513 = vmatpush1.bf16.xpose.msra.mxu0 0
    %514 = vmatprep.subr.bf16.mxu0 0
    %515 = vmatpush1.bf16.xpose.msra.mxu0 0
    %516 = vmatprep.subr.bf16.mxu0 0
    %517 = vmatpush1.bf16.xpose.msra.mxu0 0
    %518 = vmatprep.subr.bf16.mxu0 0
    %519 = vmatpush1.bf16.xpose.msra.mxu0 0
    %520 = vmatprep.subr.bf16.mxu0 0
    %521 = vmatpush1.bf16.xpose.msra.mxu0 0
    %522 = vmatprep.subr.bf16.mxu0 0
    %523 = vmatpush1.bf16.xpose.msra.mxu0 0
    %524 = vmatprep.subr.bf16.mxu0 0
    %525 = vmatpush1.bf16.xpose.msra.mxu0 0
    %526 = vmatprep.subr.bf16.mxu0 0
    %527 = vmatpush1.bf16.xpose.msra.mxu0 0
    %528 = vmatprep.mubr.bf16.mxu0 0
    %529 = vmatmul.mubr.bf16.gmra.mrb[0].mxu0 %v491
    %v530 = vpop.f32.mrb[0].mxu0
    %v531 = vadd.f32 0.0, %v530
    %v532 = vpop.f32.mrb[0].mxu0
    %v533 = vpop.f32.mrb[0].mxu0
    %v534 = vpop.f32.mrb[0].mxu0
    %535 = vdwg.mxu0
    %537 = vrot.lane.b32.xlu0 %v287, 96
    %v538 = vpop.permute.xlu0 %537
    %v540 = vsel %vm293, %v287, 0
    %v543 = vsel %vm293, %v538, 0
    %545 = vmatprep.subr.bf16.mxu0 0
    %546 = vmatpush1.bf16.xpose.msra.mxu0 %v543
    %547 = vmatprep.subr.bf16.mxu0 0
    %548 = vmatpush1.bf16.xpose.msra.mxu0 0
    %549 = vmatprep.subr.bf16.mxu0 0
    %550 = vmatpush1.bf16.xpose.msra.mxu0 0
    %551 = vmatprep.subr.bf16.mxu0 0
    %552 = vmatpush1.bf16.xpose.msra.mxu0 0
    %553 = vmatprep.subr.bf16.mxu0 0
    %554 = vmatpush1.bf16.xpose.msra.mxu0 0
    %555 = vmatprep.subr.bf16.mxu0 0
    %556 = vmatpush1.bf16.xpose.msra.mxu0 0
    %557 = vmatprep.subr.bf16.mxu0 0
    %558 = vmatpush1.bf16.xpose.msra.mxu0 0
    %559 = vmatprep.subr.bf16.mxu0 0
    %560 = vmatpush1.bf16.xpose.msra.mxu0 0
    %561 = vmatprep.subr.bf16.mxu0 0
    %562 = vmatpush1.bf16.xpose.msra.mxu0 0
    %563 = vmatprep.subr.bf16.mxu0 0
    %564 = vmatpush1.bf16.xpose.msra.mxu0 0
    %565 = vmatprep.subr.bf16.mxu0 0
    %566 = vmatpush1.bf16.xpose.msra.mxu0 0
    %567 = vmatprep.subr.bf16.mxu0 0
    %568 = vmatpush1.bf16.xpose.msra.mxu0 0
    %569 = vmatprep.subr.bf16.mxu0 0
    %570 = vmatpush1.bf16.xpose.msra.mxu0 0
    %571 = vmatprep.subr.bf16.mxu0 0
    %572 = vmatpush1.bf16.xpose.msra.mxu0 0
    %573 = vmatprep.subr.bf16.mxu0 0
    %574 = vmatpush1.bf16.xpose.msra.mxu0 0
    %575 = vmatprep.subr.bf16.mxu0 0
    %576 = vmatpush1.bf16.xpose.msra.mxu0 0
    %577 = vmatprep.mubr.bf16.mxu0 0
    %578 = vmatmul.mubr.bf16.gmra.mrb[0].mxu0 %v540
    %v579 = vpop.f32.mrb[0].mxu0
    %v580 = vadd.f32 0.0, %v579
    %v581 = vpop.f32.mrb[0].mxu0
    %v582 = vpop.f32.mrb[0].mxu0
    %v583 = vpop.f32.mrb[0].mxu0
    %584 = vdwg.mxu0
    %586 = vrot.lane.b32.xlu0 %v288, 96
    %v587 = vpop.permute.xlu0 %586
    %v589 = vsel %vm293, %v288, 0
    %v592 = vsel %vm293, %v587, 0
    %594 = vmatprep.subr.bf16.mxu0 0
    %595 = vmatpush1.bf16.xpose.msra.mxu0 %v592
    %596 = vmatprep.subr.bf16.mxu0 0
    %597 = vmatpush1.bf16.xpose.msra.mxu0 0
    %598 = vmatprep.subr.bf16.mxu0 0
    %599 = vmatpush1.bf16.xpose.msra.mxu0 0
    %600 = vmatprep.subr.bf16.mxu0 0
    %601 = vmatpush1.bf16.xpose.msra.mxu0 0
    %602 = vmatprep.subr.bf16.mxu0 0
    %603 = vmatpush1.bf16.xpose.msra.mxu0 0
    %604 = vmatprep.subr.bf16.mxu0 0
    %605 = vmatpush1.bf16.xpose.msra.mxu0 0
    %606 = vmatprep.subr.bf16.mxu0 0
    %607 = vmatpush1.bf16.xpose.msra.mxu0 0
    %608 = vmatprep.subr.bf16.mxu0 0
    %609 = vmatpush1.bf16.xpose.msra.mxu0 0
    %610 = vmatprep.subr.bf16.mxu0 0
    %611 = vmatpush1.bf16.xpose.msra.mxu0 0
    %612 = vmatprep.subr.bf16.mxu0 0
    %613 = vmatpush1.bf16.xpose.msra.mxu0 0
    %614 = vmatprep.subr.bf16.mxu0 0
    %615 = vmatpush1.bf16.xpose.msra.mxu0 0
    %616 = vmatprep.subr.bf16.mxu0 0
    %617 = vmatpush1.bf16.xpose.msra.mxu0 0
    %618 = vmatprep.subr.bf16.mxu0 0
    %619 = vmatpush1.bf16.xpose.msra.mxu0 0
    %620 = vmatprep.subr.bf16.mxu0 0
    %621 = vmatpush1.bf16.xpose.msra.mxu0 0
    %622 = vmatprep.subr.bf16.mxu0 0
    %623 = vmatpush1.bf16.xpose.msra.mxu0 0
    %624 = vmatprep.subr.bf16.mxu0 0
    %625 = vmatpush1.bf16.xpose.msra.mxu0 0
    %626 = vmatprep.mubr.bf16.mxu0 0
    %627 = vmatmul.mubr.bf16.gmra.mrb[0].mxu0 %v589
    %v628 = vpop.f32.mrb[0].mxu0
    %v629 = vadd.f32 0.0, %v628
    %v630 = vpop.f32.mrb[0].mxu0
    %v631 = vpop.f32.mrb[0].mxu0
    %v632 = vpop.f32.mrb[0].mxu0
    %633 = vdwg.mxu0
    %635 = vrot.lane.b32.xlu0 %v289, 96
    %v636 = vpop.permute.xlu0 %635
    %v638 = vsel %vm293, %v289, 0
    %v641 = vsel %vm293, %v636, 0
    %643 = vmatprep.subr.bf16.mxu0 0
    %644 = vmatpush1.bf16.xpose.msra.mxu0 %v641
    %645 = vmatprep.subr.bf16.mxu0 0
    %646 = vmatpush1.bf16.xpose.msra.mxu0 0
    %647 = vmatprep.subr.bf16.mxu0 0
    %648 = vmatpush1.bf16.xpose.msra.mxu0 0
    %649 = vmatprep.subr.bf16.mxu0 0
    %650 = vmatpush1.bf16.xpose.msra.mxu0 0
    %651 = vmatprep.subr.bf16.mxu0 0
    %652 = vmatpush1.bf16.xpose.msra.mxu0 0
    %653 = vmatprep.subr.bf16.mxu0 0
    %654 = vmatpush1.bf16.xpose.msra.mxu0 0
    %655 = vmatprep.subr.bf16.mxu0 0
    %656 = vmatpush1.bf16.xpose.msra.mxu0 0
    %657 = vmatprep.subr.bf16.mxu0 0
    %658 = vmatpush1.bf16.xpose.msra.mxu0 0
    %659 = vmatprep.subr.bf16.mxu0 0
    %660 = vmatpush1.bf16.xpose.msra.mxu0 0
    %661 = vmatprep.subr.bf16.mxu0 0
    %662 = vmatpush1.bf16.xpose.msra.mxu0 0
    %663 = vmatprep.subr.bf16.mxu0 0
    %664 = vmatpush1.bf16.xpose.msra.mxu0 0
    %665 = vmatprep.subr.bf16.mxu0 0
    %666 = vmatpush1.bf16.xpose.msra.mxu0 0
    %667 = vmatprep.subr.bf16.mxu0 0
    %668 = vmatpush1.bf16.xpose.msra.mxu0 0
    %669 = vmatprep.subr.bf16.mxu0 0
    %670 = vmatpush1.bf16.xpose.msra.mxu0 0
    %671 = vmatprep.subr.bf16.mxu0 0
    %672 = vmatpush1.bf16.xpose.msra.mxu0 0
    %673 = vmatprep.subr.bf16.mxu0 0
    %674 = vmatpush1.bf16.xpose.msra.mxu0 0
    %675 = vmatprep.mubr.bf16.mxu0 0
    %676 = vmatmul.mubr.bf16.gmra.mrb[0].mxu0 %v638
    %v677 = vpop.f32.mrb[0].mxu0
    %v678 = vadd.f32 0.0, %v677
    %v679 = vpop.f32.mrb[0].mxu0
    %v680 = vpop.f32.mrb[0].mxu0
    %v681 = vpop.f32.mrb[0].mxu0
    %682 = vdwg.mxu0
    %v683 = vmul.f32 %v335, 0.35355338
    %v684 = vmul.f32 %v384, 0.35355338
    %v685 = vmul.f32 %v433, 0.35355338
    %v686 = vmul.f32 %v482, 0.35355338
    %v687 = vmul.f32 %v531, 0.35355338
    %v688 = vmul.f32 %v580, 0.35355338
    %v689 = vmul.f32 %v629, 0.35355338
    %v690 = vmul.f32 %v678, 0.35355338
    %v691 = vadd.f32 %v683, %v135
    %v692 = vadd.f32 %v684, %v135
    %v693 = vadd.f32 %v685, %v135
    %v694 = vadd.f32 %v686, %v135
    %v695 = vadd.f32 %v687, %v135
    %v696 = vadd.f32 %v688, %v135
    %v697 = vadd.f32 %v689, %v135
    %v698 = vadd.f32 %v690, %v135
    %v699 = vsel %vm293, %v691, -inf
    %700 = vmax.xlane.f32.xlu0 %v699
    %v701 = vpop.xlane.xlu0 %700
    %v702 = vsel %vm293, %v692, -inf
    %703 = vmax.xlane.f32.xlu0 %v702
    %v704 = vpop.xlane.xlu0 %703
    %v705 = vsel %vm293, %v693, -inf
    %706 = vmax.xlane.f32.xlu0 %v705
    %v707 = vpop.xlane.xlu0 %706
    %v708 = vsel %vm293, %v694, -inf
    %709 = vmax.xlane.f32.xlu0 %v708
    %v710 = vpop.xlane.xlu0 %709
    %v711 = vsel %vm293, %v695, -inf
    %712 = vmax.xlane.f32.xlu0 %v711
    %v713 = vpop.xlane.xlu0 %712
    %v714 = vsel %vm293, %v696, -inf
    %715 = vmax.xlane.f32.xlu0 %v714
    %v716 = vpop.xlane.xlu0 %715
    %v717 = vsel %vm293, %v697, -inf
    %718 = vmax.xlane.f32.xlu0 %v717
    %v719 = vpop.xlane.xlu0 %718
    %v720 = vsel %vm293, %v698, -inf
    %721 = vmax.xlane.f32.xlu0 %v720
    %v722 = vpop.xlane.xlu0 %721
    %v723 = vsub.f32 %v691, %v701
    %v724 = vsub.f32 %v692, %v704
    %v725 = vsub.f32 %v693, %v707
    %v726 = vsub.f32 %v694, %v710
    %v727 = vsub.f32 %v695, %v713
    %v728 = vsub.f32 %v696, %v716
    %v729 = vsub.f32 %v697, %v719
    %v730 = vsub.f32 %v698, %v722
    %v731 = vmul.f32 %v723, 1.442695
    %v732 = vpow.pop %v731
    %v733 = vmul.f32 %v724, 1.442695
    %v734 = vpow.pop %v733
    %v735 = vmul.f32 %v725, 1.442695
    %v736 = vpow.pop %v735
    %v737 = vmul.f32 %v726, 1.442695
    %v738 = vpow.pop %v737
    %v739 = vmul.f32 %v727, 1.442695
    %v740 = vpow.pop %v739
    %v741 = vmul.f32 %v728, 1.442695
    %v742 = vpow.pop %v741
    %v743 = vmul.f32 %v729, 1.442695
    %v744 = vpow.pop %v743
    %v745 = vmul.f32 %v730, 1.442695
    %v746 = vpow.pop %v745
    %v747 = vsel %vm293, %v732, 0.0
    %748 = vadd.xlane.f32.xlu0 %v747
    %v749 = vpop.xlane.xlu0 %748
    %v750 = vsel %vm293, %v734, 0.0
    %751 = vadd.xlane.f32.xlu0 %v750
    %v752 = vpop.xlane.xlu0 %751
    %v753 = vsel %vm293, %v736, 0.0
    %754 = vadd.xlane.f32.xlu0 %v753
    %v755 = vpop.xlane.xlu0 %754
    %v756 = vsel %vm293, %v738, 0.0
    %757 = vadd.xlane.f32.xlu0 %v756
    %v758 = vpop.xlane.xlu0 %757
    %v759 = vsel %vm293, %v740, 0.0
    %760 = vadd.xlane.f32.xlu0 %v759
    %v761 = vpop.xlane.xlu0 %760
    %v762 = vsel %vm293, %v742, 0.0
    %763 = vadd.xlane.f32.xlu0 %v762
    %v764 = vpop.xlane.xlu0 %763
    %v765 = vsel %vm293, %v744, 0.0
    %766 = vadd.xlane.f32.xlu0 %v765
    %v767 = vpop.xlane.xlu0 %766
    %v768 = vsel %vm293, %v746, 0.0
    %769 = vadd.xlane.f32.xlu0 %v768
    %v770 = vpop.xlane.xlu0 %769
    %v771 = vrcp.pop %v749
    %v772 = vrcp.pop %v752
    %v773 = vrcp.pop %v755
    %v774 = vrcp.pop %v758
    %v775 = vrcp.pop %v761
    %v776 = vrcp.pop %v764
    %v777 = vrcp.pop %v767
    %v778 = vrcp.pop %v770
    %v779 = vpack.c.bf16 %v732, %v732
    %v780 = vpack.c.bf16 %v734, %v734
    %v781 = vpack.c.bf16 %v736, %v736
    %v782 = vpack.c.bf16 %v738, %v738
    %v783 = vpack.c.bf16 %v740, %v740
    %v784 = vpack.c.bf16 %v742, %v742
    %v785 = vpack.c.bf16 %v744, %v744
    %v786 = vpack.c.bf16 %v746, %v746
    %787 = vrot.lane.b32.xlu0 %v282, 64
    %v788 = vpop.permute.xlu0 %787
    %v790 = vsel %vm293, %v779, 0
    %vm792 = vcmask 1043456
    %v794 = vsel %vm792, %v788, 0
    %796 = vmatprep.subr.bf16.mxu0 0
    %797 = vmatpush1.bf16.msra.mxu0 %v794
    %798 = vmatprep.subr.bf16.mxu0 0
    %799 = vmatpush1.bf16.msra.mxu0 0
    %800 = vmatprep.subr.bf16.mxu0 0
    %801 = vmatpush1.bf16.msra.mxu0 0
    %802 = vmatprep.subr.bf16.mxu0 0
    %803 = vmatpush1.bf16.msra.mxu0 0
    %804 = vmatprep.subr.bf16.mxu0 0
    %805 = vmatpush1.bf16.msra.mxu0 0
    %806 = vmatprep.subr.bf16.mxu0 0
    %807 = vmatpush1.bf16.msra.mxu0 0
    %808 = vmatprep.subr.bf16.mxu0 0
    %809 = vmatpush1.bf16.msra.mxu0 0
    %810 = vmatprep.subr.bf16.mxu0 0
    %811 = vmatpush1.bf16.msra.mxu0 0
    %812 = vmatprep.subr.bf16.mxu0 0
    %813 = vmatpush1.bf16.msra.mxu0 0
    %814 = vmatprep.subr.bf16.mxu0 0
    %815 = vmatpush1.bf16.msra.mxu0 0
    %816 = vmatprep.subr.bf16.mxu0 0
    %817 = vmatpush1.bf16.msra.mxu0 0
    %818 = vmatprep.subr.bf16.mxu0 0
    %819 = vmatpush1.bf16.msra.mxu0 0
    %820 = vmatprep.subr.bf16.mxu0 0
    %821 = vmatpush1.bf16.msra.mxu0 0
    %822 = vmatprep.subr.bf16.mxu0 0
    %823 = vmatpush1.bf16.msra.mxu0 0
    %824 = vmatprep.subr.bf16.mxu0 0
    %825 = vmatpush1.bf16.msra.mxu0 0
    %826 = vmatprep.subr.bf16.mxu0 0
    %827 = vmatpush1.bf16.msra.mxu0 0
    %828 = vmatprep.mubr.bf16.mxu0 0
    %829 = vmatmul.mubr.bf16.gmra.mrb[0].mxu0 %v790
    %v830 = vpop.f32.mrb[0].mxu0
    %v831 = vadd.f32 0.0, %v830
    %v832 = vpop.f32.mrb[0].mxu0
    %v833 = vpop.f32.mrb[0].mxu0
    %v834 = vpop.f32.mrb[0].mxu0
    %835 = vdwg.mxu0
    %836 = vrot.lane.b32.xlu0 %v283, 64
    %v837 = vpop.permute.xlu0 %836
    %v839 = vsel %vm293, %v780, 0
    %v842 = vsel %vm792, %v837, 0
    %844 = vmatprep.subr.bf16.mxu0 0
    %845 = vmatpush1.bf16.msra.mxu0 %v842
    %846 = vmatprep.subr.bf16.mxu0 0
    %847 = vmatpush1.bf16.msra.mxu0 0
    %848 = vmatprep.subr.bf16.mxu0 0
    %849 = vmatpush1.bf16.msra.mxu0 0
    %850 = vmatprep.subr.bf16.mxu0 0
    %851 = vmatpush1.bf16.msra.mxu0 0
    %852 = vmatprep.subr.bf16.mxu0 0
    %853 = vmatpush1.bf16.msra.mxu0 0
    %854 = vmatprep.subr.bf16.mxu0 0
    %855 = vmatpush1.bf16.msra.mxu0 0
    %856 = vmatprep.subr.bf16.mxu0 0
    %857 = vmatpush1.bf16.msra.mxu0 0
    %858 = vmatprep.subr.bf16.mxu0 0
    %859 = vmatpush1.bf16.msra.mxu0 0
    %860 = vmatprep.subr.bf16.mxu0 0
    %861 = vmatpush1.bf16.msra.mxu0 0
    %862 = vmatprep.subr.bf16.mxu0 0
    %863 = vmatpush1.bf16.msra.mxu0 0
    %864 = vmatprep.subr.bf16.mxu0 0
    %865 = vmatpush1.bf16.msra.mxu0 0
    %866 = vmatprep.subr.bf16.mxu0 0
    %867 = vmatpush1.bf16.msra.mxu0 0
    %868 = vmatprep.subr.bf16.mxu0 0
    %869 = vmatpush1.bf16.msra.mxu0 0
    %870 = vmatprep.subr.bf16.mxu0 0
    %871 = vmatpush1.bf16.msra.mxu0 0
    %872 = vmatprep.subr.bf16.mxu0 0
    %873 = vmatpush1.bf16.msra.mxu0 0
    %874 = vmatprep.subr.bf16.mxu0 0
    %875 = vmatpush1.bf16.msra.mxu0 0
    %876 = vmatprep.mubr.bf16.mxu0 0
    %877 = vmatmul.mubr.bf16.gmra.mrb[0].mxu0 %v839
    %v878 = vpop.f32.mrb[0].mxu0
    %v879 = vadd.f32 0.0, %v878
    %v880 = vpop.f32.mrb[0].mxu0
    %v881 = vpop.f32.mrb[0].mxu0
    %v882 = vpop.f32.mrb[0].mxu0
    %883 = vdwg.mxu0
    %884 = vrot.lane.b32.xlu0 %v284, 64
    %v885 = vpop.permute.xlu0 %884
    %v887 = vsel %vm293, %v781, 0
    %v890 = vsel %vm792, %v885, 0
    %892 = vmatprep.subr.bf16.mxu0 0
    %893 = vmatpush1.bf16.msra.mxu0 %v890
    %894 = vmatprep.subr.bf16.mxu0 0
    %895 = vmatpush1.bf16.msra.mxu0 0
    %896 = vmatprep.subr.bf16.mxu0 0
    %897 = vmatpush1.bf16.msra.mxu0 0
    %898 = vmatprep.subr.bf16.mxu0 0
    %899 = vmatpush1.bf16.msra.mxu0 0
    %900 = vmatprep.subr.bf16.mxu0 0
    %901 = vmatpush1.bf16.msra.mxu0 0
    %902 = vmatprep.subr.bf16.mxu0 0
    %903 = vmatpush1.bf16.msra.mxu0 0
    %904 = vmatprep.subr.bf16.mxu0 0
    %905 = vmatpush1.bf16.msra.mxu0 0
    %906 = vmatprep.subr.bf16.mxu0 0
    %907 = vmatpush1.bf16.msra.mxu0 0
    %908 = vmatprep.subr.bf16.mxu0 0
    %909 = vmatpush1.bf16.msra.mxu0 0
    %910 = vmatprep.subr.bf16.mxu0 0
    %911 = vmatpush1.bf16.msra.mxu0 0
    %912 = vmatprep.subr.bf16.mxu0 0
    %913 = vmatpush1.bf16.msra.mxu0 0
    %914 = vmatprep.subr.bf16.mxu0 0
    %915 = vmatpush1.bf16.msra.mxu0 0
    %916 = vmatprep.subr.bf16.mxu0 0
    %917 = vmatpush1.bf16.msra.mxu0 0
    %918 = vmatprep.subr.bf16.mxu0 0
    %919 = vmatpush1.bf16.msra.mxu0 0
    %920 = vmatprep.subr.bf16.mxu0 0
    %921 = vmatpush1.bf16.msra.mxu0 0
    %922 = vmatprep.subr.bf16.mxu0 0
    %923 = vmatpush1.bf16.msra.mxu0 0
    %924 = vmatprep.mubr.bf16.mxu0 0
    %925 = vmatmul.mubr.bf16.gmra.mrb[0].mxu0 %v887
    %v926 = vpop.f32.mrb[0].mxu0
    %v927 = vadd.f32 0.0, %v926
    %v928 = vpop.f32.mrb[0].mxu0
    %v929 = vpop.f32.mrb[0].mxu0
    %v930 = vpop.f32.mrb[0].mxu0
    %931 = vdwg.mxu0
    %932 = vrot.lane.b32.xlu0 %v285, 64
    %v933 = vpop.permute.xlu0 %932
    %v935 = vsel %vm293, %v782, 0
    %v938 = vsel %vm792, %v933, 0
    %940 = vmatprep.subr.bf16.mxu0 0
    %941 = vmatpush1.bf16.msra.mxu0 %v938
    %942 = vmatprep.subr.bf16.mxu0 0
    %943 = vmatpush1.bf16.msra.mxu0 0
    %944 = vmatprep.subr.bf16.mxu0 0
    %945 = vmatpush1.bf16.msra.mxu0 0
    %946 = vmatprep.subr.bf16.mxu0 0
    %947 = vmatpush1.bf16.msra.mxu0 0
    %948 = vmatprep.subr.bf16.mxu0 0
    %949 = vmatpush1.bf16.msra.mxu0 0
    %950 = vmatprep.subr.bf16.mxu0 0
    %951 = vmatpush1.bf16.msra.mxu0 0
    %952 = vmatprep.subr.bf16.mxu0 0
    %953 = vmatpush1.bf16.msra.mxu0 0
    %954 = vmatprep.subr.bf16.mxu0 0
    %955 = vmatpush1.bf16.msra.mxu0 0
    %956 = vmatprep.subr.bf16.mxu0 0
    %957 = vmatpush1.bf16.msra.mxu0 0
    %958 = vmatprep.subr.bf16.mxu0 0
    %959 = vmatpush1.bf16.msra.mxu0 0
    %960 = vmatprep.subr.bf16.mxu0 0
    %961 = vmatpush1.bf16.msra.mxu0 0
    %962 = vmatprep.subr.bf16.mxu0 0
    %963 = vmatpush1.bf16.msra.mxu0 0
    %964 = vmatprep.subr.bf16.mxu0 0
    %965 = vmatpush1.bf16.msra.mxu0 0
    %966 = vmatprep.subr.bf16.mxu0 0
    %967 = vmatpush1.bf16.msra.mxu0 0
    %968 = vmatprep.subr.bf16.mxu0 0
    %969 = vmatpush1.bf16.msra.mxu0 0
    %970 = vmatprep.subr.bf16.mxu0 0
    %971 = vmatpush1.bf16.msra.mxu0 0
    %972 = vmatprep.mubr.bf16.mxu0 0
    %973 = vmatmul.mubr.bf16.gmra.mrb[0].mxu0 %v935
    %v974 = vpop.f32.mrb[0].mxu0
    %v975 = vadd.f32 0.0, %v974
    %v976 = vpop.f32.mrb[0].mxu0
    %v977 = vpop.f32.mrb[0].mxu0
    %v978 = vpop.f32.mrb[0].mxu0
    %979 = vdwg.mxu0
    %980 = vrot.lane.b32.xlu0 %v286, 64
    %v981 = vpop.permute.xlu0 %980
    %v983 = vsel %vm293, %v783, 0
    %v986 = vsel %vm792, %v981, 0
    %988 = vmatprep.subr.bf16.mxu0 0
    %989 = vmatpush1.bf16.msra.mxu0 %v986
    %990 = vmatprep.subr.bf16.mxu0 0
    %991 = vmatpush1.bf16.msra.mxu0 0
    %992 = vmatprep.subr.bf16.mxu0 0
    %993 = vmatpush1.bf16.msra.mxu0 0
    %994 = vmatprep.subr.bf16.mxu0 0
    %995 = vmatpush1.bf16.msra.mxu0 0
    %996 = vmatprep.subr.bf16.mxu0 0
    %997 = vmatpush1.bf16.msra.mxu0 0
    %998 = vmatprep.subr.bf16.mxu0 0
    %999 = vmatpush1.bf16.msra.mxu0 0
    %1000 = vmatprep.subr.bf16.mxu0 0
    %1001 = vmatpush1.bf16.msra.mxu0 0
    %1002 = vmatprep.subr.bf16.mxu0 0
    %1003 = vmatpush1.bf16.msra.mxu0 0
    %1004 = vmatprep.subr.bf16.mxu0 0
    %1005 = vmatpush1.bf16.msra.mxu0 0
    %1006 = vmatprep.subr.bf16.mxu0 0
    %1007 = vmatpush1.bf16.msra.mxu0 0
    %1008 = vmatprep.subr.bf16.mxu0 0
    %1009 = vmatpush1.bf16.msra.mxu0 0
    %1010 = vmatprep.subr.bf16.mxu0 0
    %1011 = vmatpush1.bf16.msra.mxu0 0
    %1012 = vmatprep.subr.bf16.mxu0 0
    %1013 = vmatpush1.bf16.msra.mxu0 0
    %1014 = vmatprep.subr.bf16.mxu0 0
    %1015 = vmatpush1.bf16.msra.mxu0 0
    %1016 = vmatprep.subr.bf16.mxu0 0
    %1017 = vmatpush1.bf16.msra.mxu0 0
    %1018 = vmatprep.subr.bf16.mxu0 0
    %1019 = vmatpush1.bf16.msra.mxu0 0
    %1020 = vmatprep.mubr.bf16.mxu0 0
    %1021 = vmatmul.mubr.bf16.gmra.mrb[0].mxu0 %v983
    %v1022 = vpop.f32.mrb[0].mxu0
    %v1023 = vadd.f32 0.0, %v1022
    %v1024 = vpop.f32.mrb[0].mxu0
    %v1025 = vpop.f32.mrb[0].mxu0
    %v1026 = vpop.f32.mrb[0].mxu0
    %1027 = vdwg.mxu0
    %1028 = vrot.lane.b32.xlu0 %v287, 64
    %v1029 = vpop.permute.xlu0 %1028
    %v1031 = vsel %vm293, %v784, 0
    %v1034 = vsel %vm792, %v1029, 0
    %1036 = vmatprep.subr.bf16.mxu0 0
    %1037 = vmatpush1.bf16.msra.mxu0 %v1034
    %1038 = vmatprep.subr.bf16.mxu0 0
    %1039 = vmatpush1.bf16.msra.mxu0 0
    %1040 = vmatprep.subr.bf16.mxu0 0
    %1041 = vmatpush1.bf16.msra.mxu0 0
    %1042 = vmatprep.subr.bf16.mxu0 0
    %1043 = vmatpush1.bf16.msra.mxu0 0
    %1044 = vmatprep.subr.bf16.mxu0 0
    %1045 = vmatpush1.bf16.msra.mxu0 0
    %1046 = vmatprep.subr.bf16.mxu0 0
    %1047 = vmatpush1.bf16.msra.mxu0 0
    %1048 = vmatprep.subr.bf16.mxu0 0
    %1049 = vmatpush1.bf16.msra.mxu0 0
    %1050 = vmatprep.subr.bf16.mxu0 0
    %1051 = vmatpush1.bf16.msra.mxu0 0
    %1052 = vmatprep.subr.bf16.mxu0 0
    %1053 = vmatpush1.bf16.msra.mxu0 0
    %1054 = vmatprep.subr.bf16.mxu0 0
    %1055 = vmatpush1.bf16.msra.mxu0 0
    %1056 = vmatprep.subr.bf16.mxu0 0
    %1057 = vmatpush1.bf16.msra.mxu0 0
    %1058 = vmatprep.subr.bf16.mxu0 0
    %1059 = vmatpush1.bf16.msra.mxu0 0
    %1060 = vmatprep.subr.bf16.mxu0 0
    %1061 = vmatpush1.bf16.msra.mxu0 0
    %1062 = vmatprep.subr.bf16.mxu0 0
    %1063 = vmatpush1.bf16.msra.mxu0 0
    %1064 = vmatprep.subr.bf16.mxu0 0
    %1065 = vmatpush1.bf16.msra.mxu0 0
    %1066 = vmatprep.subr.bf16.mxu0 0
    %1067 = vmatpush1.bf16.msra.mxu0 0
    %1068 = vmatprep.mubr.bf16.mxu0 0
    %1069 = vmatmul.mubr.bf16.gmra.mrb[0].mxu0 %v1031
    %v1070 = vpop.f32.mrb[0].mxu0
    %v1071 = vadd.f32 0.0, %v1070
    %v1072 = vpop.f32.mrb[0].mxu0
    %v1073 = vpop.f32.mrb[0].mxu0
    %v1074 = vpop.f32.mrb[0].mxu0
    %1075 = vdwg.mxu0
    %1076 = vrot.lane.b32.xlu0 %v288, 64
    %v1077 = vpop.permute.xlu0 %1076
    %v1079 = vsel %vm293, %v785, 0
    %v1082 = vsel %vm792, %v1077, 0
    %1084 = vmatprep.subr.bf16.mxu0 0
    %1085 = vmatpush1.bf16.msra.mxu0 %v1082
    %1086 = vmatprep.subr.bf16.mxu0 0
    %1087 = vmatpush1.bf16.msra.mxu0 0
    %1088 = vmatprep.subr.bf16.mxu0 0
    %1089 = vmatpush1.bf16.msra.mxu0 0
    %1090 = vmatprep.subr.bf16.mxu0 0
    %1091 = vmatpush1.bf16.msra.mxu0 0
    %1092 = vmatprep.subr.bf16.mxu0 0
    %1093 = vmatpush1.bf16.msra.mxu0 0
    %1094 = vmatprep.subr.bf16.mxu0 0
    %1095 = vmatpush1.bf16.msra.mxu0 0
    %1096 = vmatprep.subr.bf16.mxu0 0
    %1097 = vmatpush1.bf16.msra.mxu0 0
    %1098 = vmatprep.subr.bf16.mxu0 0
    %1099 = vmatpush1.bf16.msra.mxu0 0
    %1100 = vmatprep.subr.bf16.mxu0 0
    %1101 = vmatpush1.bf16.msra.mxu0 0
    %1102 = vmatprep.subr.bf16.mxu0 0
    %1103 = vmatpush1.bf16.msra.mxu0 0
    %1104 = vmatprep.subr.bf16.mxu0 0
    %1105 = vmatpush1.bf16.msra.mxu0 0
    %1106 = vmatprep.subr.bf16.mxu0 0
    %1107 = vmatpush1.bf16.msra.mxu0 0
    %1108 = vmatprep.subr.bf16.mxu0 0
    %1109 = vmatpush1.bf16.msra.mxu0 0
    %1110 = vmatprep.subr.bf16.mxu0 0
    %1111 = vmatpush1.bf16.msra.mxu0 0
    %1112 = vmatprep.subr.bf16.mxu0 0
    %1113 = vmatpush1.bf16.msra.mxu0 0
    %1114 = vmatprep.subr.bf16.mxu0 0
    %1115 = vmatpush1.bf16.msra.mxu0 0
    %1116 = vmatprep.mubr.bf16.mxu0 0
    %1117 = vmatmul.mubr.bf16.gmra.mrb[0].mxu0 %v1079
    %v1118 = vpop.f32.mrb[0].mxu0
    %v1119 = vadd.f32 0.0, %v1118
    %v1120 = vpop.f32.mrb[0].mxu0
    %v1121 = vpop.f32.mrb[0].mxu0
    %v1122 = vpop.f32.mrb[0].mxu0
    %1123 = vdwg.mxu0
    %1124 = vrot.lane.b32.xlu0 %v289, 64
    %v1125 = vpop.permute.xlu0 %1124
    %v1127 = vsel %vm293, %v786, 0
    %v1130 = vsel %vm792, %v1125, 0
    %1132 = vmatprep.subr.bf16.mxu0 0
    %1133 = vmatpush1.bf16.msra.mxu0 %v1130
    %1134 = vmatprep.subr.bf16.mxu0 0
    %1135 = vmatpush1.bf16.msra.mxu0 0
    %1136 = vmatprep.subr.bf16.mxu0 0
    %1137 = vmatpush1.bf16.msra.mxu0 0
    %1138 = vmatprep.subr.bf16.mxu0 0
    %1139 = vmatpush1.bf16.msra.mxu0 0
    %1140 = vmatprep.subr.bf16.mxu0 0
    %1141 = vmatpush1.bf16.msra.mxu0 0
    %1142 = vmatprep.subr.bf16.mxu0 0
    %1143 = vmatpush1.bf16.msra.mxu0 0
    %1144 = vmatprep.subr.bf16.mxu0 0
    %1145 = vmatpush1.bf16.msra.mxu0 0
    %1146 = vmatprep.subr.bf16.mxu0 0
    %1147 = vmatpush1.bf16.msra.mxu0 0
    %1148 = vmatprep.subr.bf16.mxu0 0
    %1149 = vmatpush1.bf16.msra.mxu0 0
    %1150 = vmatprep.subr.bf16.mxu0 0
    %1151 = vmatpush1.bf16.msra.mxu0 0
    %1152 = vmatprep.subr.bf16.mxu0 0
    %1153 = vmatpush1.bf16.msra.mxu0 0
    %1154 = vmatprep.subr.bf16.mxu0 0
    %1155 = vmatpush1.bf16.msra.mxu0 0
    %1156 = vmatprep.subr.bf16.mxu0 0
    %1157 = vmatpush1.bf16.msra.mxu0 0
    %1158 = vmatprep.subr.bf16.mxu0 0
    %1159 = vmatpush1.bf16.msra.mxu0 0
    %1160 = vmatprep.subr.bf16.mxu0 0
    %1161 = vmatpush1.bf16.msra.mxu0 0
    %1162 = vmatprep.subr.bf16.mxu0 0
    %1163 = vmatpush1.bf16.msra.mxu0 0
    %1164 = vmatprep.mubr.bf16.mxu0 0
    %1165 = vmatmul.mubr.bf16.gmra.mrb[0].mxu0 %v1127
    %v1166 = vpop.f32.mrb[0].mxu0
    %v1167 = vadd.f32 0.0, %v1166
    %v1168 = vpop.f32.mrb[0].mxu0
    %v1169 = vpop.f32.mrb[0].mxu0
    %v1170 = vpop.f32.mrb[0].mxu0
    %1171 = vdwg.mxu0
    %v1172 = vmul.f32 %v831, %v771
    %v1173 = vmul.f32 %v879, %v772
    %v1174 = vmul.f32 %v927, %v773
    %v1175 = vmul.f32 %v975, %v774
    %v1176 = vmul.f32 %v1023, %v775
    %v1177 = vmul.f32 %v1071, %v776
    %v1178 = vmul.f32 %v1119, %v777
    %v1179 = vmul.f32 %v1167, %v778
    %1182 = vrot.lane.b32.xlu0 %v1174, 8
    %v1183 = vpop.permute.xlu0 %1182
    %1184 = vrot.lane.b32.xlu0 %v1175, 8
    %v1185 = vpop.permute.xlu0 %1184
    %1190 = vrot.lane.b32.xlu0 %v1176, 16
    %v1191 = vpop.permute.xlu0 %1190
    %1192 = vrot.lane.b32.xlu0 %v1177, 16
    %v1193 = vpop.permute.xlu0 %1192
    %1198 = vrot.lane.b32.xlu0 %v1178, 24
    %v1199 = vpop.permute.xlu0 %1198
    %1200 = vrot.lane.b32.xlu0 %v1179, 24
    %v1201 = vpop.permute.xlu0 %1200
    %v1204 = vsel %vm293, %v1172, %v1183
    %v1205 = vsel %vm293, %v1173, %v1185
    %vm1206 = vcmask 130048
    %v1207 = vsel %vm1206, %v1204, %v1191
    %v1208 = vsel %vm1206, %v1205, %v1193
    %vm1209 = vcmask 195584
    %v1210 = vsel %vm1209, %v1207, %v1199
    %v1211 = vsel %vm1209, %v1208, %v1201
    %v1212 = vpack.c.bf16 %v1211, %v1210
    %v1213 = vlaneseq
    %v1214 = vshrl.u32 %v1213, 7
    %v1215 = vsub.s32 1, %v1214
    %v1216 = vrot.slane %v160, %v1215
    %1217 = vrot.lane.b32.xlu0 %v214, 32
    %v1218 = vpop.permute.xlu0 %1217
    %1219 = vrot.lane.b32.xlu0 %v215, 32
    %v1220 = vpop.permute.xlu0 %1219
    %v1224 = vsel %vm161, %v1212, 0
    %1226 = vmatprep.subr.bf16.mxu0 0
    %1227 = vmatpush1.bf16.msra.mxu0 %v1218
    %1228 = vmatprep.subr.bf16.mxu0 0
    %1229 = vmatpush1.bf16.msra.mxu0 %v1220
    %1230 = vmatprep.subr.bf16.mxu0 0
    %1231 = vmatpush1.bf16.msra.mxu0 0
    %1232 = vmatprep.subr.bf16.mxu0 0
    %1233 = vmatpush1.bf16.msra.mxu0 0
    %1234 = vmatprep.subr.bf16.mxu0 0
    %1235 = vmatpush1.bf16.msra.mxu0 0
    %1236 = vmatprep.subr.bf16.mxu0 0
    %1237 = vmatpush1.bf16.msra.mxu0 0
    %1238 = vmatprep.subr.bf16.mxu0 0
    %1239 = vmatpush1.bf16.msra.mxu0 0
    %1240 = vmatprep.subr.bf16.mxu0 0
    %1241 = vmatpush1.bf16.msra.mxu0 0
    %1242 = vmatprep.subr.bf16.mxu0 0
    %1243 = vmatpush1.bf16.msra.mxu0 0
    %1244 = vmatprep.subr.bf16.mxu0 0
    %1245 = vmatpush1.bf16.msra.mxu0 0
    %1246 = vmatprep.subr.bf16.mxu0 0
    %1247 = vmatpush1.bf16.msra.mxu0 0
    %1248 = vmatprep.subr.bf16.mxu0 0
    %1249 = vmatpush1.bf16.msra.mxu0 0
    %1250 = vmatprep.subr.bf16.mxu0 0
    %1251 = vmatpush1.bf16.msra.mxu0 0
    %1252 = vmatprep.subr.bf16.mxu0 0
    %1253 = vmatpush1.bf16.msra.mxu0 0
    %1254 = vmatprep.subr.bf16.mxu0 0
    %1255 = vmatpush1.bf16.msra.mxu0 0
    %1256 = vmatprep.subr.bf16.mxu0 0
    %1257 = vmatpush1.bf16.msra.mxu0 0
    %1258 = vmatprep.mubr.bf16.mxu0 0
    %1259 = vmatmul.mubr.bf16.gmra.mrb[0].mxu0 %v1224
    %v1260 = vpop.f32.mrb[0].mxu0
    %v1261 = vadd.f32 %v1216, %v1260
    %v1262 = vpop.f32.mrb[0].mxu0
    %v1263 = vpop.f32.mrb[0].mxu0
    %v1264 = vadd.f32 %v1216, %v1263
    %v1265 = vpop.f32.mrb[0].mxu0
    %1266 = vdwg.mxu0
    %v1267 = vadd.f32 %v124, %v1261
    %v1268 = vadd.f32 %v129, %v1264
    %v1269 = vsel %vm161, %v1267, 0.0
    %1270 = vadd.xlane.f32.xlu0 %v1269
    %v1271 = vpop.xlane.xlu0 %1270
    %v1272 = vsel %vm161, %v1268, 0.0
    %1273 = vadd.xlane.f32.xlu0 %v1272
    %v1274 = vpop.xlane.xlu0 %1273
    %v1275 = vmul.f32 %v1271, %v168
    %v1276 = vmul.f32 %v1274, %v168
    %v1277 = vsub.f32 %v1267, %v1275
    %v1278 = vsub.f32 %v1268, %v1276
    %v1279 = vmul.f32 %v1277, %v1277
    %v1280 = vmul.f32 %v1278, %v1278
    %v1281 = vsel %vm161, %v1279, 0.0
    %1282 = vadd.xlane.f32.xlu0 %v1281
    %v1283 = vpop.xlane.xlu0 %1282
    %v1284 = vsel %vm161, %v1280, 0.0
    %1285 = vadd.xlane.f32.xlu0 %v1284
    %v1286 = vpop.xlane.xlu0 %1285
    %v1287 = vmul.f32 %v1283, %v168
    %v1288 = vmul.f32 %v1286, %v168
    %v1289 = vadd.f32 %v1287, 1e-05
    %v1290 = vadd.f32 %v1288, 1e-05
    %v1291 = vrsqrt.pop %v1289
    %v1292 = vrsqrt.pop %v1290
    %v1293 = vmul.f32 %v1277, %v1291
    %v1294 = vmul.f32 %v1278, %v1292
    %v1295 = vlaneseq
    %v1296 = vshrl.u32 %v1295, 7
    %v1297 = vsub.s32 0, %v1296
    %v1298 = vrot.slane %v138, %v1297
    %v1299 = vmul.f32 %v1293, %v1298
    %v1300 = vmul.f32 %v1294, %v1298
    %v1301 = vlaneseq
    %v1302 = vshrl.u32 %v1301, 7
    %v1303 = vsub.s32 0, %v1302
    %v1304 = vrot.slane %v139, %v1303
    %v1305 = vadd.f32 %v1299, %v1304
    %v1306 = vadd.f32 %v1300, %v1304
    %v1307 = vpack.c.bf16 %v1306, %v1305
    %v1308 = vlaneseq
    %v1309 = vshrl.u32 %v1308, 7
    %v1310 = vsub.s32 2, %v1309
    %v1311 = vrot.slane %v160, %v1310
    %v1312 = vunpack.c.h.b16 %v140
    %v1313 = vunpack.c.h.b16 %v141
    %v1314 = vunpack.c.h.b16 %v142
    %v1315 = vunpack.c.h.b16 %v143
    %v1316 = vpack.c.b16 %v1313, %v1312
    %v1317 = vpack.c.b16 %v1315, %v1314
    %v1321 = vsel %vm161, %v1307, 0
    %1323 = vmatprep.subr.bf16.mxu0 0
    %1324 = vmatpush1.bf16.msra.mxu0 %v1316
    %1325 = vmatprep.subr.bf16.mxu0 0
    %1326 = vmatpush1.bf16.msra.mxu0 %v1317
    %1327 = vmatprep.subr.bf16.mxu0 0
    %1328 = vmatpush1.bf16.msra.mxu0 0
    %1329 = vmatprep.subr.bf16.mxu0 0
    %1330 = vmatpush1.bf16.msra.mxu0 0
    %1331 = vmatprep.subr.bf16.mxu0 0
    %1332 = vmatpush1.bf16.msra.mxu0 0
    %1333 = vmatprep.subr.bf16.mxu0 0
    %1334 = vmatpush1.bf16.msra.mxu0 0
    %1335 = vmatprep.subr.bf16.mxu0 0
    %1336 = vmatpush1.bf16.msra.mxu0 0
    %1337 = vmatprep.subr.bf16.mxu0 0
    %1338 = vmatpush1.bf16.msra.mxu0 0
    %1339 = vmatprep.subr.bf16.mxu0 0
    %1340 = vmatpush1.bf16.msra.mxu0 0
    %1341 = vmatprep.subr.bf16.mxu0 0
    %1342 = vmatpush1.bf16.msra.mxu0 0
    %1343 = vmatprep.subr.bf16.mxu0 0
    %1344 = vmatpush1.bf16.msra.mxu0 0
    %1345 = vmatprep.subr.bf16.mxu0 0
    %1346 = vmatpush1.bf16.msra.mxu0 0
    %1347 = vmatprep.subr.bf16.mxu0 0
    %1348 = vmatpush1.bf16.msra.mxu0 0
    %1349 = vmatprep.subr.bf16.mxu0 0
    %1350 = vmatpush1.bf16.msra.mxu0 0
    %1351 = vmatprep.subr.bf16.mxu0 0
    %1352 = vmatpush1.bf16.msra.mxu0 0
    %1353 = vmatprep.subr.bf16.mxu0 0
    %1354 = vmatpush1.bf16.msra.mxu0 0
    %1355 = vmatprep.mubr.bf16.mxu0 0
    %1356 = vmatmul.mubr.bf16.gmra.mrb[0].mxu0 %v1321
    %v1357 = vpop.f32.mrb[0].mxu0
    %v1358 = vadd.f32 %v1311, %v1357
    %v1359 = vpop.f32.mrb[0].mxu0
    %v1360 = vpop.f32.mrb[0].mxu0
    %v1361 = vadd.f32 %v1311, %v1360
    %v1362 = vpop.f32.mrb[0].mxu0
    %1363 = vdwg.mxu0
    %v1364 = vmul.f32 %v1358, 0.5
    %v1365 = vmul.f32 %v1361, 0.5
    %v1366 = vmul.f32 %v1358, 0.044715
    %v1367 = vmul.f32 %v1361, 0.044715
    %v1368 = vmul.f32 %v1366, %v1358
    %v1369 = vmul.f32 %v1367, %v1361
    %v1370 = vmul.f32 %v1368, %v1358
    %v1371 = vmul.f32 %v1369, %v1361
    %v1372 = vadd.f32 %v1358, %v1370
    %v1373 = vadd.f32 %v1361, %v1371
    %v1374 = vmul.f32 %v1372, 0.7978846
    %v1375 = vmul.f32 %v1373, 0.7978846
    %v1376 = vtanh.pop %v1374
    %v1377 = vtanh.pop %v1375
    %v1378 = vadd.f32 %v1376, 1.0
    %v1379 = vadd.f32 %v1377, 1.0
    %v1380 = vmul.f32 %v1364, %v1378
    %v1381 = vmul.f32 %v1365, %v1379
    %v1382 = vpack.c.bf16 %v1381, %v1380
    %v1383 = vlaneseq
    %v1384 = vshrl.u32 %v1383, 7
    %v1385 = vsub.s32 3, %v1384
    %v1386 = vrot.slane %v160, %v1385
    %v1403 = vunpack.c.l.b16 %v144
    %v1404 = vunpack.c.l.b16 %v145
    %v1405 = vunpack.c.l.b16 %v146
    %v1406 = vunpack.c.l.b16 %v147
    %v1407 = vunpack.c.l.b16 %v148
    %v1408 = vunpack.c.l.b16 %v149
    %v1409 = vunpack.c.l.b16 %v150
    %v1410 = vunpack.c.l.b16 %v151
    %v1411 = vunpack.c.l.b16 %v152
    %v1412 = vunpack.c.l.b16 %v153
    %v1413 = vunpack.c.l.b16 %v154
    %v1414 = vunpack.c.l.b16 %v155
    %v1415 = vunpack.c.l.b16 %v156
    %v1416 = vunpack.c.l.b16 %v157
    %v1417 = vunpack.c.l.b16 %v158
    %v1418 = vunpack.c.l.b16 %v159
    %v1419 = vpack.c.b16 %v1404, %v1403
    %v1420 = vpack.c.b16 %v1406, %v1405
    %v1421 = vpack.c.b16 %v1408, %v1407
    %v1422 = vpack.c.b16 %v1410, %v1409
    %v1423 = vpack.c.b16 %v1412, %v1411
    %v1424 = vpack.c.b16 %v1414, %v1413
    %v1425 = vpack.c.b16 %v1416, %v1415
    %v1426 = vpack.c.b16 %v1418, %v1417
    %1435 = vmatprep.subr.bf16.mxu0 0
    %1436 = vmatpush1.bf16.msra.mxu0 %v1419
    %1437 = vmatprep.subr.bf16.mxu0 0
    %1438 = vmatpush1.bf16.msra.mxu0 %v1420
    %1439 = vmatprep.subr.bf16.mxu0 0
    %1440 = vmatpush1.bf16.msra.mxu0 %v1421
    %1441 = vmatprep.subr.bf16.mxu0 0
    %1442 = vmatpush1.bf16.msra.mxu0 %v1422
    %1443 = vmatprep.subr.bf16.mxu0 0
    %1444 = vmatpush1.bf16.msra.mxu0 %v1423
    %1445 = vmatprep.subr.bf16.mxu0 0
    %1446 = vmatpush1.bf16.msra.mxu0 %v1424
    %1447 = vmatprep.subr.bf16.mxu0 0
    %1448 = vmatpush1.bf16.msra.mxu0 %v1425
    %1449 = vmatprep.subr.bf16.mxu0 0
    %1450 = vmatpush1.bf16.msra.mxu0 %v1426
    %1451 = vmatprep.subr.bf16.mxu0 0
    %1452 = vmatpush1.bf16.msra.mxu0 0
    %1453 = vmatprep.subr.bf16.mxu0 0
    %1454 = vmatpush1.bf16.msra.mxu0 0
    %1455 = vmatprep.subr.bf16.mxu0 0
    %1456 = vmatpush1.bf16.msra.mxu0 0
    %1457 = vmatprep.subr.bf16.mxu0 0
    %1458 = vmatpush1.bf16.msra.mxu0 0
    %1459 = vmatprep.subr.bf16.mxu0 0
    %1460 = vmatpush1.bf16.msra.mxu0 0
    %1461 = vmatprep.subr.bf16.mxu0 0
    %1462 = vmatpush1.bf16.msra.mxu0 0
    %1463 = vmatprep.subr.bf16.mxu0 0
    %1464 = vmatpush1.bf16.msra.mxu0 0
    %1465 = vmatprep.subr.bf16.mxu0 0
    %1466 = vmatpush1.bf16.msra.mxu0 0
    %1467 = vmatprep.mubr.bf16.mxu0 0
    %1468 = vmatmul.mubr.bf16.gmra.mrb[0].mxu0 %v1382
    %v1469 = vpop.f32.mrb[0].mxu0
    %v1470 = vadd.f32 %v1386, %v1469
    %v1471 = vpop.f32.mrb[0].mxu0
    %v1472 = vpop.f32.mrb[0].mxu0
    %v1473 = vadd.f32 %v1386, %v1472
    %v1474 = vpop.f32.mrb[0].mxu0
    %1475 = vdwg.mxu0
    %v1476 = vadd.f32 %v1267, %v1470
    %v1477 = vadd.f32 %v1268, %v1473
    %v1478 = vld [vmem:[%s2 + $0x4] sm:$0x1]
    %v1479 = vld [vmem:[%s2 + $0x5] sm:$0x1]
    %v1480 = vld [vmem:[%s2 + $0x6] sm:$0x1]
    %v1481 = vld [vmem:[%s2 + $0x7] sm:$0x1]
    %s1482 = scalar_lea.vmem %s3, 32
    %v1483 = vld [vmem:[%s1482] sm:$0xff]
    %v1484 = vld [vmem:[%s1482 + $0x8] sm:$0xff]
    %v1485 = vld [vmem:[%s1482 + $0x10] sm:$0xff]
    %v1486 = vld [vmem:[%s1482 + $0x18] sm:$0xff]
    %s1487 = scalar_lea.vmem %s4, 64
    %v1488 = vld [vmem:[%s1487] sm:$0xf]
    %v1489 = vld [vmem:[%s1487 + $0x4] sm:$0xf]
    %v1490 = vld [vmem:[%s1487 + $0x8] sm:$0xf]
    %v1491 = vld [vmem:[%s1487 + $0xc] sm:$0xf]
    %v1492 = vld [vmem:[%s1487 + $0x10] sm:$0xf]
    %v1493 = vld [vmem:[%s1487 + $0x14] sm:$0xf]
    %v1494 = vld [vmem:[%s1487 + $0x18] sm:$0xf]
    %v1495 = vld [vmem:[%s1487 + $0x1c] sm:$0xf]
    %v1496 = vld [vmem:[%s1487 + $0x20] sm:$0xf]
    %v1497 = vld [vmem:[%s1487 + $0x24] sm:$0xf]
    %v1498 = vld [vmem:[%s1487 + $0x28] sm:$0xf]
    %v1499 = vld [vmem:[%s1487 + $0x2c] sm:$0xf]
    %v1500 = vld [vmem:[%s1487 + $0x30] sm:$0xf]
    %v1501 = vld [vmem:[%s1487 + $0x34] sm:$0xf]
    %v1502 = vld [vmem:[%s1487 + $0x38] sm:$0xf]
    %v1503 = vld [vmem:[%s1487 + $0x3c] sm:$0xf]
    %s1504 = scalar_lea.vmem %s5, 4
    %v1505 = vld [vmem:[%s1504] sm:$0xf]
    %v1506 = vsel %vm161, %v1476, 0.0
    %1507 = vadd.xlane.f32.xlu0 %v1506
    %v1508 = vpop.xlane.xlu0 %1507
    %v1509 = vsel %vm161, %v1477, 0.0
    %1510 = vadd.xlane.f32.xlu0 %v1509
    %v1511 = vpop.xlane.xlu0 %1510
    %v1512 = vmul.f32 %v1508, %v168
    %v1513 = vmul.f32 %v1511, %v168
    %v1514 = vsub.f32 %v1476, %v1512
    %v1515 = vsub.f32 %v1477, %v1513
    %v1516 = vmul.f32 %v1514, %v1514
    %v1517 = vmul.f32 %v1515, %v1515
    %v1518 = vsel %vm161, %v1516, 0.0
    %1519 = vadd.xlane.f32.xlu0 %v1518
    %v1520 = vpop.xlane.xlu0 %1519
    %v1521 = vsel %vm161, %v1517, 0.0
    %1522 = vadd.xlane.f32.xlu0 %v1521
    %v1523 = vpop.xlane.xlu0 %1522
    %v1524 = vmul.f32 %v1520, %v168
    %v1525 = vmul.f32 %v1523, %v168
    %v1526 = vadd.f32 %v1524, 1e-05
    %v1527 = vadd.f32 %v1525, 1e-05
    %v1528 = vrsqrt.pop %v1526
    %v1529 = vrsqrt.pop %v1527
    %v1530 = vmul.f32 %v1514, %v1528
    %v1531 = vmul.f32 %v1515, %v1529
    %v1532 = vlaneseq
    %v1533 = vshrl.u32 %v1532, 7
    %v1534 = vsub.s32 0, %v1533
    %v1535 = vrot.slane %v1478, %v1534
    %v1536 = vmul.f32 %v1530, %v1535
    %v1537 = vmul.f32 %v1531, %v1535
    %v1538 = vlaneseq
    %v1539 = vshrl.u32 %v1538, 7
    %v1540 = vsub.s32 0, %v1539
    %v1541 = vrot.slane %v1479, %v1540
    %v1542 = vadd.f32 %v1536, %v1541
    %v1543 = vadd.f32 %v1537, %v1541
    %v1544 = vpack.c.bf16 %v1543, %v1542
    %v1545 = vlaneseq
    %v1546 = vshrl.u32 %v1545, 7
    %v1547 = vsub.s32 0, %v1546
    %v1548 = vrot.slane %v1505, %v1547
    %v1553 = vunpack.c.l.b16 %v1483
    %v1554 = vunpack.c.l.b16 %v1484
    %v1555 = vunpack.c.l.b16 %v1485
    %v1556 = vunpack.c.l.b16 %v1486
    %v1557 = vpack.c.b16 %v1554, %v1553
    %v1558 = vpack.c.b16 %v1556, %v1555
    %v1562 = vsel %vm161, %v1544, 0
    %1564 = vmatprep.subr.bf16.mxu0 0
    %1565 = vmatpush1.bf16.msra.mxu0 %v1557
    %1566 = vmatprep.subr.bf16.mxu0 0
    %1567 = vmatpush1.bf16.msra.mxu0 %v1558
    %1568 = vmatprep.subr.bf16.mxu0 0
    %1569 = vmatpush1.bf16.msra.mxu0 0
    %1570 = vmatprep.subr.bf16.mxu0 0
    %1571 = vmatpush1.bf16.msra.mxu0 0
    %1572 = vmatprep.subr.bf16.mxu0 0
    %1573 = vmatpush1.bf16.msra.mxu0 0
    %1574 = vmatprep.subr.bf16.mxu0 0
    %1575 = vmatpush1.bf16.msra.mxu0 0
    %1576 = vmatprep.subr.bf16.mxu0 0
    %1577 = vmatpush1.bf16.msra.mxu0 0
    %1578 = vmatprep.subr.bf16.mxu0 0
    %1579 = vmatpush1.bf16.msra.mxu0 0
    %1580 = vmatprep.subr.bf16.mxu0 0
    %1581 = vmatpush1.bf16.msra.mxu0 0
    %1582 = vmatprep.subr.bf16.mxu0 0
    %1583 = vmatpush1.bf16.msra.mxu0 0
    %1584 = vmatprep.subr.bf16.mxu0 0
    %1585 = vmatpush1.bf16.msra.mxu0 0
    %1586 = vmatprep.subr.bf16.mxu0 0
    %1587 = vmatpush1.bf16.msra.mxu0 0
    %1588 = vmatprep.subr.bf16.mxu0 0
    %1589 = vmatpush1.bf16.msra.mxu0 0
    %1590 = vmatprep.subr.bf16.mxu0 0
    %1591 = vmatpush1.bf16.msra.mxu0 0
    %1592 = vmatprep.subr.bf16.mxu0 0
    %1593 = vmatpush1.bf16.msra.mxu0 0
    %1594 = vmatprep.subr.bf16.mxu0 0
    %1595 = vmatpush1.bf16.msra.mxu0 0
    %1596 = vmatprep.mubr.bf16.mxu0 0
    %1597 = vmatmul.mubr.bf16.gmra.mrb[0].mxu0 %v1562
    %v1598 = vpop.f32.mrb[0].mxu0
    %v1599 = vadd.f32 %v1548, %v1598
    %v1600 = vpop.f32.mrb[0].mxu0
    %v1601 = vpop.f32.mrb[0].mxu0
    %v1602 = vadd.f32 %v1548, %v1601
    %v1603 = vpop.f32.mrb[0].mxu0
    %1604 = vdwg.mxu0
    %1607 = vrot.lane.b32.xlu0 %v1599, 120
    %v1608 = vpop.permute.xlu0 %1607
    %1609 = vrot.lane.b32.xlu0 %v1602, 120
    %v1610 = vpop.permute.xlu0 %1609
    %1613 = vrot.lane.b32.xlu0 %v1599, 112
    %v1614 = vpop.permute.xlu0 %1613
    %1615 = vrot.lane.b32.xlu0 %v1602, 112
    %v1616 = vpop.permute.xlu0 %1615
    %1619 = vrot.lane.b32.xlu0 %v1599, 104
    %v1620 = vpop.permute.xlu0 %1619
    %1621 = vrot.lane.b32.xlu0 %v1602, 104
    %v1622 = vpop.permute.xlu0 %1621
    %v1625 = vpack.c.bf16 %v1599, %v1599
    %v1626 = vpack.c.bf16 %v1602, %v1602
    %v1627 = vpack.c.bf16 %v1608, %v1608
    %v1628 = vpack.c.bf16 %v1610, %v1610
    %v1629 = vpack.c.bf16 %v1614, %v1614
    %v1630 = vpack.c.bf16 %v1616, %v1616
    %v1631 = vpack.c.bf16 %v1620, %v1620
    %v1632 = vpack.c.bf16 %v1622, %v1622
    %1634 = vrot.lane.b32.xlu0 %v1625, 96
    %v1635 = vpop.permute.xlu0 %1634
    %v1637 = vsel %vm293, %v1625, 0
    %v1640 = vsel %vm293, %v1635, 0
    %1642 = vmatprep.subr.bf16.mxu0 0
    %1643 = vmatpush1.bf16.xpose.msra.mxu0 %v1640
    %1644 = vmatprep.subr.bf16.mxu0 0
    %1645 = vmatpush1.bf16.xpose.msra.mxu0 0
    %1646 = vmatprep.subr.bf16.mxu0 0
    %1647 = vmatpush1.bf16.xpose.msra.mxu0 0
    %1648 = vmatprep.subr.bf16.mxu0 0
    %1649 = vmatpush1.bf16.xpose.msra.mxu0 0
    %1650 = vmatprep.subr.bf16.mxu0 0
    %1651 = vmatpush1.bf16.xpose.msra.mxu0 0
    %1652 = vmatprep.subr.bf16.mxu0 0
    %1653 = vmatpush1.bf16.xpose.msra.mxu0 0
    %1654 = vmatprep.subr.bf16.mxu0 0
    %1655 = vmatpush1.bf16.xpose.msra.mxu0 0
    %1656 = vmatprep.subr.bf16.mxu0 0
    %1657 = vmatpush1.bf16.xpose.msra.mxu0 0
    %1658 = vmatprep.subr.bf16.mxu0 0
    %1659 = vmatpush1.bf16.xpose.msra.mxu0 0
    %1660 = vmatprep.subr.bf16.mxu0 0
    %1661 = vmatpush1.bf16.xpose.msra.mxu0 0
    %1662 = vmatprep.subr.bf16.mxu0 0
    %1663 = vmatpush1.bf16.xpose.msra.mxu0 0
    %1664 = vmatprep.subr.bf16.mxu0 0
    %1665 = vmatpush1.bf16.xpose.msra.mxu0 0
    %1666 = vmatprep.subr.bf16.mxu0 0
    %1667 = vmatpush1.bf16.xpose.msra.mxu0 0
    %1668 = vmatprep.subr.bf16.mxu0 0
    %1669 = vmatpush1.bf16.xpose.msra.mxu0 0
    %1670 = vmatprep.subr.bf16.mxu0 0
    %1671 = vmatpush1.bf16.xpose.msra.mxu0 0
    %1672 = vmatprep.subr.bf16.mxu0 0
    %1673 = vmatpush1.bf16.xpose.msra.mxu0 0
    %1674 = vmatprep.mubr.bf16.mxu0 0
    %1675 = vmatmul.mubr.bf16.gmra.mrb[0].mxu0 %v1637
    %v1676 = vpop.f32.mrb[0].mxu0
    %v1677 = vadd.f32 0.0, %v1676
    %v1678 = vpop.f32.mrb[0].mxu0
    %v1679 = vpop.f32.mrb[0].mxu0
    %v1680 = vpop.f32.mrb[0].mxu0
    %1681 = vdwg.mxu0
    %1683 = vrot.lane.b32.xlu0 %v1626, 96
    %v1684 = vpop.permute.xlu0 %1683
    %v1686 = vsel %vm293, %v1626, 0
    %v1689 = vsel %vm293, %v1684, 0
    %1691 = vmatprep.subr.bf16.mxu0 0
    %1692 = vmatpush1.bf16.xpose.msra.mxu0 %v1689
    %1693 = vmatprep.subr.bf16.mxu0 0
    %1694 = vmatpush1.bf16.xpose.msra.mxu0 0
    %1695 = vmatprep.subr.bf16.mxu0 0
    %1696 = vmatpush1.bf16.xpose.msra.mxu0 0
    %1697 = vmatprep.subr.bf16.mxu0 0
    %1698 = vmatpush1.bf16.xpose.msra.mxu0 0
    %1699 = vmatprep.subr.bf16.mxu0 0
    %1700 = vmatpush1.bf16.xpose.msra.mxu0 0
    %1701 = vmatprep.subr.bf16.mxu0 0
    %1702 = vmatpush1.bf16.xpose.msra.mxu0 0
    %1703 = vmatprep.subr.bf16.mxu0 0
    %1704 = vmatpush1.bf16.xpose.msra.mxu0 0
    %1705 = vmatprep.subr.bf16.mxu0 0
    %1706 = vmatpush1.bf16.xpose.msra.mxu0 0
    %1707 = vmatprep.subr.bf16.mxu0 0
    %1708 = vmatpush1.bf16.xpose.msra.mxu0 0
    %1709 = vmatprep.subr.bf16.mxu0 0
    %1710 = vmatpush1.bf16.xpose.msra.mxu0 0
    %1711 = vmatprep.subr.bf16.mxu0 0
    %1712 = vmatpush1.bf16.xpose.msra.mxu0 0
    %1713 = vmatprep.subr.bf16.mxu0 0
    %1714 = vmatpush1.bf16.xpose.msra.mxu0 0
    %1715 = vmatprep.subr.bf16.mxu0 0
    %1716 = vmatpush1.bf16.xpose.msra.mxu0 0
    %1717 = vmatprep.subr.bf16.mxu0 0
    %1718 = vmatpush1.bf16.xpose.msra.mxu0 0
    %1719 = vmatprep.subr.bf16.mxu0 0
    %1720 = vmatpush1.bf16.xpose.msra.mxu0 0
    %1721 = vmatprep.subr.bf16.mxu0 0
    %1722 = vmatpush1.bf16.xpose.msra.mxu0 0
    %1723 = vmatprep.mubr.bf16.mxu0 0
    %1724 = vmatmul.mubr.bf16.gmra.mrb[0].mxu0 %v1686
    %v1725 = vpop.f32.mrb[0].mxu0
    %v1726 = vadd.f32 0.0, %v1725
    %v1727 = vpop.f32.mrb[0].mxu0
    %v1728 = vpop.f32.mrb[0].mxu0
    %v1729 = vpop.f32.mrb[0].mxu0
    %1730 = vdwg.mxu0
    %1732 = vrot.lane.b32.xlu0 %v1627, 96
    %v1733 = vpop.permute.xlu0 %1732
    %v1735 = vsel %vm293, %v1627, 0
    %v1738 = vsel %vm293, %v1733, 0
    %1740 = vmatprep.subr.bf16.mxu0 0
    %1741 = vmatpush1.bf16.xpose.msra.mxu0 %v1738
    %1742 = vmatprep.subr.bf16.mxu0 0
    %1743 = vmatpush1.bf16.xpose.msra.mxu0 0
    %1744 = vmatprep.subr.bf16.mxu0 0
    %1745 = vmatpush1.bf16.xpose.msra.mxu0 0
    %1746 = vmatprep.subr.bf16.mxu0 0
    %1747 = vmatpush1.bf16.xpose.msra.mxu0 0
    %1748 = vmatprep.subr.bf16.mxu0 0
    %1749 = vmatpush1.bf16.xpose.msra.mxu0 0
    %1750 = vmatprep.subr.bf16.mxu0 0
    %1751 = vmatpush1.bf16.xpose.msra.mxu0 0
    %1752 = vmatprep.subr.bf16.mxu0 0
    %1753 = vmatpush1.bf16.xpose.msra.mxu0 0
    %1754 = vmatprep.subr.bf16.mxu0 0
    %1755 = vmatpush1.bf16.xpose.msra.mxu0 0
    %1756 = vmatprep.subr.bf16.mxu0 0
    %1757 = vmatpush1.bf16.xpose.msra.mxu0 0
    %1758 = vmatprep.subr.bf16.mxu0 0
    %1759 = vmatpush1.bf16.xpose.msra.mxu0 0
    %1760 = vmatprep.subr.bf16.mxu0 0
    %1761 = vmatpush1.bf16.xpose.msra.mxu0 0
    %1762 = vmatprep.subr.bf16.mxu0 0
    %1763 = vmatpush1.bf16.xpose.msra.mxu0 0
    %1764 = vmatprep.subr.bf16.mxu0 0
    %1765 = vmatpush1.bf16.xpose.msra.mxu0 0
    %1766 = vmatprep.subr.bf16.mxu0 0
    %1767 = vmatpush1.bf16.xpose.msra.mxu0 0
    %1768 = vmatprep.subr.bf16.mxu0 0
    %1769 = vmatpush1.bf16.xpose.msra.mxu0 0
    %1770 = vmatprep.subr.bf16.mxu0 0
    %1771 = vmatpush1.bf16.xpose.msra.mxu0 0
    %1772 = vmatprep.mubr.bf16.mxu0 0
    %1773 = vmatmul.mubr.bf16.gmra.mrb[0].mxu0 %v1735
    %v1774 = vpop.f32.mrb[0].mxu0
    %v1775 = vadd.f32 0.0, %v1774
    %v1776 = vpop.f32.mrb[0].mxu0
    %v1777 = vpop.f32.mrb[0].mxu0
    %v1778 = vpop.f32.mrb[0].mxu0
    %1779 = vdwg.mxu0
    %1781 = vrot.lane.b32.xlu0 %v1628, 96
    %v1782 = vpop.permute.xlu0 %1781
    %v1784 = vsel %vm293, %v1628, 0
    %v1787 = vsel %vm293, %v1782, 0
    %1789 = vmatprep.subr.bf16.mxu0 0
    %1790 = vmatpush1.bf16.xpose.msra.mxu0 %v1787
    %1791 = vmatprep.subr.bf16.mxu0 0
    %1792 = vmatpush1.bf16.xpose.msra.mxu0 0
    %1793 = vmatprep.subr.bf16.mxu0 0
    %1794 = vmatpush1.bf16.xpose.msra.mxu0 0
    %1795 = vmatprep.subr.bf16.mxu0 0
    %1796 = vmatpush1.bf16.xpose.msra.mxu0 0
    %1797 = vmatprep.subr.bf16.mxu0 0
    %1798 = vmatpush1.bf16.xpose.msra.mxu0 0
    %1799 = vmatprep.subr.bf16.mxu0 0
    %1800 = vmatpush1.bf16.xpose.msra.mxu0 0
    %1801 = vmatprep.subr.bf16.mxu0 0
    %1802 = vmatpush1.bf16.xpose.msra.mxu0 0
    %1803 = vmatprep.subr.bf16.mxu0 0
    %1804 = vmatpush1.bf16.xpose.msra.mxu0 0
    %1805 = vmatprep.subr.bf16.mxu0 0
    %1806 = vmatpush1.bf16.xpose.msra.mxu0 0
    %1807 = vmatprep.subr.bf16.mxu0 0
    %1808 = vmatpush1.bf16.xpose.msra.mxu0 0
    %1809 = vmatprep.subr.bf16.mxu0 0
    %1810 = vmatpush1.bf16.xpose.msra.mxu0 0
    %1811 = vmatprep.subr.bf16.mxu0 0
    %1812 = vmatpush1.bf16.xpose.msra.mxu0 0
    %1813 = vmatprep.subr.bf16.mxu0 0
    %1814 = vmatpush1.bf16.xpose.msra.mxu0 0
    %1815 = vmatprep.subr.bf16.mxu0 0
    %1816 = vmatpush1.bf16.xpose.msra.mxu0 0
    %1817 = vmatprep.subr.bf16.mxu0 0
    %1818 = vmatpush1.bf16.xpose.msra.mxu0 0
    %1819 = vmatprep.subr.bf16.mxu0 0
    %1820 = vmatpush1.bf16.xpose.msra.mxu0 0
    %1821 = vmatprep.mubr.bf16.mxu0 0
    %1822 = vmatmul.mubr.bf16.gmra.mrb[0].mxu0 %v1784
    %v1823 = vpop.f32.mrb[0].mxu0
    %v1824 = vadd.f32 0.0, %v1823
    %v1825 = vpop.f32.mrb[0].mxu0
    %v1826 = vpop.f32.mrb[0].mxu0
    %v1827 = vpop.f32.mrb[0].mxu0
    %1828 = vdwg.mxu0
    %1830 = vrot.lane.b32.xlu0 %v1629, 96
    %v1831 = vpop.permute.xlu0 %1830
    %v1833 = vsel %vm293, %v1629, 0
    %v1836 = vsel %vm293, %v1831, 0
    %1838 = vmatprep.subr.bf16.mxu0 0
    %1839 = vmatpush1.bf16.xpose.msra.mxu0 %v1836
    %1840 = vmatprep.subr.bf16.mxu0 0
    %1841 = vmatpush1.bf16.xpose.msra.mxu0 0
    %1842 = vmatprep.subr.bf16.mxu0 0
    %1843 = vmatpush1.bf16.xpose.msra.mxu0 0
    %1844 = vmatprep.subr.bf16.mxu0 0
    %1845 = vmatpush1.bf16.xpose.msra.mxu0 0
    %1846 = vmatprep.subr.bf16.mxu0 0
    %1847 = vmatpush1.bf16.xpose.msra.mxu0 0
    %1848 = vmatprep.subr.bf16.mxu0 0
    %1849 = vmatpush1.bf16.xpose.msra.mxu0 0
    %1850 = vmatprep.subr.bf16.mxu0 0
    %1851 = vmatpush1.bf16.xpose.msra.mxu0 0
    %1852 = vmatprep.subr.bf16.mxu0 0
    %1853 = vmatpush1.bf16.xpose.msra.mxu0 0
    %1854 = vmatprep.subr.bf16.mxu0 0
    %1855 = vmatpush1.bf16.xpose.msra.mxu0 0
    %1856 = vmatprep.subr.bf16.mxu0 0
    %1857 = vmatpush1.bf16.xpose.msra.mxu0 0
    %1858 = vmatprep.subr.bf16.mxu0 0
    %1859 = vmatpush1.bf16.xpose.msra.mxu0 0
    %1860 = vmatprep.subr.bf16.mxu0 0
    %1861 = vmatpush1.bf16.xpose.msra.mxu0 0
    %1862 = vmatprep.subr.bf16.mxu0 0
    %1863 = vmatpush1.bf16.xpose.msra.mxu0 0
    %1864 = vmatprep.subr.bf16.mxu0 0
    %1865 = vmatpush1.bf16.xpose.msra.mxu0 0
    %1866 = vmatprep.subr.bf16.mxu0 0
    %1867 = vmatpush1.bf16.xpose.msra.mxu0 0
    %1868 = vmatprep.subr.bf16.mxu0 0
    %1869 = vmatpush1.bf16.xpose.msra.mxu0 0
    %1870 = vmatprep.mubr.bf16.mxu0 0
    %1871 = vmatmul.mubr.bf16.gmra.mrb[0].mxu0 %v1833
    %v1872 = vpop.f32.mrb[0].mxu0
    %v1873 = vadd.f32 0.0, %v1872
    %v1874 = vpop.f32.mrb[0].mxu0
    %v1875 = vpop.f32.mrb[0].mxu0
    %v1876 = vpop.f32.mrb[0].mxu0
    %1877 = vdwg.mxu0
    %1879 = vrot.lane.b32.xlu0 %v1630, 96
    %v1880 = vpop.permute.xlu0 %1879
    %v1882 = vsel %vm293, %v1630, 0
    %v1885 = vsel %vm293, %v1880, 0
    %1887 = vmatprep.subr.bf16.mxu0 0
    %1888 = vmatpush1.bf16.xpose.msra.mxu0 %v1885
    %1889 = vmatprep.subr.bf16.mxu0 0
    %1890 = vmatpush1.bf16.xpose.msra.mxu0 0
    %1891 = vmatprep.subr.bf16.mxu0 0
    %1892 = vmatpush1.bf16.xpose.msra.mxu0 0
    %1893 = vmatprep.subr.bf16.mxu0 0
    %1894 = vmatpush1.bf16.xpose.msra.mxu0 0
    %1895 = vmatprep.subr.bf16.mxu0 0
    %1896 = vmatpush1.bf16.xpose.msra.mxu0 0
    %1897 = vmatprep.subr.bf16.mxu0 0
    %1898 = vmatpush1.bf16.xpose.msra.mxu0 0
    %1899 = vmatprep.subr.bf16.mxu0 0
    %1900 = vmatpush1.bf16.xpose.msra.mxu0 0
    %1901 = vmatprep.subr.bf16.mxu0 0
    %1902 = vmatpush1.bf16.xpose.msra.mxu0 0
    %1903 = vmatprep.subr.bf16.mxu0 0
    %1904 = vmatpush1.bf16.xpose.msra.mxu0 0
    %1905 = vmatprep.subr.bf16.mxu0 0
    %1906 = vmatpush1.bf16.xpose.msra.mxu0 0
    %1907 = vmatprep.subr.bf16.mxu0 0
    %1908 = vmatpush1.bf16.xpose.msra.mxu0 0
    %1909 = vmatprep.subr.bf16.mxu0 0
    %1910 = vmatpush1.bf16.xpose.msra.mxu0 0
    %1911 = vmatprep.subr.bf16.mxu0 0
    %1912 = vmatpush1.bf16.xpose.msra.mxu0 0
    %1913 = vmatprep.subr.bf16.mxu0 0
    %1914 = vmatpush1.bf16.xpose.msra.mxu0 0
    %1915 = vmatprep.subr.bf16.mxu0 0
    %1916 = vmatpush1.bf16.xpose.msra.mxu0 0
    %1917 = vmatprep.subr.bf16.mxu0 0
    %1918 = vmatpush1.bf16.xpose.msra.mxu0 0
    %1919 = vmatprep.mubr.bf16.mxu0 0
    %1920 = vmatmul.mubr.bf16.gmra.mrb[0].mxu0 %v1882
    %v1921 = vpop.f32.mrb[0].mxu0
    %v1922 = vadd.f32 0.0, %v1921
    %v1923 = vpop.f32.mrb[0].mxu0
    %v1924 = vpop.f32.mrb[0].mxu0
    %v1925 = vpop.f32.mrb[0].mxu0
    %1926 = vdwg.mxu0
    %1928 = vrot.lane.b32.xlu0 %v1631, 96
    %v1929 = vpop.permute.xlu0 %1928
    %v1931 = vsel %vm293, %v1631, 0
    %v1934 = vsel %vm293, %v1929, 0
    %1936 = vmatprep.subr.bf16.mxu0 0
    %1937 = vmatpush1.bf16.xpose.msra.mxu0 %v1934
    %1938 = vmatprep.subr.bf16.mxu0 0
    %1939 = vmatpush1.bf16.xpose.msra.mxu0 0
    %1940 = vmatprep.subr.bf16.mxu0 0
    %1941 = vmatpush1.bf16.xpose.msra.mxu0 0
    %1942 = vmatprep.subr.bf16.mxu0 0
    %1943 = vmatpush1.bf16.xpose.msra.mxu0 0
    %1944 = vmatprep.subr.bf16.mxu0 0
    %1945 = vmatpush1.bf16.xpose.msra.mxu0 0
    %1946 = vmatprep.subr.bf16.mxu0 0
    %1947 = vmatpush1.bf16.xpose.msra.mxu0 0
    %1948 = vmatprep.subr.bf16.mxu0 0
    %1949 = vmatpush1.bf16.xpose.msra.mxu0 0
    %1950 = vmatprep.subr.bf16.mxu0 0
    %1951 = vmatpush1.bf16.xpose.msra.mxu0 0
    %1952 = vmatprep.subr.bf16.mxu0 0
    %1953 = vmatpush1.bf16.xpose.msra.mxu0 0
    %1954 = vmatprep.subr.bf16.mxu0 0
    %1955 = vmatpush1.bf16.xpose.msra.mxu0 0
    %1956 = vmatprep.subr.bf16.mxu0 0
    %1957 = vmatpush1.bf16.xpose.msra.mxu0 0
    %1958 = vmatprep.subr.bf16.mxu0 0
    %1959 = vmatpush1.bf16.xpose.msra.mxu0 0
    %1960 = vmatprep.subr.bf16.mxu0 0
    %1961 = vmatpush1.bf16.xpose.msra.mxu0 0
    %1962 = vmatprep.subr.bf16.mxu0 0
    %1963 = vmatpush1.bf16.xpose.msra.mxu0 0
    %1964 = vmatprep.subr.bf16.mxu0 0
    %1965 = vmatpush1.bf16.xpose.msra.mxu0 0
    %1966 = vmatprep.subr.bf16.mxu0 0
    %1967 = vmatpush1.bf16.xpose.msra.mxu0 0
    %1968 = vmatprep.mubr.bf16.mxu0 0
    %1969 = vmatmul.mubr.bf16.gmra.mrb[0].mxu0 %v1931
    %v1970 = vpop.f32.mrb[0].mxu0
    %v1971 = vadd.f32 0.0, %v1970
    %v1972 = vpop.f32.mrb[0].mxu0
    %v1973 = vpop.f32.mrb[0].mxu0
    %v1974 = vpop.f32.mrb[0].mxu0
    %1975 = vdwg.mxu0
    %1977 = vrot.lane.b32.xlu0 %v1632, 96
    %v1978 = vpop.permute.xlu0 %1977
    %v1980 = vsel %vm293, %v1632, 0
    %v1983 = vsel %vm293, %v1978, 0
    %1985 = vmatprep.subr.bf16.mxu0 0
    %1986 = vmatpush1.bf16.xpose.msra.mxu0 %v1983
    %1987 = vmatprep.subr.bf16.mxu0 0
    %1988 = vmatpush1.bf16.xpose.msra.mxu0 0
    %1989 = vmatprep.subr.bf16.mxu0 0
    %1990 = vmatpush1.bf16.xpose.msra.mxu0 0
    %1991 = vmatprep.subr.bf16.mxu0 0
    %1992 = vmatpush1.bf16.xpose.msra.mxu0 0
    %1993 = vmatprep.subr.bf16.mxu0 0
    %1994 = vmatpush1.bf16.xpose.msra.mxu0 0
    %1995 = vmatprep.subr.bf16.mxu0 0
    %1996 = vmatpush1.bf16.xpose.msra.mxu0 0
    %1997 = vmatprep.subr.bf16.mxu0 0
    %1998 = vmatpush1.bf16.xpose.msra.mxu0 0
    %1999 = vmatprep.subr.bf16.mxu0 0
    %2000 = vmatpush1.bf16.xpose.msra.mxu0 0
    %2001 = vmatprep.subr.bf16.mxu0 0
    %2002 = vmatpush1.bf16.xpose.msra.mxu0 0
    %2003 = vmatprep.subr.bf16.mxu0 0
    %2004 = vmatpush1.bf16.xpose.msra.mxu0 0
    %2005 = vmatprep.subr.bf16.mxu0 0
    %2006 = vmatpush1.bf16.xpose.msra.mxu0 0
    %2007 = vmatprep.subr.bf16.mxu0 0
    %2008 = vmatpush1.bf16.xpose.msra.mxu0 0
    %2009 = vmatprep.subr.bf16.mxu0 0
    %2010 = vmatpush1.bf16.xpose.msra.mxu0 0
    %2011 = vmatprep.subr.bf16.mxu0 0
    %2012 = vmatpush1.bf16.xpose.msra.mxu0 0
    %2013 = vmatprep.subr.bf16.mxu0 0
    %2014 = vmatpush1.bf16.xpose.msra.mxu0 0
    %2015 = vmatprep.subr.bf16.mxu0 0
    %2016 = vmatpush1.bf16.xpose.msra.mxu0 0
    %2017 = vmatprep.mubr.bf16.mxu0 0
    %2018 = vmatmul.mubr.bf16.gmra.mrb[0].mxu0 %v1980
    %v2019 = vpop.f32.mrb[0].mxu0
    %v2020 = vadd.f32 0.0, %v2019
    %v2021 = vpop.f32.mrb[0].mxu0
    %v2022 = vpop.f32.mrb[0].mxu0
    %v2023 = vpop.f32.mrb[0].mxu0
    %2024 = vdwg.mxu0
    %v2025 = vmul.f32 %v1677, 0.35355338
    %v2026 = vmul.f32 %v1726, 0.35355338
    %v2027 = vmul.f32 %v1775, 0.35355338
    %v2028 = vmul.f32 %v1824, 0.35355338
    %v2029 = vmul.f32 %v1873, 0.35355338
    %v2030 = vmul.f32 %v1922, 0.35355338
    %v2031 = vmul.f32 %v1971, 0.35355338
    %v2032 = vmul.f32 %v2020, 0.35355338
    %v2033 = vadd.f32 %v2025, %v135
    %v2034 = vadd.f32 %v2026, %v135
    %v2035 = vadd.f32 %v2027, %v135
    %v2036 = vadd.f32 %v2028, %v135
    %v2037 = vadd.f32 %v2029, %v135
    %v2038 = vadd.f32 %v2030, %v135
    %v2039 = vadd.f32 %v2031, %v135
    %v2040 = vadd.f32 %v2032, %v135
    %v2041 = vsel %vm293, %v2033, -inf
    %2042 = vmax.xlane.f32.xlu0 %v2041
    %v2043 = vpop.xlane.xlu0 %2042
    %v2044 = vsel %vm293, %v2034, -inf
    %2045 = vmax.xlane.f32.xlu0 %v2044
    %v2046 = vpop.xlane.xlu0 %2045
    %v2047 = vsel %vm293, %v2035, -inf
    %2048 = vmax.xlane.f32.xlu0 %v2047
    %v2049 = vpop.xlane.xlu0 %2048
    %v2050 = vsel %vm293, %v2036, -inf
    %2051 = vmax.xlane.f32.xlu0 %v2050
    %v2052 = vpop.xlane.xlu0 %2051
    %v2053 = vsel %vm293, %v2037, -inf
    %2054 = vmax.xlane.f32.xlu0 %v2053
    %v2055 = vpop.xlane.xlu0 %2054
    %v2056 = vsel %vm293, %v2038, -inf
    %2057 = vmax.xlane.f32.xlu0 %v2056
    %v2058 = vpop.xlane.xlu0 %2057
    %v2059 = vsel %vm293, %v2039, -inf
    %2060 = vmax.xlane.f32.xlu0 %v2059
    %v2061 = vpop.xlane.xlu0 %2060
    %v2062 = vsel %vm293, %v2040, -inf
    %2063 = vmax.xlane.f32.xlu0 %v2062
    %v2064 = vpop.xlane.xlu0 %2063
    %v2065 = vsub.f32 %v2033, %v2043
    %v2066 = vsub.f32 %v2034, %v2046
    %v2067 = vsub.f32 %v2035, %v2049
    %v2068 = vsub.f32 %v2036, %v2052
    %v2069 = vsub.f32 %v2037, %v2055
    %v2070 = vsub.f32 %v2038, %v2058
    %v2071 = vsub.f32 %v2039, %v2061
    %v2072 = vsub.f32 %v2040, %v2064
    %v2073 = vmul.f32 %v2065, 1.442695
    %v2074 = vpow.pop %v2073
    %v2075 = vmul.f32 %v2066, 1.442695
    %v2076 = vpow.pop %v2075
    %v2077 = vmul.f32 %v2067, 1.442695
    %v2078 = vpow.pop %v2077
    %v2079 = vmul.f32 %v2068, 1.442695
    %v2080 = vpow.pop %v2079
    %v2081 = vmul.f32 %v2069, 1.442695
    %v2082 = vpow.pop %v2081
    %v2083 = vmul.f32 %v2070, 1.442695
    %v2084 = vpow.pop %v2083
    %v2085 = vmul.f32 %v2071, 1.442695
    %v2086 = vpow.pop %v2085
    %v2087 = vmul.f32 %v2072, 1.442695
    %v2088 = vpow.pop %v2087
    %v2089 = vsel %vm293, %v2074, 0.0
    %2090 = vadd.xlane.f32.xlu0 %v2089
    %v2091 = vpop.xlane.xlu0 %2090
    %v2092 = vsel %vm293, %v2076, 0.0
    %2093 = vadd.xlane.f32.xlu0 %v2092
    %v2094 = vpop.xlane.xlu0 %2093
    %v2095 = vsel %vm293, %v2078, 0.0
    %2096 = vadd.xlane.f32.xlu0 %v2095
    %v2097 = vpop.xlane.xlu0 %2096
    %v2098 = vsel %vm293, %v2080, 0.0
    %2099 = vadd.xlane.f32.xlu0 %v2098
    %v2100 = vpop.xlane.xlu0 %2099
    %v2101 = vsel %vm293, %v2082, 0.0
    %2102 = vadd.xlane.f32.xlu0 %v2101
    %v2103 = vpop.xlane.xlu0 %2102
    %v2104 = vsel %vm293, %v2084, 0.0
    %2105 = vadd.xlane.f32.xlu0 %v2104
    %v2106 = vpop.xlane.xlu0 %2105
    %v2107 = vsel %vm293, %v2086, 0.0
    %2108 = vadd.xlane.f32.xlu0 %v2107
    %v2109 = vpop.xlane.xlu0 %2108
    %v2110 = vsel %vm293, %v2088, 0.0
    %2111 = vadd.xlane.f32.xlu0 %v2110
    %v2112 = vpop.xlane.xlu0 %2111
    %v2113 = vrcp.pop %v2091
    %v2114 = vrcp.pop %v2094
    %v2115 = vrcp.pop %v2097
    %v2116 = vrcp.pop %v2100
    %v2117 = vrcp.pop %v2103
    %v2118 = vrcp.pop %v2106
    %v2119 = vrcp.pop %v2109
    %v2120 = vrcp.pop %v2112
    %v2121 = vpack.c.bf16 %v2074, %v2074
    %v2122 = vpack.c.bf16 %v2076, %v2076
    %v2123 = vpack.c.bf16 %v2078, %v2078
    %v2124 = vpack.c.bf16 %v2080, %v2080
    %v2125 = vpack.c.bf16 %v2082, %v2082
    %v2126 = vpack.c.bf16 %v2084, %v2084
    %v2127 = vpack.c.bf16 %v2086, %v2086
    %v2128 = vpack.c.bf16 %v2088, %v2088
    %2129 = vrot.lane.b32.xlu0 %v1625, 64
    %v2130 = vpop.permute.xlu0 %2129
    %v2132 = vsel %vm293, %v2121, 0
    %v2135 = vsel %vm792, %v2130, 0
    %2137 = vmatprep.subr.bf16.mxu0 0
    %2138 = vmatpush1.bf16.msra.mxu0 %v2135
    %2139 = vmatprep.subr.bf16.mxu0 0
    %2140 = vmatpush1.bf16.msra.mxu0 0
    %2141 = vmatprep.subr.bf16.mxu0 0
    %2142 = vmatpush1.bf16.msra.mxu0 0
    %2143 = vmatprep.subr.bf16.mxu0 0
    %2144 = vmatpush1.bf16.msra.mxu0 0
    %2145 = vmatprep.subr.bf16.mxu0 0
    %2146 = vmatpush1.bf16.msra.mxu0 0
    %2147 = vmatprep.subr.bf16.mxu0 0
    %2148 = vmatpush1.bf16.msra.mxu0 0
    %2149 = vmatprep.subr.bf16.mxu0 0
    %2150 = vmatpush1.bf16.msra.mxu0 0
    %2151 = vmatprep.subr.bf16.mxu0 0
    %2152 = vmatpush1.bf16.msra.mxu0 0
    %2153 = vmatprep.subr.bf16.mxu0 0
    %2154 = vmatpush1.bf16.msra.mxu0 0
    %2155 = vmatprep.subr.bf16.mxu0 0
    %2156 = vmatpush1.bf16.msra.mxu0 0
    %2157 = vmatprep.subr.bf16.mxu0 0
    %2158 = vmatpush1.bf16.msra.mxu0 0
    %2159 = vmatprep.subr.bf16.mxu0 0
    %2160 = vmatpush1.bf16.msra.mxu0 0
    %2161 = vmatprep.subr.bf16.mxu0 0
    %2162 = vmatpush1.bf16.msra.mxu0 0
    %2163 = vmatprep.subr.bf16.mxu0 0
    %2164 = vmatpush1.bf16.msra.mxu0 0
    %2165 = vmatprep.subr.bf16.mxu0 0
    %2166 = vmatpush1.bf16.msra.mxu0 0
    %2167 = vmatprep.subr.bf16.mxu0 0
    %2168 = vmatpush1.bf16.msra.mxu0 0
    %2169 = vmatprep.mubr.bf16.mxu0 0
    %2170 = vmatmul.mubr.bf16.gmra.mrb[0].mxu0 %v2132
    %v2171 = vpop.f32.mrb[0].mxu0
    %v2172 = vadd.f32 0.0, %v2171
    %v2173 = vpop.f32.mrb[0].mxu0
    %v2174 = vpop.f32.mrb[0].mxu0
    %v2175 = vpop.f32.mrb[0].mxu0
    %2176 = vdwg.mxu0
    %2177 = vrot.lane.b32.xlu0 %v1626, 64
    %v2178 = vpop.permute.xlu0 %2177
    %v2180 = vsel %vm293, %v2122, 0
    %v2183 = vsel %vm792, %v2178, 0
    %2185 = vmatprep.subr.bf16.mxu0 0
    %2186 = vmatpush1.bf16.msra.mxu0 %v2183
    %2187 = vmatprep.subr.bf16.mxu0 0
    %2188 = vmatpush1.bf16.msra.mxu0 0
    %2189 = vmatprep.subr.bf16.mxu0 0
    %2190 = vmatpush1.bf16.msra.mxu0 0
    %2191 = vmatprep.subr.bf16.mxu0 0
    %2192 = vmatpush1.bf16.msra.mxu0 0
    %2193 = vmatprep.subr.bf16.mxu0 0
    %2194 = vmatpush1.bf16.msra.mxu0 0
    %2195 = vmatprep.subr.bf16.mxu0 0
    %2196 = vmatpush1.bf16.msra.mxu0 0
    %2197 = vmatprep.subr.bf16.mxu0 0
    %2198 = vmatpush1.bf16.msra.mxu0 0
    %2199 = vmatprep.subr.bf16.mxu0 0
    %2200 = vmatpush1.bf16.msra.mxu0 0
    %2201 = vmatprep.subr.bf16.mxu0 0
    %2202 = vmatpush1.bf16.msra.mxu0 0
    %2203 = vmatprep.subr.bf16.mxu0 0
    %2204 = vmatpush1.bf16.msra.mxu0 0
    %2205 = vmatprep.subr.bf16.mxu0 0
    %2206 = vmatpush1.bf16.msra.mxu0 0
    %2207 = vmatprep.subr.bf16.mxu0 0
    %2208 = vmatpush1.bf16.msra.mxu0 0
    %2209 = vmatprep.subr.bf16.mxu0 0
    %2210 = vmatpush1.bf16.msra.mxu0 0
    %2211 = vmatprep.subr.bf16.mxu0 0
    %2212 = vmatpush1.bf16.msra.mxu0 0
    %2213 = vmatprep.subr.bf16.mxu0 0
    %2214 = vmatpush1.bf16.msra.mxu0 0
    %2215 = vmatprep.subr.bf16.mxu0 0
    %2216 = vmatpush1.bf16.msra.mxu0 0
    %2217 = vmatprep.mubr.bf16.mxu0 0
    %2218 = vmatmul.mubr.bf16.gmra.mrb[0].mxu0 %v2180
    %v2219 = vpop.f32.mrb[0].mxu0
    %v2220 = vadd.f32 0.0, %v2219
    %v2221 = vpop.f32.mrb[0].mxu0
    %v2222 = vpop.f32.mrb[0].mxu0
    %v2223 = vpop.f32.mrb[0].mxu0
    %2224 = vdwg.mxu0
    %2225 = vrot.lane.b32.xlu0 %v1627, 64
    %v2226 = vpop.permute.xlu0 %2225
    %v2228 = vsel %vm293, %v2123, 0
    %v2231 = vsel %vm792, %v2226, 0
    %2233 = vmatprep.subr.bf16.mxu0 0
    %2234 = vmatpush1.bf16.msra.mxu0 %v2231
    %2235 = vmatprep.subr.bf16.mxu0 0
    %2236 = vmatpush1.bf16.msra.mxu0 0
    %2237 = vmatprep.subr.bf16.mxu0 0
    %2238 = vmatpush1.bf16.msra.mxu0 0
    %2239 = vmatprep.subr.bf16.mxu0 0
    %2240 = vmatpush1.bf16.msra.mxu0 0
    %2241 = vmatprep.subr.bf16.mxu0 0
    %2242 = vmatpush1.bf16.msra.mxu0 0
    %2243 = vmatprep.subr.bf16.mxu0 0
    %2244 = vmatpush1.bf16.msra.mxu0 0
    %2245 = vmatprep.subr.bf16.mxu0 0
    %2246 = vmatpush1.bf16.msra.mxu0 0
    %2247 = vmatprep.subr.bf16.mxu0 0
    %2248 = vmatpush1.bf16.msra.mxu0 0
    %2249 = vmatprep.subr.bf16.mxu0 0
    %2250 = vmatpush1.bf16.msra.mxu0 0
    %2251 = vmatprep.subr.bf16.mxu0 0
    %2252 = vmatpush1.bf16.msra.mxu0 0
    %2253 = vmatprep.subr.bf16.mxu0 0
    %2254 = vmatpush1.bf16.msra.mxu0 0
    %2255 = vmatprep.subr.bf16.mxu0 0
    %2256 = vmatpush1.bf16.msra.mxu0 0
    %2257 = vmatprep.subr.bf16.mxu0 0
    %2258 = vmatpush1.bf16.msra.mxu0 0
    %2259 = vmatprep.subr.bf16.mxu0 0
    %2260 = vmatpush1.bf16.msra.mxu0 0
    %2261 = vmatprep.subr.bf16.mxu0 0
    %2262 = vmatpush1.bf16.msra.mxu0 0
    %2263 = vmatprep.subr.bf16.mxu0 0
    %2264 = vmatpush1.bf16.msra.mxu0 0
    %2265 = vmatprep.mubr.bf16.mxu0 0
    %2266 = vmatmul.mubr.bf16.gmra.mrb[0].mxu0 %v2228
    %v2267 = vpop.f32.mrb[0].mxu0
    %v2268 = vadd.f32 0.0, %v2267
    %v2269 = vpop.f32.mrb[0].mxu0
    %v2270 = vpop.f32.mrb[0].mxu0
    %v2271 = vpop.f32.mrb[0].mxu0
    %2272 = vdwg.mxu0
    %2273 = vrot.lane.b32.xlu0 %v1628, 64
    %v2274 = vpop.permute.xlu0 %2273
    %v2276 = vsel %vm293, %v2124, 0
    %v2279 = vsel %vm792, %v2274, 0
    %2281 = vmatprep.subr.bf16.mxu0 0
    %2282 = vmatpush1.bf16.msra.mxu0 %v2279
    %2283 = vmatprep.subr.bf16.mxu0 0
    %2284 = vmatpush1.bf16.msra.mxu0 0
    %2285 = vmatprep.subr.bf16.mxu0 0
    %2286 = vmatpush1.bf16.msra.mxu0 0
    %2287 = vmatprep.subr.bf16.mxu0 0
    %2288 = vmatpush1.bf16.msra.mxu0 0
    %2289 = vmatprep.subr.bf16.mxu0 0
    %2290 = vmatpush1.bf16.msra.mxu0 0
    %2291 = vmatprep.subr.bf16.mxu0 0
    %2292 = vmatpush1.bf16.msra.mxu0 0
    %2293 = vmatprep.subr.bf16.mxu0 0
    %2294 = vmatpush1.bf16.msra.mxu0 0
    %2295 = vmatprep.subr.bf16.mxu0 0
    %2296 = vmatpush1.bf16.msra.mxu0 0
    %2297 = vmatprep.subr.bf16.mxu0 0
    %2298 = vmatpush1.bf16.msra.mxu0 0
    %2299 = vmatprep.subr.bf16.mxu0 0
    %2300 = vmatpush1.bf16.msra.mxu0 0
    %2301 = vmatprep.subr.bf16.mxu0 0
    %2302 = vmatpush1.bf16.msra.mxu0 0
    %2303 = vmatprep.subr.bf16.mxu0 0
    %2304 = vmatpush1.bf16.msra.mxu0 0
    %2305 = vmatprep.subr.bf16.mxu0 0
    %2306 = vmatpush1.bf16.msra.mxu0 0
    %2307 = vmatprep.subr.bf16.mxu0 0
    %2308 = vmatpush1.bf16.msra.mxu0 0
    %2309 = vmatprep.subr.bf16.mxu0 0
    %2310 = vmatpush1.bf16.msra.mxu0 0
    %2311 = vmatprep.subr.bf16.mxu0 0
    %2312 = vmatpush1.bf16.msra.mxu0 0
    %2313 = vmatprep.mubr.bf16.mxu0 0
    %2314 = vmatmul.mubr.bf16.gmra.mrb[0].mxu0 %v2276
    %v2315 = vpop.f32.mrb[0].mxu0
    %v2316 = vadd.f32 0.0, %v2315
    %v2317 = vpop.f32.mrb[0].mxu0
    %v2318 = vpop.f32.mrb[0].mxu0
    %v2319 = vpop.f32.mrb[0].mxu0
    %2320 = vdwg.mxu0
    %2321 = vrot.lane.b32.xlu0 %v1629, 64
    %v2322 = vpop.permute.xlu0 %2321
    %v2324 = vsel %vm293, %v2125, 0
    %v2327 = vsel %vm792, %v2322, 0
    %2329 = vmatprep.subr.bf16.mxu0 0
    %2330 = vmatpush1.bf16.msra.mxu0 %v2327
    %2331 = vmatprep.subr.bf16.mxu0 0
    %2332 = vmatpush1.bf16.msra.mxu0 0
    %2333 = vmatprep.subr.bf16.mxu0 0
    %2334 = vmatpush1.bf16.msra.mxu0 0
    %2335 = vmatprep.subr.bf16.mxu0 0
    %2336 = vmatpush1.bf16.msra.mxu0 0
    %2337 = vmatprep.subr.bf16.mxu0 0
    %2338 = vmatpush1.bf16.msra.mxu0 0
    %2339 = vmatprep.subr.bf16.mxu0 0
    %2340 = vmatpush1.bf16.msra.mxu0 0
    %2341 = vmatprep.subr.bf16.mxu0 0
    %2342 = vmatpush1.bf16.msra.mxu0 0
    %2343 = vmatprep.subr.bf16.mxu0 0
    %2344 = vmatpush1.bf16.msra.mxu0 0
    %2345 = vmatprep.subr.bf16.mxu0 0
    %2346 = vmatpush1.bf16.msra.mxu0 0
    %2347 = vmatprep.subr.bf16.mxu0 0
    %2348 = vmatpush1.bf16.msra.mxu0 0
    %2349 = vmatprep.subr.bf16.mxu0 0
    %2350 = vmatpush1.bf16.msra.mxu0 0
    %2351 = vmatprep.subr.bf16.mxu0 0
    %2352 = vmatpush1.bf16.msra.mxu0 0
    %2353 = vmatprep.subr.bf16.mxu0 0
    %2354 = vmatpush1.bf16.msra.mxu0 0
    %2355 = vmatprep.subr.bf16.mxu0 0
    %2356 = vmatpush1.bf16.msra.mxu0 0
    %2357 = vmatprep.subr.bf16.mxu0 0
    %2358 = vmatpush1.bf16.msra.mxu0 0
    %2359 = vmatprep.subr.bf16.mxu0 0
    %2360 = vmatpush1.bf16.msra.mxu0 0
    %2361 = vmatprep.mubr.bf16.mxu0 0
    %2362 = vmatmul.mubr.bf16.gmra.mrb[0].mxu0 %v2324
    %v2363 = vpop.f32.mrb[0].mxu0
    %v2364 = vadd.f32 0.0, %v2363
    %v2365 = vpop.f32.mrb[0].mxu0
    %v2366 = vpop.f32.mrb[0].mxu0
    %v2367 = vpop.f32.mrb[0].mxu0
    %2368 = vdwg.mxu0
    %2369 = vrot.lane.b32.xlu0 %v1630, 64
    %v2370 = vpop.permute.xlu0 %2369
    %v2372 = vsel %vm293, %v2126, 0
    %v2375 = vsel %vm792, %v2370, 0
    %2377 = vmatprep.subr.bf16.mxu0 0
    %2378 = vmatpush1.bf16.msra.mxu0 %v2375
    %2379 = vmatprep.subr.bf16.mxu0 0
    %2380 = vmatpush1.bf16.msra.mxu0 0
    %2381 = vmatprep.subr.bf16.mxu0 0
    %2382 = vmatpush1.bf16.msra.mxu0 0
    %2383 = vmatprep.subr.bf16.mxu0 0
    %2384 = vmatpush1.bf16.msra.mxu0 0
    %2385 = vmatprep.subr.bf16.mxu0 0
    %2386 = vmatpush1.bf16.msra.mxu0 0
    %2387 = vmatprep.subr.bf16.mxu0 0
    %2388 = vmatpush1.bf16.msra.mxu0 0
    %2389 = vmatprep.subr.bf16.mxu0 0
    %2390 = vmatpush1.bf16.msra.mxu0 0
    %2391 = vmatprep.subr.bf16.mxu0 0
    %2392 = vmatpush1.bf16.msra.mxu0 0
    %2393 = vmatprep.subr.bf16.mxu0 0
    %2394 = vmatpush1.bf16.msra.mxu0 0
    %2395 = vmatprep.subr.bf16.mxu0 0
    %2396 = vmatpush1.bf16.msra.mxu0 0
    %2397 = vmatprep.subr.bf16.mxu0 0
    %2398 = vmatpush1.bf16.msra.mxu0 0
    %2399 = vmatprep.subr.bf16.mxu0 0
    %2400 = vmatpush1.bf16.msra.mxu0 0
    %2401 = vmatprep.subr.bf16.mxu0 0
    %2402 = vmatpush1.bf16.msra.mxu0 0
    %2403 = vmatprep.subr.bf16.mxu0 0
    %2404 = vmatpush1.bf16.msra.mxu0 0
    %2405 = vmatprep.subr.bf16.mxu0 0
    %2406 = vmatpush1.bf16.msra.mxu0 0
    %2407 = vmatprep.subr.bf16.mxu0 0
    %2408 = vmatpush1.bf16.msra.mxu0 0
    %2409 = vmatprep.mubr.bf16.mxu0 0
    %2410 = vmatmul.mubr.bf16.gmra.mrb[0].mxu0 %v2372
    %v2411 = vpop.f32.mrb[0].mxu0
    %v2412 = vadd.f32 0.0, %v2411
    %v2413 = vpop.f32.mrb[0].mxu0
    %v2414 = vpop.f32.mrb[0].mxu0
    %v2415 = vpop.f32.mrb[0].mxu0
    %2416 = vdwg.mxu0
    %2417 = vrot.lane.b32.xlu0 %v1631, 64
    %v2418 = vpop.permute.xlu0 %2417
    %v2420 = vsel %vm293, %v2127, 0
    %v2423 = vsel %vm792, %v2418, 0
    %2425 = vmatprep.subr.bf16.mxu0 0
    %2426 = vmatpush1.bf16.msra.mxu0 %v2423
    %2427 = vmatprep.subr.bf16.mxu0 0
    %2428 = vmatpush1.bf16.msra.mxu0 0
    %2429 = vmatprep.subr.bf16.mxu0 0
    %2430 = vmatpush1.bf16.msra.mxu0 0
    %2431 = vmatprep.subr.bf16.mxu0 0
    %2432 = vmatpush1.bf16.msra.mxu0 0
    %2433 = vmatprep.subr.bf16.mxu0 0
    %2434 = vmatpush1.bf16.msra.mxu0 0
    %2435 = vmatprep.subr.bf16.mxu0 0
    %2436 = vmatpush1.bf16.msra.mxu0 0
    %2437 = vmatprep.subr.bf16.mxu0 0
    %2438 = vmatpush1.bf16.msra.mxu0 0
    %2439 = vmatprep.subr.bf16.mxu0 0
    %2440 = vmatpush1.bf16.msra.mxu0 0
    %2441 = vmatprep.subr.bf16.mxu0 0
    %2442 = vmatpush1.bf16.msra.mxu0 0
    %2443 = vmatprep.subr.bf16.mxu0 0
    %2444 = vmatpush1.bf16.msra.mxu0 0
    %2445 = vmatprep.subr.bf16.mxu0 0
    %2446 = vmatpush1.bf16.msra.mxu0 0
    %2447 = vmatprep.subr.bf16.mxu0 0
    %2448 = vmatpush1.bf16.msra.mxu0 0
    %2449 = vmatprep.subr.bf16.mxu0 0
    %2450 = vmatpush1.bf16.msra.mxu0 0
    %2451 = vmatprep.subr.bf16.mxu0 0
    %2452 = vmatpush1.bf16.msra.mxu0 0
    %2453 = vmatprep.subr.bf16.mxu0 0
    %2454 = vmatpush1.bf16.msra.mxu0 0
    %2455 = vmatprep.subr.bf16.mxu0 0
    %2456 = vmatpush1.bf16.msra.mxu0 0
    %2457 = vmatprep.mubr.bf16.mxu0 0
    %2458 = vmatmul.mubr.bf16.gmra.mrb[0].mxu0 %v2420
    %v2459 = vpop.f32.mrb[0].mxu0
    %v2460 = vadd.f32 0.0, %v2459
    %v2461 = vpop.f32.mrb[0].mxu0
    %v2462 = vpop.f32.mrb[0].mxu0
    %v2463 = vpop.f32.mrb[0].mxu0
    %2464 = vdwg.mxu0
    %2465 = vrot.lane.b32.xlu0 %v1632, 64
    %v2466 = vpop.permute.xlu0 %2465
    %v2468 = vsel %vm293, %v2128, 0
    %v2471 = vsel %vm792, %v2466, 0
    %2473 = vmatprep.subr.bf16.mxu0 0
    %2474 = vmatpush1.bf16.msra.mxu0 %v2471
    %2475 = vmatprep.subr.bf16.mxu0 0
    %2476 = vmatpush1.bf16.msra.mxu0 0
    %2477 = vmatprep.subr.bf16.mxu0 0
    %2478 = vmatpush1.bf16.msra.mxu0 0
    %2479 = vmatprep.subr.bf16.mxu0 0
    %2480 = vmatpush1.bf16.msra.mxu0 0
    %2481 = vmatprep.subr.bf16.mxu0 0
    %2482 = vmatpush1.bf16.msra.mxu0 0
    %2483 = vmatprep.subr.bf16.mxu0 0
    %2484 = vmatpush1.bf16.msra.mxu0 0
    %2485 = vmatprep.subr.bf16.mxu0 0
    %2486 = vmatpush1.bf16.msra.mxu0 0
    %2487 = vmatprep.subr.bf16.mxu0 0
    %2488 = vmatpush1.bf16.msra.mxu0 0
    %2489 = vmatprep.subr.bf16.mxu0 0
    %2490 = vmatpush1.bf16.msra.mxu0 0
    %2491 = vmatprep.subr.bf16.mxu0 0
    %2492 = vmatpush1.bf16.msra.mxu0 0
    %2493 = vmatprep.subr.bf16.mxu0 0
    %2494 = vmatpush1.bf16.msra.mxu0 0
    %2495 = vmatprep.subr.bf16.mxu0 0
    %2496 = vmatpush1.bf16.msra.mxu0 0
    %2497 = vmatprep.subr.bf16.mxu0 0
    %2498 = vmatpush1.bf16.msra.mxu0 0
    %2499 = vmatprep.subr.bf16.mxu0 0
    %2500 = vmatpush1.bf16.msra.mxu0 0
    %2501 = vmatprep.subr.bf16.mxu0 0
    %2502 = vmatpush1.bf16.msra.mxu0 0
    %2503 = vmatprep.subr.bf16.mxu0 0
    %2504 = vmatpush1.bf16.msra.mxu0 0
    %2505 = vmatprep.mubr.bf16.mxu0 0
    %2506 = vmatmul.mubr.bf16.gmra.mrb[0].mxu0 %v2468
    %v2507 = vpop.f32.mrb[0].mxu0
    %v2508 = vadd.f32 0.0, %v2507
    %v2509 = vpop.f32.mrb[0].mxu0
    %v2510 = vpop.f32.mrb[0].mxu0
    %v2511 = vpop.f32.mrb[0].mxu0
    %2512 = vdwg.mxu0
    %v2513 = vmul.f32 %v2172, %v2113
    %v2514 = vmul.f32 %v2220, %v2114
    %v2515 = vmul.f32 %v2268, %v2115
    %v2516 = vmul.f32 %v2316, %v2116
    %v2517 = vmul.f32 %v2364, %v2117
    %v2518 = vmul.f32 %v2412, %v2118
    %v2519 = vmul.f32 %v2460, %v2119
    %v2520 = vmul.f32 %v2508, %v2120
    %2523 = vrot.lane.b32.xlu0 %v2515, 8
    %v2524 = vpop.permute.xlu0 %2523
    %2525 = vrot.lane.b32.xlu0 %v2516, 8
    %v2526 = vpop.permute.xlu0 %2525
    %2531 = vrot.lane.b32.xlu0 %v2517, 16
    %v2532 = vpop.permute.xlu0 %2531
    %2533 = vrot.lane.b32.xlu0 %v2518, 16
    %v2534 = vpop.permute.xlu0 %2533
    %2539 = vrot.lane.b32.xlu0 %v2519, 24
    %v2540 = vpop.permute.xlu0 %2539
    %2541 = vrot.lane.b32.xlu0 %v2520, 24
    %v2542 = vpop.permute.xlu0 %2541
    %v2545 = vsel %vm293, %v2513, %v2524
    %v2546 = vsel %vm293, %v2514, %v2526
    %v2547 = vsel %vm1206, %v2545, %v2532
    %v2548 = vsel %vm1206, %v2546, %v2534
    %v2549 = vsel %vm1209, %v2547, %v2540
    %v2550 = vsel %vm1209, %v2548, %v2542
    %v2551 = vpack.c.bf16 %v2550, %v2549
    %v2552 = vlaneseq
    %v2553 = vshrl.u32 %v2552, 7
    %v2554 = vsub.s32 1, %v2553
    %v2555 = vrot.slane %v1505, %v2554
    %2556 = vrot.lane.b32.xlu0 %v1557, 32
    %v2557 = vpop.permute.xlu0 %2556
    %2558 = vrot.lane.b32.xlu0 %v1558, 32
    %v2559 = vpop.permute.xlu0 %2558
    %v2563 = vsel %vm161, %v2551, 0
    %2565 = vmatprep.subr.bf16.mxu0 0
    %2566 = vmatpush1.bf16.msra.mxu0 %v2557
    %2567 = vmatprep.subr.bf16.mxu0 0
    %2568 = vmatpush1.bf16.msra.mxu0 %v2559
    %2569 = vmatprep.subr.bf16.mxu0 0
    %2570 = vmatpush1.bf16.msra.mxu0 0
    %2571 = vmatprep.subr.bf16.mxu0 0
    %2572 = vmatpush1.bf16.msra.mxu0 0
    %2573 = vmatprep.subr.bf16.mxu0 0
    %2574 = vmatpush1.bf16.msra.mxu0 0
    %2575 = vmatprep.subr.bf16.mxu0 0
    %2576 = vmatpush1.bf16.msra.mxu0 0
    %2577 = vmatprep.subr.bf16.mxu0 0
    %2578 = vmatpush1.bf16.msra.mxu0 0
    %2579 = vmatprep.subr.bf16.mxu0 0
    %2580 = vmatpush1.bf16.msra.mxu0 0
    %2581 = vmatprep.subr.bf16.mxu0 0
    %2582 = vmatpush1.bf16.msra.mxu0 0
    %2583 = vmatprep.subr.bf16.mxu0 0
    %2584 = vmatpush1.bf16.msra.mxu0 0
    %2585 = vmatprep.subr.bf16.mxu0 0
    %2586 = vmatpush1.bf16.msra.mxu0 0
    %2587 = vmatprep.subr.bf16.mxu0 0
    %2588 = vmatpush1.bf16.msra.mxu0 0
    %2589 = vmatprep.subr.bf16.mxu0 0
    %2590 = vmatpush1.bf16.msra.mxu0 0
    %2591 = vmatprep.subr.bf16.mxu0 0
    %2592 = vmatpush1.bf16.msra.mxu0 0
    %2593 = vmatprep.subr.bf16.mxu0 0
    %2594 = vmatpush1.bf16.msra.mxu0 0
    %2595 = vmatprep.subr.bf16.mxu0 0
    %2596 = vmatpush1.bf16.msra.mxu0 0
    %2597 = vmatprep.mubr.bf16.mxu0 0
    %2598 = vmatmul.mubr.bf16.gmra.mrb[0].mxu0 %v2563
    %v2599 = vpop.f32.mrb[0].mxu0
    %v2600 = vadd.f32 %v2555, %v2599
    %v2601 = vpop.f32.mrb[0].mxu0
    %v2602 = vpop.f32.mrb[0].mxu0
    %v2603 = vadd.f32 %v2555, %v2602
    %v2604 = vpop.f32.mrb[0].mxu0
    %2605 = vdwg.mxu0
    %v2606 = vadd.f32 %v1476, %v2600
    %v2607 = vadd.f32 %v1477, %v2603
    %v2608 = vsel %vm161, %v2606, 0.0
    %2609 = vadd.xlane.f32.xlu0 %v2608
    %v2610 = vpop.xlane.xlu0 %2609
    %v2611 = vsel %vm161, %v2607, 0.0
    %2612 = vadd.xlane.f32.xlu0 %v2611
    %v2613 = vpop.xlane.xlu0 %2612
    %v2614 = vmul.f32 %v2610, %v168
    %v2615 = vmul.f32 %v2613, %v168
    %v2616 = vsub.f32 %v2606, %v2614
    %v2617 = vsub.f32 %v2607, %v2615
    %v2618 = vmul.f32 %v2616, %v2616
    %v2619 = vmul.f32 %v2617, %v2617
    %v2620 = vsel %vm161, %v2618, 0.0
    %2621 = vadd.xlane.f32.xlu0 %v2620
    %v2622 = vpop.xlane.xlu0 %2621
    %v2623 = vsel %vm161, %v2619, 0.0
    %2624 = vadd.xlane.f32.xlu0 %v2623
    %v2625 = vpop.xlane.xlu0 %2624
    %v2626 = vmul.f32 %v2622, %v168
    %v2627 = vmul.f32 %v2625, %v168
    %v2628 = vadd.f32 %v2626, 1e-05
    %v2629 = vadd.f32 %v2627, 1e-05
    %v2630 = vrsqrt.pop %v2628
    %v2631 = vrsqrt.pop %v2629
    %v2632 = vmul.f32 %v2616, %v2630
    %v2633 = vmul.f32 %v2617, %v2631
    %v2634 = vlaneseq
    %v2635 = vshrl.u32 %v2634, 7
    %v2636 = vsub.s32 0, %v2635
    %v2637 = vrot.slane %v1480, %v2636
    %v2638 = vmul.f32 %v2632, %v2637
    %v2639 = vmul.f32 %v2633, %v2637
    %v2640 = vlaneseq
    %v2641 = vshrl.u32 %v2640, 7
    %v2642 = vsub.s32 0, %v2641
    %v2643 = vrot.slane %v1481, %v2642
    %v2644 = vadd.f32 %v2638, %v2643
    %v2645 = vadd.f32 %v2639, %v2643
    %v2646 = vpack.c.bf16 %v2645, %v2644
    %v2647 = vlaneseq
    %v2648 = vshrl.u32 %v2647, 7
    %v2649 = vsub.s32 2, %v2648
    %v2650 = vrot.slane %v1505, %v2649
    %v2651 = vunpack.c.h.b16 %v1483
    %v2652 = vunpack.c.h.b16 %v1484
    %v2653 = vunpack.c.h.b16 %v1485
    %v2654 = vunpack.c.h.b16 %v1486
    %v2655 = vpack.c.b16 %v2652, %v2651
    %v2656 = vpack.c.b16 %v2654, %v2653
    %v2660 = vsel %vm161, %v2646, 0
    %2662 = vmatprep.subr.bf16.mxu0 0
    %2663 = vmatpush1.bf16.msra.mxu0 %v2655
    %2664 = vmatprep.subr.bf16.mxu0 0
    %2665 = vmatpush1.bf16.msra.mxu0 %v2656
    %2666 = vmatprep.subr.bf16.mxu0 0
    %2667 = vmatpush1.bf16.msra.mxu0 0
    %2668 = vmatprep.subr.bf16.mxu0 0
    %2669 = vmatpush1.bf16.msra.mxu0 0
    %2670 = vmatprep.subr.bf16.mxu0 0
    %2671 = vmatpush1.bf16.msra.mxu0 0
    %2672 = vmatprep.subr.bf16.mxu0 0
    %2673 = vmatpush1.bf16.msra.mxu0 0
    %2674 = vmatprep.subr.bf16.mxu0 0
    %2675 = vmatpush1.bf16.msra.mxu0 0
    %2676 = vmatprep.subr.bf16.mxu0 0
    %2677 = vmatpush1.bf16.msra.mxu0 0
    %2678 = vmatprep.subr.bf16.mxu0 0
    %2679 = vmatpush1.bf16.msra.mxu0 0
    %2680 = vmatprep.subr.bf16.mxu0 0
    %2681 = vmatpush1.bf16.msra.mxu0 0
    %2682 = vmatprep.subr.bf16.mxu0 0
    %2683 = vmatpush1.bf16.msra.mxu0 0
    %2684 = vmatprep.subr.bf16.mxu0 0
    %2685 = vmatpush1.bf16.msra.mxu0 0
    %2686 = vmatprep.subr.bf16.mxu0 0
    %2687 = vmatpush1.bf16.msra.mxu0 0
    %2688 = vmatprep.subr.bf16.mxu0 0
    %2689 = vmatpush1.bf16.msra.mxu0 0
    %2690 = vmatprep.subr.bf16.mxu0 0
    %2691 = vmatpush1.bf16.msra.mxu0 0
    %2692 = vmatprep.subr.bf16.mxu0 0
    %2693 = vmatpush1.bf16.msra.mxu0 0
    %2694 = vmatprep.mubr.bf16.mxu0 0
    %2695 = vmatmul.mubr.bf16.gmra.mrb[0].mxu0 %v2660
    %v2696 = vpop.f32.mrb[0].mxu0
    %v2697 = vadd.f32 %v2650, %v2696
    %v2698 = vpop.f32.mrb[0].mxu0
    %v2699 = vpop.f32.mrb[0].mxu0
    %v2700 = vadd.f32 %v2650, %v2699
    %v2701 = vpop.f32.mrb[0].mxu0
    %2702 = vdwg.mxu0
    %v2703 = vmul.f32 %v2697, 0.5
    %v2704 = vmul.f32 %v2700, 0.5
    %v2705 = vmul.f32 %v2697, 0.044715
    %v2706 = vmul.f32 %v2700, 0.044715
    %v2707 = vmul.f32 %v2705, %v2697
    %v2708 = vmul.f32 %v2706, %v2700
    %v2709 = vmul.f32 %v2707, %v2697
    %v2710 = vmul.f32 %v2708, %v2700
    %v2711 = vadd.f32 %v2697, %v2709
    %v2712 = vadd.f32 %v2700, %v2710
    %v2713 = vmul.f32 %v2711, 0.7978846
    %v2714 = vmul.f32 %v2712, 0.7978846
    %v2715 = vtanh.pop %v2713
    %v2716 = vtanh.pop %v2714
    %v2717 = vadd.f32 %v2715, 1.0
    %v2718 = vadd.f32 %v2716, 1.0
    %v2719 = vmul.f32 %v2703, %v2717
    %v2720 = vmul.f32 %v2704, %v2718
    %v2721 = vpack.c.bf16 %v2720, %v2719
    %v2722 = vlaneseq
    %v2723 = vshrl.u32 %v2722, 7
    %v2724 = vsub.s32 3, %v2723
    %v2725 = vrot.slane %v1505, %v2724
    %v2742 = vunpack.c.l.b16 %v1488
    %v2743 = vunpack.c.l.b16 %v1489
    %v2744 = vunpack.c.l.b16 %v1490
    %v2745 = vunpack.c.l.b16 %v1491
    %v2746 = vunpack.c.l.b16 %v1492
    %v2747 = vunpack.c.l.b16 %v1493
    %v2748 = vunpack.c.l.b16 %v1494
    %v2749 = vunpack.c.l.b16 %v1495
    %v2750 = vunpack.c.l.b16 %v1496
    %v2751 = vunpack.c.l.b16 %v1497
    %v2752 = vunpack.c.l.b16 %v1498
    %v2753 = vunpack.c.l.b16 %v1499
    %v2754 = vunpack.c.l.b16 %v1500
    %v2755 = vunpack.c.l.b16 %v1501
    %v2756 = vunpack.c.l.b16 %v1502
    %v2757 = vunpack.c.l.b16 %v1503
    %v2758 = vpack.c.b16 %v2743, %v2742
    %v2759 = vpack.c.b16 %v2745, %v2744
    %v2760 = vpack.c.b16 %v2747, %v2746
    %v2761 = vpack.c.b16 %v2749, %v2748
    %v2762 = vpack.c.b16 %v2751, %v2750
    %v2763 = vpack.c.b16 %v2753, %v2752
    %v2764 = vpack.c.b16 %v2755, %v2754
    %v2765 = vpack.c.b16 %v2757, %v2756
    %2774 = vmatprep.subr.bf16.mxu0 0
    %2775 = vmatpush1.bf16.msra.mxu0 %v2758
    %2776 = vmatprep.subr.bf16.mxu0 0
    %2777 = vmatpush1.bf16.msra.mxu0 %v2759
    %2778 = vmatprep.subr.bf16.mxu0 0
    %2779 = vmatpush1.bf16.msra.mxu0 %v2760
    %2780 = vmatprep.subr.bf16.mxu0 0
    %2781 = vmatpush1.bf16.msra.mxu0 %v2761
    %2782 = vmatprep.subr.bf16.mxu0 0
    %2783 = vmatpush1.bf16.msra.mxu0 %v2762
    %2784 = vmatprep.subr.bf16.mxu0 0
    %2785 = vmatpush1.bf16.msra.mxu0 %v2763
    %2786 = vmatprep.subr.bf16.mxu0 0
    %2787 = vmatpush1.bf16.msra.mxu0 %v2764
    %2788 = vmatprep.subr.bf16.mxu0 0
    %2789 = vmatpush1.bf16.msra.mxu0 %v2765
    %2790 = vmatprep.subr.bf16.mxu0 0
    %2791 = vmatpush1.bf16.msra.mxu0 0
    %2792 = vmatprep.subr.bf16.mxu0 0
    %2793 = vmatpush1.bf16.msra.mxu0 0
    %2794 = vmatprep.subr.bf16.mxu0 0
    %2795 = vmatpush1.bf16.msra.mxu0 0
    %2796 = vmatprep.subr.bf16.mxu0 0
    %2797 = vmatpush1.bf16.msra.mxu0 0
    %2798 = vmatprep.subr.bf16.mxu0 0
    %2799 = vmatpush1.bf16.msra.mxu0 0
    %2800 = vmatprep.subr.bf16.mxu0 0
    %2801 = vmatpush1.bf16.msra.mxu0 0
    %2802 = vmatprep.subr.bf16.mxu0 0
    %2803 = vmatpush1.bf16.msra.mxu0 0
    %2804 = vmatprep.subr.bf16.mxu0 0
    %2805 = vmatpush1.bf16.msra.mxu0 0
    %2806 = vmatprep.mubr.bf16.mxu0 0
    %2807 = vmatmul.mubr.bf16.gmra.mrb[0].mxu0 %v2721
    %v2808 = vpop.f32.mrb[0].mxu0
    %v2809 = vadd.f32 %v2725, %v2808
    %v2810 = vpop.f32.mrb[0].mxu0
    %v2811 = vpop.f32.mrb[0].mxu0
    %v2812 = vadd.f32 %v2725, %v2811
    %v2813 = vpop.f32.mrb[0].mxu0
    %2814 = vdwg.mxu0
    %v2815 = vadd.f32 %v2606, %v2809
    %v2816 = vadd.f32 %v2607, %v2812
    %v2817 = vld [vmem:[%s2 + $0x8] sm:$0x1]
    %v2818 = vld [vmem:[%s2 + $0x9] sm:$0x1]
    %v2819 = vsel %vm161, %v2815, 0.0
    %2820 = vadd.xlane.f32.xlu0 %v2819
    %v2821 = vpop.xlane.xlu0 %2820
    %v2822 = vsel %vm161, %v2816, 0.0
    %2823 = vadd.xlane.f32.xlu0 %v2822
    %v2824 = vpop.xlane.xlu0 %2823
    %v2825 = vmul.f32 %v2821, %v168
    %v2826 = vmul.f32 %v2824, %v168
    %v2827 = vsub.f32 %v2815, %v2825
    %v2828 = vsub.f32 %v2816, %v2826
    %v2829 = vmul.f32 %v2827, %v2827
    %v2830 = vmul.f32 %v2828, %v2828
    %v2831 = vsel %vm161, %v2829, 0.0
    %2832 = vadd.xlane.f32.xlu0 %v2831
    %v2833 = vpop.xlane.xlu0 %2832
    %v2834 = vsel %vm161, %v2830, 0.0
    %2835 = vadd.xlane.f32.xlu0 %v2834
    %v2836 = vpop.xlane.xlu0 %2835
    %v2837 = vmul.f32 %v2833, %v168
    %v2838 = vmul.f32 %v2836, %v168
    %v2839 = vadd.f32 %v2837, 1e-05
    %v2840 = vadd.f32 %v2838, 1e-05
    %v2841 = vrsqrt.pop %v2839
    %v2842 = vrsqrt.pop %v2840
    %v2843 = vmul.f32 %v2827, %v2841
    %v2844 = vmul.f32 %v2828, %v2842
    %v2845 = vlaneseq
    %v2846 = vshrl.u32 %v2845, 7
    %v2847 = vsub.s32 0, %v2846
    %v2848 = vrot.slane %v2817, %v2847
    %v2849 = vmul.f32 %v2843, %v2848
    %v2850 = vmul.f32 %v2844, %v2848
    %v2851 = vlaneseq
    %v2852 = vshrl.u32 %v2851, 7
    %v2853 = vsub.s32 0, %v2852
    %v2854 = vrot.slane %v2818, %v2853
    %v2855 = vadd.f32 %v2849, %v2854
    %v2856 = vadd.f32 %v2850, %v2854
    %v2859 = vrot.slane %v2856, 7
    %vm2860 = vcmask 1041409
    %v2861 = vsel %vm2860, %v2859, %v2855
    %vm2863 = vcmask 254976
    %2864 = vst.msk [vmem:[#allocation2] sm:$0x3] %vm2863, %v2861
    // Predicated region
    $region26: #{text_encoder_forward.1} parent=1 // pred_check
      _
    $region27: #{text_encoder_forward.1} parent=1 // pred_check_branch
      %2866 = sbr.rel (0) target = $region29
    $region28: #{text_encoder_forward.1} parent=1 // pred_region
      %s2868 = ssub.s32 32, 32
      %2869 = vsyncadd [#allocation3], %s2868
      %s2871 = sshll.u32 [#allocation2], 4
      %s2872 = int_to_ptr.vmem [resolvable:$true] %s2871
      %2874 = dma.vmem_to_hbm [thread:$0]  %s2872, 32, %s6, [#allocation3]
    $region29: #{text_encoder_forward.1} parent=1 // pred_fallthru
      _
    // Predicated region
    $region30: #{text_encoder_forward.1} parent=1 // pred_check
      _
    $region31: #{text_encoder_forward.1} parent=1 // pred_check_branch
      %2876 = sbr.rel (0) target = $region33
    $region32: #{text_encoder_forward.1} parent=1 // pred_region
      %2877 = dma.done [#allocation3], 32
    $region33: #{text_encoder_forward.1} parent=1 // pred_fallthru
      _
    %2878 = vsyncpa [#allocation3], 1

</llo_original>
